<compile_context>
chip_gen: v5e
topology: v5e:2x2
jax: 0.10.0
libtpu: 0.0.40
codegen_flags: <defaults>
</compile_context>

<pallas_src>
from functools import partial

import jax
import jax.numpy as jnp
from jax import lax
from jax.experimental import pallas as pl
from jax.experimental.pallas import tpu as pltpu

BN_EPS = 1e-5

# bf16 MXU operands (extra MXU headroom on v6e/v7x, halves in-VMEM matmul
# operands).  Off by default so the forward stays numerically indistinguishable
# from the f32 PyTorch reference; BN statistics always accumulate in f32.
MXU_BF16 = False

# Keep the scoped VMEM limit explicit (v5e's default is only 16 MiB).  32 MiB is
# safe on every generation; raise towards 64-96 MiB on v5e/v6e if larger
# spatial strips are enabled.
VMEM_LIMIT_BYTES = 32 * 1024 * 1024

# 3x3 taps in (kh, kw) order as (dh, dw) offsets; matches the (3,3,Co,Ci) ->
# (9,Co,Ci) weight flattening below.
_TAPS = tuple((kh - 1, kw - 1) for kh in range(3) for kw in range(3))


def _mxu(x):
    return x.astype(jnp.bfloat16) if MXU_BF16 else x


# --------------------------------------------------------------------------- #
# In-kernel helpers
# --------------------------------------------------------------------------- #
def _conv3x3_accum(x, w_ref, masks, H, W, acc):
    """acc += 3x3 conv (padding=1) of x:(Ci, H*W) with w_ref:(9, Co, Ci).

    Output layout (Co, H*W): channels on sublanes, flattened spatial on lanes.
    Each tap is an XLU lane roll + 0/1 mask multiply + one MXU matmul,
    accumulated in f32.  No im2col buffer, no padded scratch.
    """
    HW = H * W
    for t, (dh, dw) in enumerate(_TAPS):
        s = dh * W + dw                       # lane offset of the source pixel
        xt = x if s == 0 else pltpu.roll(x, (-s) % HW, 1)
        if s != 0:
            xt = xt * masks[t:t + 1, :]       # zero taps that fall off the image
        acc = acc + lax.dot_general(
            _mxu(w_ref[t]), _mxu(xt),
            dimension_numbers=(((1,), (0,)), ((), ())),
            preferred_element_type=jnp.float32)
    return acc


def _stats_tile(u):
    """(Co, 128) tile: lane 0 = per-channel sum, lane 1 = per-channel sum(x^2).

    Tile-aligned so the stats store is a full unmasked (8,128) write.
    """
    ssum = jnp.sum(u, axis=1, keepdims=True)            # (Co, 1)
    ssq = jnp.sum(u * u, axis=1, keepdims=True)         # (Co, 1)
    lane = lax.broadcasted_iota(jnp.int32, (u.shape[0], 128), 1)
    return jnp.where(lane == 0, ssum, jnp.where(lane == 1, ssq, 0.0))


# --------------------------------------------------------------------------- #
# Kernels
# --------------------------------------------------------------------------- #
def _conv1_kernel(y_ref, zp_ref, m_ref, wy_ref, wz_ref, u_ref, st_ref, *, H, W):
    # y_ref : (Cy, HW)   zp_ref : (Cz, HW)   (never concatenated in HBM)
    # wy/wz : (9, Co, Cy) / (9, Co, Cz)      m_ref : (9, HW) 0/1 tap masks
    # u_ref : (Co, HW) pre-BN conv output    st_ref : (Co, 128) stats tile
    Co = u_ref.shape[0]
    masks = m_ref[...]
    acc = jnp.zeros((Co, H * W), jnp.float32)
    acc = _conv3x3_accum(y_ref[...], wy_ref, masks, H, W, acc)
    acc = _conv3x3_accum(zp_ref[...], wz_ref, masks, H, W, acc)
    u_ref[...] = acc
    st_ref[...] = _stats_tile(acc)


def _conv2_kernel(u1_ref, sc_ref, sh_ref, m_ref, w_ref, u_ref, st_ref, *, H, W):
    # previous-stage BatchNorm + ReLU fused into the input path (one FMA + max)
    Co = u_ref.shape[0]
    x = jnp.maximum(u1_ref[...] * sc_ref[...] + sh_ref[...], 0.0)
    acc = _conv3x3_accum(x, w_ref, m_ref[...], H, W,
                         jnp.zeros((Co, H * W), jnp.float32))
    u_ref[...] = acc
    st_ref[...] = _stats_tile(acc)


def _head_kernel(u2_ref, sc_ref, sh_ref, wr_ref, br_ref, y_ref, r_ref):
    # BN2 + ReLU -> y' ; fused 1x1 conv_res (+bias) -> r.  Both lane-dense.
    a = jnp.maximum(u2_ref[...] * sc_ref[...] + sh_ref[...], 0.0)
    y_ref[...] = a
    r_ref[...] = lax.dot_general(
        _mxu(wr_ref[...]), _mxu(a),
        dimension_numbers=(((1,), (0,)), ((), ())),
        preferred_element_type=jnp.float32) + br_ref[...]


def _upsample_add_kernel(r_ref, e_ref, z_ref, zo_ref):
    # z' = z + nearest_upsample(r): the s x s repeat is a 0/1 one-hot lane
    # expansion matmul, so the full-resolution repeat tensor never exists in HBM.
    zo_ref[...] = z_ref[...] + lax.dot_general(
        r_ref[...], e_ref[...],
        dimension_numbers=(((1,), (0,)), ((), ())),
        preferred_element_type=jnp.float32)


# --------------------------------------------------------------------------- #
# pallas_call stages
# --------------------------------------------------------------------------- #
def _conv1_stage(y_f, zp_f, masks, wy, wz, *, H, W):
    N, Cy, HW = y_f.shape
    Cz = zp_f.shape[1]
    Co = wy.shape[1]
    return pl.pallas_call(
        partial(_conv1_kernel, H=H, W=W),
        out_shape=(jax.ShapeDtypeStruct((N, Co, HW), jnp.float32),
                   jax.ShapeDtypeStruct((N, Co, 128), jnp.float32)),
        grid=(N,),
        in_specs=[
            pl.BlockSpec((None, Cy, HW), lambda n: (n, 0, 0)),
            pl.BlockSpec((None, Cz, HW), lambda n: (n, 0, 0)),
            pl.BlockSpec((9, HW), lambda n: (0, 0)),
            pl.BlockSpec((9, Co, Cy), lambda n: (0, 0, 0)),
            pl.BlockSpec((9, Co, Cz), lambda n: (0, 0, 0)),
        ],
        out_specs=(
            pl.BlockSpec((None, Co, HW), lambda n: (n, 0, 0)),
            pl.BlockSpec((None, Co, 128), lambda n: (n, 0, 0)),
        ),
        compiler_params=pltpu.CompilerParams(
            dimension_semantics=("parallel",),
            vmem_limit_bytes=VMEM_LIMIT_BYTES),
    )(y_f, zp_f, masks, wy, wz)


def _conv2_stage(u1, sc, sh, masks, w, *, H, W):
    N, Ci, HW = u1.shape
    Co = w.shape[1]
    return pl.pallas_call(
        partial(_conv2_kernel, H=H, W=W),
        out_shape=(jax.ShapeDtypeStruct((N, Co, HW), jnp.float32),
                   jax.ShapeDtypeStruct((N, Co, 128), jnp.float32)),
        grid=(N,),
        in_specs=[
            pl.BlockSpec((None, Ci, HW), lambda n: (n, 0, 0)),
            pl.BlockSpec((Ci, 1), lambda n: (0, 0)),
            pl.BlockSpec((Ci, 1), lambda n: (0, 0)),
            pl.BlockSpec((9, HW), lambda n: (0, 0)),
            pl.BlockSpec((9, Co, Ci), lambda n: (0, 0, 0)),
        ],
        out_specs=(
            pl.BlockSpec((None, Co, HW), lambda n: (n, 0, 0)),
            pl.BlockSpec((None, Co, 128), lambda n: (n, 0, 0)),
        ),
        compiler_params=pltpu.CompilerParams(
            dimension_semantics=("parallel",),
            vmem_limit_bytes=VMEM_LIMIT_BYTES),
    )(u1, sc, sh, masks, w)


def _head_stage(u2, sc, sh, wres, bres):
    N, Co, HW = u2.shape
    Cz = wres.shape[0]
    return pl.pallas_call(
        _head_kernel,
        out_shape=(jax.ShapeDtypeStruct((N, Co, HW), jnp.float32),
                   jax.ShapeDtypeStruct((N, Cz, HW), jnp.float32)),
        grid=(N,),
        in_specs=[
            pl.BlockSpec((None, Co, HW), lambda n: (n, 0, 0)),
            pl.BlockSpec((Co, 1), lambda n: (0, 0)),
            pl.BlockSpec((Co, 1), lambda n: (0, 0)),
            pl.BlockSpec((Cz, Co), lambda n: (0, 0)),
            pl.BlockSpec((Cz, 1), lambda n: (0, 0)),
        ],
        out_specs=(
            pl.BlockSpec((None, Co, HW), lambda n: (n, 0, 0)),
            pl.BlockSpec((None, Cz, HW), lambda n: (n, 0, 0)),
        ),
        compiler_params=pltpu.CompilerParams(
            dimension_semantics=("parallel",),
            vmem_limit_bytes=VMEM_LIMIT_BYTES),
    )(u2, sc, sh, wres, bres)


def _upsample_add_stage(r_f, z, *, H, W, s):
    """z' = z + nearest_upsample(r, s), on free reshapes of NCHW:
    r -> (N, Cz*H, W), z -> (N, Cz*H, s*sW)."""
    N, Cz, sH, sW = z.shape
    CzH, Wup = Cz * H, s * sW
    r2d = r_f.reshape(N, CzH, W)
    z2d = z.reshape(N, CzH, Wup)
    # one-hot lane expansion: expand[w, a*sW + s*w + b] = 1
    j = jnp.arange(Wup)
    expand = ((j[None, :] % sW) // s
              == jnp.arange(W)[:, None]).astype(jnp.float32)      # (W, Wup)

    TR = min(CzH, 512)                  # row strip; keeps v7x VMEM bounded and
    grid = (N, pl.cdiv(CzH, TR))        # gives >=2 parallel steps per chip
    # TODO(synk): with donated inputs z could be updated in place via
    # input_output_aliases; without donation XLA would insert a defensive copy.
    out = pl.pallas_call(
        _upsample_add_kernel,
        out_shape=jax.ShapeDtypeStruct((N, CzH, Wup), jnp.float32),
        grid=grid,
        in_specs=[
            pl.BlockSpec((None, TR, W), lambda n, t: (n, t, 0)),
            pl.BlockSpec((W, Wup), lambda n, t: (0, 0)),
            pl.BlockSpec((None, TR, Wup), lambda n, t: (n, t, 0)),
        ],
        out_specs=pl.BlockSpec((None, TR, Wup), lambda n, t: (n, t, 0)),
        compiler_params=pltpu.CompilerParams(
            dimension_semantics=("parallel", "parallel"),
            vmem_limit_bytes=VMEM_LIMIT_BYTES),
    )(r2d, expand, z2d)
    return out.reshape(N, Cz, sH, sW)


# --------------------------------------------------------------------------- #
# Wrapper
# --------------------------------------------------------------------------- #
def _bn_fold(stats, gamma, beta, count):
    """Per-channel scale/shift from summed stats: BN(x) = x*scale + shift."""
    ssum = jnp.sum(stats[:, :, 0], axis=0)
    ssq = jnp.sum(stats[:, :, 1], axis=0)
    mean = ssum / count
    var = jnp.maximum(ssq / count - mean * mean, 0.0)   # biased batch variance
    scale = gamma * lax.rsqrt(var + BN_EPS)
    shift = beta - mean * scale
    C = gamma.shape[0]
    return scale.reshape(C, 1), shift.reshape(C, 1)


def frru_forward(y, z, params, *, scale):
    """FRRU forward (training-mode BatchNorm). NCHW in -> NCHW out."""
    N, Cy, H, W = y.shape
    s = scale
    Cz = z.shape[1]                       # 32 in the reference module
    HW = H * W
    w1, w2 = params["w1"], params["w2"]
    Co = w1.shape[0]

    # channels-major flattened (C, H*W) layout == a *free* reshape of NCHW.
    y_f = y.reshape(N, Cy, HW)

    # TODO(synk): MaxPool2d(scale) stays an XLA reduce; fusing it into kernel 1
    # would need strided-lane loads of the full-res stream inside the kernel.
    z_pool = z.reshape(N, Cz, H, s, W, s).max(axis=(3, 5))        # (N,Cz,H,W)
    zp_f = z_pool.reshape(N, Cz, HW)

    # per-tap validity masks (== the conv's zero padding), precomputed once so
    # the kernels never do integer div/mod.
    pos = jnp.arange(HW)
    h_idx, w_idx = pos // W, pos % W
    masks = jnp.stack(
        [((h_idx + dh >= 0) & (h_idx + dh < H) &
          (w_idx + dw >= 0) & (w_idx + dw < W)) for dh, dw in _TAPS]
    ).astype(jnp.float32)                                         # (9, HW)

    # PyTorch (Co, Ci, 3, 3) -> per-tap (9, Co, Ci).  W1 is split along its
    # input channels so y and maxpool(z) are never concatenated in HBM.
    def per_tap(w):
        return jnp.transpose(w, (2, 3, 0, 1)).reshape(9, w.shape[0], w.shape[1])

    w1y, w1z = per_tap(w1[:, :Cy]), per_tap(w1[:, Cy:])
    w2t = per_tap(w2)
    wres = params["w_res"][:, :, 0, 0]                            # (Cz, Co)
    bres = params["b_res"].reshape(Cz, 1)

    count = float(N * HW)

    # conv1 (pre-BN) + batch stats
    u1, st1 = _conv1_stage(y_f, zp_f, masks, w1y, w1z, H=H, W=W)
    sc1, sh1 = _bn_fold(st1, params["g1"], params["b1"], count)

    # conv2 with BN1+ReLU fused into its input path, + batch stats
    u2, st2 = _conv2_stage(u1, sc1, sh1, masks, w2t, H=H, W=W)
    sc2, sh2 = _bn_fold(st2, params["g2"], params["b2"], count)

    # BN2+ReLU -> y' ; fused 1x1 conv_res -> r   (both lane-dense (C, HW))
    yp_f, r_f = _head_stage(u2, sc2, sh2, wres, bres)

    # nearest-upsample + residual add (Pallas kernel, no r_up materialization)
    # TODO(synk): fusing this into the head kernel needs r in (Cz*H, W) layout
    # inside that kernel (an in-VMEM relayout); kept as a separate kernel.
    z_prime = _upsample_add_stage(r_f, z, H=H, W=W, s=s)

    y_prime = yp_f.reshape(N, Co, H, W)
    return y_prime, z_prime


# --------------------------------------------------------------------------- #
# Pure-JAX reference for validation
# --------------------------------------------------------------------------- #
def _reference(y, z, params, *, scale):
    s = scale

    def conv3x3(x, w):
        dn = lax.conv_dimension_numbers(x.shape, w.shape, ("NCHW", "OIHW", "NCHW"))
        return lax.conv_general_dilated(x, w, (1, 1), [(1, 1), (1, 1)],
                                        dimension_numbers=dn)

    def bn_relu(x, gamma, beta):
        mean = jnp.mean(x, axis=(0, 2, 3), keepdims=True)
        var = jnp.mean((x - mean) ** 2, axis=(0, 2, 3), keepdims=True)
        xn = ((x - mean) * lax.rsqrt(var + BN_EPS)
              * gamma.reshape(1, -1, 1, 1) + beta.reshape(1, -1, 1, 1))
        return jnp.maximum(xn, 0.0)

    N, Cz, Hz, Wz = z.shape
    z_pool = z.reshape(N, Cz, Hz // s, s, Wz // s, s).max(axis=(3, 5))
    x = jnp.concatenate([y, z_pool], axis=1)
    yp = bn_relu(conv3x3(x, params["w1"]), params["g1"], params["b1"])
    yp = bn_relu(conv3x3(yp, params["w2"]), params["g2"], params["b2"])
    dn = lax.conv_dimension_numbers(yp.shape, params["w_res"].shape,
                                    ("NCHW", "OIHW", "NCHW"))
    r = lax.conv_general_dilated(yp, params["w_res"], (1, 1), [(0, 0), (0, 0)],
                                 dimension_numbers=dn)
    r = r + params["b_res"].reshape(1, -1, 1, 1)
    r_up = jnp.repeat(jnp.repeat(r, s, axis=2), s, axis=3)
    return yp, z + r_up


if __name__ == "__main__":
    # FRRU(prev_channels=16, out_channels=32, scale=2, group_norm=False)
    prev_channels, out_channels, scale = 16, 32, 2
    N, H, W = 2, 16, 16
    Cz = 32
    Cin = prev_channels + Cz

    key = jax.random.PRNGKey(0)
    ky, kz, k1, k2, kr, kb = jax.random.split(key, 6)
    y = jax.random.normal(ky, (N, prev_channels, H, W), jnp.float32)
    z = jax.random.normal(kz, (N, Cz, H * scale, W * scale), jnp.float32)

    params = {
        "w1": 0.1 * jax.random.normal(k1, (out_channels, Cin, 3, 3), jnp.float32),
        "w2": 0.1 * jax.random.normal(k2, (out_channels, out_channels, 3, 3),
                                      jnp.float32),
        "g1": jnp.ones((out_channels,), jnp.float32),   # BN affine defaults
        "b1": jnp.zeros((out_channels,), jnp.float32),
        "g2": jnp.ones((out_channels,), jnp.float32),
        "b2": jnp.zeros((out_channels,), jnp.float32),
        "w_res": 0.1 * jax.random.normal(kr, (Cz, out_channels, 1, 1), jnp.float32),
        "b_res": 0.1 * jax.random.normal(kb, (Cz,), jnp.float32),
    }

    fwd = jax.jit(partial(frru_forward, scale=scale))
    y_prime, z_prime = fwd(y, z, params)
    y_prime, z_prime = jax.block_until_ready((y_prime, z_prime))

    y_ref, z_ref = _reference(y, z, params, scale=scale)
    assert y_prime.shape == (N, out_channels, H, W)
    assert z_prime.shape == (N, Cz, H * scale, W * scale)
    assert jnp.allclose(y_prime, y_ref, rtol=2e-3, atol=2e-3), "y_prime mismatch"
    assert jnp.allclose(z_prime, z_ref, rtol=2e-3, atol=2e-3), "z_prime mismatch"

    print("KERNEL_OK")
</pallas_src>

<mosaic_0001>
module attributes {stable_mosaic.version = 11 : i64} {
  func.func @_conv1_kernel(%arg0: i32, %arg1: memref<1x16x256xf32, #tpu.memory_space<vmem>>, %arg2: memref<1x32x256xf32, #tpu.memory_space<vmem>>, %arg3: memref<9x256xf32, #tpu.memory_space<vmem>>, %arg4: memref<9x32x16xf32, #tpu.memory_space<vmem>>, %arg5: memref<9x32x32xf32, #tpu.memory_space<vmem>>, %arg6: memref<1x32x256xf32, #tpu.memory_space<vmem>>, %arg7: memref<1x32x128xf32, #tpu.memory_space<vmem>>) attributes {dimension_semantics = [#tpu.dimension_semantics<parallel>], iteration_bounds = array<i64: 2>, scalar_prefetch = 0 : i64, scratch_operands = 0 : i64, tpu.core_type = #tpu.core_type<tc>, window_params = [{transform_indices = @transform_0, window_bounds = array<i64: 1, 16, 256>}, {transform_indices = @transform_1, window_bounds = array<i64: 1, 32, 256>}, {pipeline_mode = #tpu.pipeline_mode<synchronous>, transform_indices = @transform_2, window_bounds = array<i64: 9, 256>}, {pipeline_mode = #tpu.pipeline_mode<synchronous>, transform_indices = @transform_3, window_bounds = array<i64: 9, 32, 16>}, {pipeline_mode = #tpu.pipeline_mode<synchronous>, transform_indices = @transform_4, window_bounds = array<i64: 9, 32, 32>}, {transform_indices = @transform_5, window_bounds = array<i64: 1, 32, 256>}, {transform_indices = @transform_6, window_bounds = array<i64: 1, 32, 128>}]} {
    %c0 = arith.constant 0 : index
    %c0_0 = arith.constant 0 : index
    %0 = vector.load %arg3[%c0, %c0_0] : memref<9x256xf32, #tpu.memory_space<vmem>>, vector<9x256xf32>
    %cst = arith.constant 0.000000e+00 : f32
    %1 = vector.broadcast %cst : f32 to vector<32x256xf32>
    %c0_1 = arith.constant 0 : index
    %c0_2 = arith.constant 0 : index
    %c0_3 = arith.constant 0 : index
    %2 = vector.load %arg1[%c0_1, %c0_2, %c0_3] : memref<1x16x256xf32, #tpu.memory_space<vmem>>, vector<1x16x256xf32>
    %3 = vector.shape_cast %2 : vector<1x16x256xf32> to vector<16x256xf32>
    %c17_i32 = arith.constant 17 : i32
    %4 = tpu.dynamic_rotate %3 by %c17_i32 dim 1 : vector<16x256xf32>, i32 -> vector<16x256xf32>
    %5 = vector.extract_strided_slice %0 {offsets = [0, 0], sizes = [1, 256], strides = [1, 1]} : vector<9x256xf32> to vector<1x256xf32>
    %6 = vector.broadcast %5 : vector<1x256xf32> to vector<16x256xf32>
    %7 = arith.mulf %4, %6 : vector<16x256xf32>
    %c0_4 = arith.constant 0 : index
    %c0_5 = arith.constant 0 : index
    %c0_6 = arith.constant 0 : index
    %8 = vector.load %arg4[%c0_4, %c0_5, %c0_6] : memref<9x32x16xf32, #tpu.memory_space<vmem>>, vector<1x32x16xf32>
    %9 = vector.shape_cast %8 : vector<1x32x16xf32> to vector<32x16xf32>
    %cst_7 = arith.constant dense<0.000000e+00> : vector<32x256xf32>
    %10 = tpu.matmul %9, %7, %cst_7 {dimension_numbers = #tpu.dot_dimension_numbers<[1], [0], [0], [1], [0, 0, 1, 1], [], []>} : vector<32x16xf32>, vector<16x256xf32>, vector<32x256xf32> -> vector<32x256xf32>
    %11 = arith.addf %1, %10 : vector<32x256xf32>
    %c16_i32 = arith.constant 16 : i32
    %12 = tpu.dynamic_rotate %3 by %c16_i32 dim 1 : vector<16x256xf32>, i32 -> vector<16x256xf32>
    %13 = vector.extract_strided_slice %0 {offsets = [1, 0], sizes = [1, 256], strides = [1, 1]} : vector<9x256xf32> to vector<1x256xf32>
    %14 = vector.broadcast %13 : vector<1x256xf32> to vector<16x256xf32>
    %15 = arith.mulf %12, %14 : vector<16x256xf32>
    %c1 = arith.constant 1 : index
    %c0_8 = arith.constant 0 : index
    %c0_9 = arith.constant 0 : index
    %16 = vector.load %arg4[%c1, %c0_8, %c0_9] : memref<9x32x16xf32, #tpu.memory_space<vmem>>, vector<1x32x16xf32>
    %17 = vector.shape_cast %16 : vector<1x32x16xf32> to vector<32x16xf32>
    %cst_10 = arith.constant dense<0.000000e+00> : vector<32x256xf32>
    %18 = tpu.matmul %17, %15, %cst_10 {dimension_numbers = #tpu.dot_dimension_numbers<[1], [0], [0], [1], [0, 0, 1, 1], [], []>} : vector<32x16xf32>, vector<16x256xf32>, vector<32x256xf32> -> vector<32x256xf32>
    %19 = arith.addf %11, %18 : vector<32x256xf32>
    %c15_i32 = arith.constant 15 : i32
    %20 = tpu.dynamic_rotate %3 by %c15_i32 dim 1 : vector<16x256xf32>, i32 -> vector<16x256xf32>
    %21 = vector.extract_strided_slice %0 {offsets = [2, 0], sizes = [1, 256], strides = [1, 1]} : vector<9x256xf32> to vector<1x256xf32>
    %22 = vector.broadcast %21 : vector<1x256xf32> to vector<16x256xf32>
    %23 = arith.mulf %20, %22 : vector<16x256xf32>
    %c2 = arith.constant 2 : index
    %c0_11 = arith.constant 0 : index
    %c0_12 = arith.constant 0 : index
    %24 = vector.load %arg4[%c2, %c0_11, %c0_12] : memref<9x32x16xf32, #tpu.memory_space<vmem>>, vector<1x32x16xf32>
    %25 = vector.shape_cast %24 : vector<1x32x16xf32> to vector<32x16xf32>
    %cst_13 = arith.constant dense<0.000000e+00> : vector<32x256xf32>
    %26 = tpu.matmul %25, %23, %cst_13 {dimension_numbers = #tpu.dot_dimension_numbers<[1], [0], [0], [1], [0, 0, 1, 1], [], []>} : vector<32x16xf32>, vector<16x256xf32>, vector<32x256xf32> -> vector<32x256xf32>
    %27 = arith.addf %19, %26 : vector<32x256xf32>
    %c1_i32 = arith.constant 1 : i32
    %28 = tpu.dynamic_rotate %3 by %c1_i32 dim 1 : vector<16x256xf32>, i32 -> vector<16x256xf32>
    %29 = vector.extract_strided_slice %0 {offsets = [3, 0], sizes = [1, 256], strides = [1, 1]} : vector<9x256xf32> to vector<1x256xf32>
    %30 = vector.broadcast %29 : vector<1x256xf32> to vector<16x256xf32>
    %31 = arith.mulf %28, %30 : vector<16x256xf32>
    %c3 = arith.constant 3 : index
    %c0_14 = arith.constant 0 : index
    %c0_15 = arith.constant 0 : index
    %32 = vector.load %arg4[%c3, %c0_14, %c0_15] : memref<9x32x16xf32, #tpu.memory_space<vmem>>, vector<1x32x16xf32>
    %33 = vector.shape_cast %32 : vector<1x32x16xf32> to vector<32x16xf32>
    %cst_16 = arith.constant dense<0.000000e+00> : vector<32x256xf32>
    %34 = tpu.matmul %33, %31, %cst_16 {dimension_numbers = #tpu.dot_dimension_numbers<[1], [0], [0], [1], [0, 0, 1, 1], [], []>} : vector<32x16xf32>, vector<16x256xf32>, vector<32x256xf32> -> vector<32x256xf32>
    %35 = arith.addf %27, %34 : vector<32x256xf32>
    %c4 = arith.constant 4 : index
    %c0_17 = arith.constant 0 : index
    %c0_18 = arith.constant 0 : index
    %36 = vector.load %arg4[%c4, %c0_17, %c0_18] : memref<9x32x16xf32, #tpu.memory_space<vmem>>, vector<1x32x16xf32>
    %37 = vector.shape_cast %36 : vector<1x32x16xf32> to vector<32x16xf32>
    %cst_19 = arith.constant dense<0.000000e+00> : vector<32x256xf32>
    %38 = tpu.matmul %37, %3, %cst_19 {dimension_numbers = #tpu.dot_dimension_numbers<[1], [0], [0], [1], [0, 0, 1, 1], [], []>} : vector<32x16xf32>, vector<16x256xf32>, vector<32x256xf32> -> vector<32x256xf32>
    %39 = arith.addf %35, %38 : vector<32x256xf32>
    %c255_i32 = arith.constant 255 : i32
    %40 = tpu.dynamic_rotate %3 by %c255_i32 dim 1 : vector<16x256xf32>, i32 -> vector<16x256xf32>
    %41 = vector.extract_strided_slice %0 {offsets = [5, 0], sizes = [1, 256], strides = [1, 1]} : vector<9x256xf32> to vector<1x256xf32>
    %42 = vector.broadcast %41 : vector<1x256xf32> to vector<16x256xf32>
    %43 = arith.mulf %40, %42 : vector<16x256xf32>
    %c5 = arith.constant 5 : index
    %c0_20 = arith.constant 0 : index
    %c0_21 = arith.constant 0 : index
    %44 = vector.load %arg4[%c5, %c0_20, %c0_21] : memref<9x32x16xf32, #tpu.memory_space<vmem>>, vector<1x32x16xf32>
    %45 = vector.shape_cast %44 : vector<1x32x16xf32> to vector<32x16xf32>
    %cst_22 = arith.constant dense<0.000000e+00> : vector<32x256xf32>
    %46 = tpu.matmul %45, %43, %cst_22 {dimension_numbers = #tpu.dot_dimension_numbers<[1], [0], [0], [1], [0, 0, 1, 1], [], []>} : vector<32x16xf32>, vector<16x256xf32>, vector<32x256xf32> -> vector<32x256xf32>
    %47 = arith.addf %39, %46 : vector<32x256xf32>
    %c241_i32 = arith.constant 241 : i32
    %48 = tpu.dynamic_rotate %3 by %c241_i32 dim 1 : vector<16x256xf32>, i32 -> vector<16x256xf32>
    %49 = vector.extract_strided_slice %0 {offsets = [6, 0], sizes = [1, 256], strides = [1, 1]} : vector<9x256xf32> to vector<1x256xf32>
    %50 = vector.broadcast %49 : vector<1x256xf32> to vector<16x256xf32>
    %51 = arith.mulf %48, %50 : vector<16x256xf32>
    %c6 = arith.constant 6 : index
    %c0_23 = arith.constant 0 : index
    %c0_24 = arith.constant 0 : index
    %52 = vector.load %arg4[%c6, %c0_23, %c0_24] : memref<9x32x16xf32, #tpu.memory_space<vmem>>, vector<1x32x16xf32>
    %53 = vector.shape_cast %52 : vector<1x32x16xf32> to vector<32x16xf32>
    %cst_25 = arith.constant dense<0.000000e+00> : vector<32x256xf32>
    %54 = tpu.matmul %53, %51, %cst_25 {dimension_numbers = #tpu.dot_dimension_numbers<[1], [0], [0], [1], [0, 0, 1, 1], [], []>} : vector<32x16xf32>, vector<16x256xf32>, vector<32x256xf32> -> vector<32x256xf32>
    %55 = arith.addf %47, %54 : vector<32x256xf32>
    %c240_i32 = arith.constant 240 : i32
    %56 = tpu.dynamic_rotate %3 by %c240_i32 dim 1 : vector<16x256xf32>, i32 -> vector<16x256xf32>
    %57 = vector.extract_strided_slice %0 {offsets = [7, 0], sizes = [1, 256], strides = [1, 1]} : vector<9x256xf32> to vector<1x256xf32>
    %58 = vector.broadcast %57 : vector<1x256xf32> to vector<16x256xf32>
    %59 = arith.mulf %56, %58 : vector<16x256xf32>
    %c7 = arith.constant 7 : index
    %c0_26 = arith.constant 0 : index
    %c0_27 = arith.constant 0 : index
    %60 = vector.load %arg4[%c7, %c0_26, %c0_27] : memref<9x32x16xf32, #tpu.memory_space<vmem>>, vector<1x32x16xf32>
    %61 = vector.shape_cast %60 : vector<1x32x16xf32> to vector<32x16xf32>
    %cst_28 = arith.constant dense<0.000000e+00> : vector<32x256xf32>
    %62 = tpu.matmul %61, %59, %cst_28 {dimension_numbers = #tpu.dot_dimension_numbers<[1], [0], [0], [1], [0, 0, 1, 1], [], []>} : vector<32x16xf32>, vector<16x256xf32>, vector<32x256xf32> -> vector<32x256xf32>
    %63 = arith.addf %55, %62 : vector<32x256xf32>
    %c239_i32 = arith.constant 239 : i32
    %64 = tpu.dynamic_rotate %3 by %c239_i32 dim 1 : vector<16x256xf32>, i32 -> vector<16x256xf32>
    %65 = vector.extract_strided_slice %0 {offsets = [8, 0], sizes = [1, 256], strides = [1, 1]} : vector<9x256xf32> to vector<1x256xf32>
    %66 = vector.broadcast %65 : vector<1x256xf32> to vector<16x256xf32>
    %67 = arith.mulf %64, %66 : vector<16x256xf32>
    %c8 = arith.constant 8 : index
    %c0_29 = arith.constant 0 : index
    %c0_30 = arith.constant 0 : index
    %68 = vector.load %arg4[%c8, %c0_29, %c0_30] : memref<9x32x16xf32, #tpu.memory_space<vmem>>, vector<1x32x16xf32>
    %69 = vector.shape_cast %68 : vector<1x32x16xf32> to vector<32x16xf32>
    %cst_31 = arith.constant dense<0.000000e+00> : vector<32x256xf32>
    %70 = tpu.matmul %69, %67, %cst_31 {dimension_numbers = #tpu.dot_dimension_numbers<[1], [0], [0], [1], [0, 0, 1, 1], [], []>} : vector<32x16xf32>, vector<16x256xf32>, vector<32x256xf32> -> vector<32x256xf32>
    %71 = arith.addf %63, %70 : vector<32x256xf32>
    %c0_32 = arith.constant 0 : index
    %c0_33 = arith.constant 0 : index
    %c0_34 = arith.constant 0 : index
    %72 = vector.load %arg2[%c0_32, %c0_33, %c0_34] : memref<1x32x256xf32, #tpu.memory_space<vmem>>, vector<1x32x256xf32>
    %73 = vector.shape_cast %72 : vector<1x32x256xf32> to vector<32x256xf32>
    %c17_i32_35 = arith.constant 17 : i32
    %74 = tpu.dynamic_rotate %73 by %c17_i32_35 dim 1 : vector<32x256xf32>, i32 -> vector<32x256xf32>
    %75 = vector.extract_strided_slice %0 {offsets = [0, 0], sizes = [1, 256], strides = [1, 1]} : vector<9x256xf32> to vector<1x256xf32>
    %76 = vector.broadcast %75 : vector<1x256xf32> to vector<32x256xf32>
    %77 = arith.mulf %74, %76 : vector<32x256xf32>
    %c0_36 = arith.constant 0 : index
    %c0_37 = arith.constant 0 : index
    %c0_38 = arith.constant 0 : index
    %78 = vector.load %arg5[%c0_36, %c0_37, %c0_38] : memref<9x32x32xf32, #tpu.memory_space<vmem>>, vector<1x32x32xf32>
    %79 = vector.shape_cast %78 : vector<1x32x32xf32> to vector<32x32xf32>
    %cst_39 = arith.constant dense<0.000000e+00> : vector<32x256xf32>
    %80 = tpu.matmul %79, %77, %cst_39 {dimension_numbers = #tpu.dot_dimension_numbers<[1], [0], [0], [1], [0, 0, 1, 1], [], []>} : vector<32x32xf32>, vector<32x256xf32>, vector<32x256xf32> -> vector<32x256xf32>
    %81 = arith.addf %71, %80 : vector<32x256xf32>
    %c16_i32_40 = arith.constant 16 : i32
    %82 = tpu.dynamic_rotate %73 by %c16_i32_40 dim 1 : vector<32x256xf32>, i32 -> vector<32x256xf32>
    %83 = vector.extract_strided_slice %0 {offsets = [1, 0], sizes = [1, 256], strides = [1, 1]} : vector<9x256xf32> to vector<1x256xf32>
    %84 = vector.broadcast %83 : vector<1x256xf32> to vector<32x256xf32>
    %85 = arith.mulf %82, %84 : vector<32x256xf32>
    %c1_41 = arith.constant 1 : index
    %c0_42 = arith.constant 0 : index
    %c0_43 = arith.constant 0 : index
    %86 = vector.load %arg5[%c1_41, %c0_42, %c0_43] : memref<9x32x32xf32, #tpu.memory_space<vmem>>, vector<1x32x32xf32>
    %87 = vector.shape_cast %86 : vector<1x32x32xf32> to vector<32x32xf32>
    %cst_44 = arith.constant dense<0.000000e+00> : vector<32x256xf32>
    %88 = tpu.matmul %87, %85, %cst_44 {dimension_numbers = #tpu.dot_dimension_numbers<[1], [0], [0], [1], [0, 0, 1, 1], [], []>} : vector<32x32xf32>, vector<32x256xf32>, vector<32x256xf32> -> vector<32x256xf32>
    %89 = arith.addf %81, %88 : vector<32x256xf32>
    %c15_i32_45 = arith.constant 15 : i32
    %90 = tpu.dynamic_rotate %73 by %c15_i32_45 dim 1 : vector<32x256xf32>, i32 -> vector<32x256xf32>
    %91 = vector.extract_strided_slice %0 {offsets = [2, 0], sizes = [1, 256], strides = [1, 1]} : vector<9x256xf32> to vector<1x256xf32>
    %92 = vector.broadcast %91 : vector<1x256xf32> to vector<32x256xf32>
    %93 = arith.mulf %90, %92 : vector<32x256xf32>
    %c2_46 = arith.constant 2 : index
    %c0_47 = arith.constant 0 : index
    %c0_48 = arith.constant 0 : index
    %94 = vector.load %arg5[%c2_46, %c0_47, %c0_48] : memref<9x32x32xf32, #tpu.memory_space<vmem>>, vector<1x32x32xf32>
    %95 = vector.shape_cast %94 : vector<1x32x32xf32> to vector<32x32xf32>
    %cst_49 = arith.constant dense<0.000000e+00> : vector<32x256xf32>
    %96 = tpu.matmul %95, %93, %cst_49 {dimension_numbers = #tpu.dot_dimension_numbers<[1], [0], [0], [1], [0, 0, 1, 1], [], []>} : vector<32x32xf32>, vector<32x256xf32>, vector<32x256xf32> -> vector<32x256xf32>
    %97 = arith.addf %89, %96 : vector<32x256xf32>
    %c1_i32_50 = arith.constant 1 : i32
    %98 = tpu.dynamic_rotate %73 by %c1_i32_50 dim 1 : vector<32x256xf32>, i32 -> vector<32x256xf32>
    %99 = vector.extract_strided_slice %0 {offsets = [3, 0], sizes = [1, 256], strides = [1, 1]} : vector<9x256xf32> to vector<1x256xf32>
    %100 = vector.broadcast %99 : vector<1x256xf32> to vector<32x256xf32>
    %101 = arith.mulf %98, %100 : vector<32x256xf32>
    %c3_51 = arith.constant 3 : index
    %c0_52 = arith.constant 0 : index
    %c0_53 = arith.constant 0 : index
    %102 = vector.load %arg5[%c3_51, %c0_52, %c0_53] : memref<9x32x32xf32, #tpu.memory_space<vmem>>, vector<1x32x32xf32>
    %103 = vector.shape_cast %102 : vector<1x32x32xf32> to vector<32x32xf32>
    %cst_54 = arith.constant dense<0.000000e+00> : vector<32x256xf32>
    %104 = tpu.matmul %103, %101, %cst_54 {dimension_numbers = #tpu.dot_dimension_numbers<[1], [0], [0], [1], [0, 0, 1, 1], [], []>} : vector<32x32xf32>, vector<32x256xf32>, vector<32x256xf32> -> vector<32x256xf32>
    %105 = arith.addf %97, %104 : vector<32x256xf32>
    %c4_55 = arith.constant 4 : index
    %c0_56 = arith.constant 0 : index
    %c0_57 = arith.constant 0 : index
    %106 = vector.load %arg5[%c4_55, %c0_56, %c0_57] : memref<9x32x32xf32, #tpu.memory_space<vmem>>, vector<1x32x32xf32>
    %107 = vector.shape_cast %106 : vector<1x32x32xf32> to vector<32x32xf32>
    %cst_58 = arith.constant dense<0.000000e+00> : vector<32x256xf32>
    %108 = tpu.matmul %107, %73, %cst_58 {dimension_numbers = #tpu.dot_dimension_numbers<[1], [0], [0], [1], [0, 0, 1, 1], [], []>} : vector<32x32xf32>, vector<32x256xf32>, vector<32x256xf32> -> vector<32x256xf32>
    %109 = arith.addf %105, %108 : vector<32x256xf32>
    %c255_i32_59 = arith.constant 255 : i32
    %110 = tpu.dynamic_rotate %73 by %c255_i32_59 dim 1 : vector<32x256xf32>, i32 -> vector<32x256xf32>
    %111 = vector.extract_strided_slice %0 {offsets = [5, 0], sizes = [1, 256], strides = [1, 1]} : vector<9x256xf32> to vector<1x256xf32>
    %112 = vector.broadcast %111 : vector<1x256xf32> to vector<32x256xf32>
    %113 = arith.mulf %110, %112 : vector<32x256xf32>
    %c5_60 = arith.constant 5 : index
    %c0_61 = arith.constant 0 : index
    %c0_62 = arith.constant 0 : index
    %114 = vector.load %arg5[%c5_60, %c0_61, %c0_62] : memref<9x32x32xf32, #tpu.memory_space<vmem>>, vector<1x32x32xf32>
    %115 = vector.shape_cast %114 : vector<1x32x32xf32> to vector<32x32xf32>
    %cst_63 = arith.constant dense<0.000000e+00> : vector<32x256xf32>
    %116 = tpu.matmul %115, %113, %cst_63 {dimension_numbers = #tpu.dot_dimension_numbers<[1], [0], [0], [1], [0, 0, 1, 1], [], []>} : vector<32x32xf32>, vector<32x256xf32>, vector<32x256xf32> -> vector<32x256xf32>
    %117 = arith.addf %109, %116 : vector<32x256xf32>
    %c241_i32_64 = arith.constant 241 : i32
    %118 = tpu.dynamic_rotate %73 by %c241_i32_64 dim 1 : vector<32x256xf32>, i32 -> vector<32x256xf32>
    %119 = vector.extract_strided_slice %0 {offsets = [6, 0], sizes = [1, 256], strides = [1, 1]} : vector<9x256xf32> to vector<1x256xf32>
    %120 = vector.broadcast %119 : vector<1x256xf32> to vector<32x256xf32>
    %121 = arith.mulf %118, %120 : vector<32x256xf32>
    %c6_65 = arith.constant 6 : index
    %c0_66 = arith.constant 0 : index
    %c0_67 = arith.constant 0 : index
    %122 = vector.load %arg5[%c6_65, %c0_66, %c0_67] : memref<9x32x32xf32, #tpu.memory_space<vmem>>, vector<1x32x32xf32>
    %123 = vector.shape_cast %122 : vector<1x32x32xf32> to vector<32x32xf32>
    %cst_68 = arith.constant dense<0.000000e+00> : vector<32x256xf32>
    %124 = tpu.matmul %123, %121, %cst_68 {dimension_numbers = #tpu.dot_dimension_numbers<[1], [0], [0], [1], [0, 0, 1, 1], [], []>} : vector<32x32xf32>, vector<32x256xf32>, vector<32x256xf32> -> vector<32x256xf32>
    %125 = arith.addf %117, %124 : vector<32x256xf32>
    %c240_i32_69 = arith.constant 240 : i32
    %126 = tpu.dynamic_rotate %73 by %c240_i32_69 dim 1 : vector<32x256xf32>, i32 -> vector<32x256xf32>
    %127 = vector.extract_strided_slice %0 {offsets = [7, 0], sizes = [1, 256], strides = [1, 1]} : vector<9x256xf32> to vector<1x256xf32>
    %128 = vector.broadcast %127 : vector<1x256xf32> to vector<32x256xf32>
    %129 = arith.mulf %126, %128 : vector<32x256xf32>
    %c7_70 = arith.constant 7 : index
    %c0_71 = arith.constant 0 : index
    %c0_72 = arith.constant 0 : index
    %130 = vector.load %arg5[%c7_70, %c0_71, %c0_72] : memref<9x32x32xf32, #tpu.memory_space<vmem>>, vector<1x32x32xf32>
    %131 = vector.shape_cast %130 : vector<1x32x32xf32> to vector<32x32xf32>
    %cst_73 = arith.constant dense<0.000000e+00> : vector<32x256xf32>
    %132 = tpu.matmul %131, %129, %cst_73 {dimension_numbers = #tpu.dot_dimension_numbers<[1], [0], [0], [1], [0, 0, 1, 1], [], []>} : vector<32x32xf32>, vector<32x256xf32>, vector<32x256xf32> -> vector<32x256xf32>
    %133 = arith.addf %125, %132 : vector<32x256xf32>
    %c239_i32_74 = arith.constant 239 : i32
    %134 = tpu.dynamic_rotate %73 by %c239_i32_74 dim 1 : vector<32x256xf32>, i32 -> vector<32x256xf32>
    %135 = vector.extract_strided_slice %0 {offsets = [8, 0], sizes = [1, 256], strides = [1, 1]} : vector<9x256xf32> to vector<1x256xf32>
    %136 = vector.broadcast %135 : vector<1x256xf32> to vector<32x256xf32>
    %137 = arith.mulf %134, %136 : vector<32x256xf32>
    %c8_75 = arith.constant 8 : index
    %c0_76 = arith.constant 0 : index
    %c0_77 = arith.constant 0 : index
    %138 = vector.load %arg5[%c8_75, %c0_76, %c0_77] : memref<9x32x32xf32, #tpu.memory_space<vmem>>, vector<1x32x32xf32>
    %139 = vector.shape_cast %138 : vector<1x32x32xf32> to vector<32x32xf32>
    %cst_78 = arith.constant dense<0.000000e+00> : vector<32x256xf32>
    %140 = tpu.matmul %139, %137, %cst_78 {dimension_numbers = #tpu.dot_dimension_numbers<[1], [0], [0], [1], [0, 0, 1, 1], [], []>} : vector<32x32xf32>, vector<32x256xf32>, vector<32x256xf32> -> vector<32x256xf32>
    %141 = arith.addf %133, %140 : vector<32x256xf32>
    %c0_79 = arith.constant 0 : index
    %c0_80 = arith.constant 0 : index
    %c0_81 = arith.constant 0 : index
    %142 = vector.load %arg6[%c0_79, %c0_80, %c0_81] : memref<1x32x256xf32, #tpu.memory_space<vmem>>, vector<1x32x256xf32>
    %143 = vector.shape_cast %142 : vector<1x32x256xf32> to vector<32x256xf32>
    %144 = vector.shape_cast %141 : vector<32x256xf32> to vector<1x32x256xf32>
    tpu.vector_store %arg6[%c0_79, %c0_80, %c0_81], %144 {strides = array<i32>} : memref<1x32x256xf32, #tpu.memory_space<vmem>>, vector<1x32x256xf32>,
    %cst_82 = arith.constant dense<0.000000e+00> : vector<32xf32>
    %145 = vector.multi_reduction <add>, %141, %cst_82 [1] : vector<32x256xf32> to vector<32xf32>
    %146 = vector.shape_cast %145 : vector<32xf32> to vector<32x1xf32>
    %147 = arith.mulf %141, %141 : vector<32x256xf32>
    %cst_83 = arith.constant dense<0.000000e+00> : vector<32xf32>
    %148 = vector.multi_reduction <add>, %147, %cst_83 [1] : vector<32x256xf32> to vector<32xf32>
    %149 = vector.shape_cast %148 : vector<32xf32> to vector<32x1xf32>
    %150 = tpu.iota {dimensions = array<i32: 1>} : vector<32x128xi32>
    %c0_i32 = arith.constant 0 : i32
    %151 = vector.broadcast %c0_i32 : i32 to vector<32x128xi32>
    %152 = arith.cmpi eq, %150, %151 : vector<32x128xi32>
    %c1_i32_84 = arith.constant 1 : i32
    %153 = vector.broadcast %c1_i32_84 : i32 to vector<32x128xi32>
    %154 = arith.cmpi eq, %150, %153 : vector<32x128xi32>
    %cst_85 = arith.constant 0.000000e+00 : f32
    %155 = vector.shape_cast %149 : vector<32x1xf32> to vector<32x1xf32>
    %156 = vector.broadcast %155 : vector<32x1xf32> to vector<32x128xf32>
    %157 = vector.broadcast %cst_85 : f32 to vector<32x128xf32>
    %158 = arith.select %154, %156, %157 : vector<32x128xi1>, vector<32x128xf32>
    %159 = vector.shape_cast %146 : vector<32x1xf32> to vector<32x1xf32>
    %160 = vector.broadcast %159 : vector<32x1xf32> to vector<32x128xf32>
    %161 = arith.select %152, %160, %158 : vector<32x128xi1>, vector<32x128xf32>
    %c0_86 = arith.constant 0 : index
    %c0_87 = arith.constant 0 : index
    %c0_88 = arith.constant 0 : index
    %162 = vector.load %arg7[%c0_86, %c0_87, %c0_88] : memref<1x32x128xf32, #tpu.memory_space<vmem>>, vector<1x32x128xf32>
    %163 = vector.shape_cast %162 : vector<1x32x128xf32> to vector<32x128xf32>
    %164 = vector.shape_cast %161 : vector<32x128xf32> to vector<1x32x128xf32>
    tpu.vector_store %arg7[%c0_86, %c0_87, %c0_88], %164 {strides = array<i32>} : memref<1x32x128xf32, #tpu.memory_space<vmem>>, vector<1x32x128xf32>,
    return
  }
  func.func @transform_0(%arg0: i32) -> (i32, i32, i32) {
    %c0_i32 = arith.constant 0 : i32
    %c0_i32_0 = arith.constant 0 : i32
    %c0_i32_1 = arith.constant 0 : i32
    return %arg0, %c0_i32, %c0_i32_0 : i32, i32, i32
  }
  func.func @transform_1(%arg0: i32) -> (i32, i32, i32) {
    %c0_i32 = arith.constant 0 : i32
    %c0_i32_0 = arith.constant 0 : i32
    %c0_i32_1 = arith.constant 0 : i32
    return %arg0, %c0_i32, %c0_i32_0 : i32, i32, i32
  }
  func.func @transform_2(%arg0: i32) -> (i32, i32) {
    %c0_i32 = arith.constant 0 : i32
    %c0_i32_0 = arith.constant 0 : i32
    %c0_i32_1 = arith.constant 0 : i32
    return %c0_i32, %c0_i32_0 : i32, i32
  }
  func.func @transform_3(%arg0: i32) -> (i32, i32, i32) {
    %c0_i32 = arith.constant 0 : i32
    %c0_i32_0 = arith.constant 0 : i32
    %c0_i32_1 = arith.constant 0 : i32
    %c0_i32_2 = arith.constant 0 : i32
    return %c0_i32, %c0_i32_0, %c0_i32_1 : i32, i32, i32
  }
  func.func @transform_4(%arg0: i32) -> (i32, i32, i32) {
    %c0_i32 = arith.constant 0 : i32
    %c0_i32_0 = arith.constant 0 : i32
    %c0_i32_1 = arith.constant 0 : i32
    %c0_i32_2 = arith.constant 0 : i32
    return %c0_i32, %c0_i32_0, %c0_i32_1 : i32, i32, i32
  }
  func.func @transform_5(%arg0: i32) -> (i32, i32, i32) {
    %c0_i32 = arith.constant 0 : i32
    %c0_i32_0 = arith.constant 0 : i32
    %c0_i32_1 = arith.constant 0 : i32
    return %arg0, %c0_i32, %c0_i32_0 : i32, i32, i32
  }
  func.func @transform_6(%arg0: i32) -> (i32, i32, i32) {
    %c0_i32 = arith.constant 0 : i32
    %c0_i32_0 = arith.constant 0 : i32
    %c0_i32_1 = arith.constant 0 : i32
    return %arg0, %c0_i32, %c0_i32_0 : i32, i32, i32
  }
}

module attributes {stable_mosaic.version = 11 : i64} {
  func.func @_conv2_kernel(%arg0: i32, %arg1: memref<1x32x256xf32, #tpu.memory_space<vmem>>, %arg2: memref<32x1xf32, #tpu.memory_space<vmem>>, %arg3: memref<32x1xf32, #tpu.memory_space<vmem>>, %arg4: memref<9x256xf32, #tpu.memory_space<vmem>>, %arg5: memref<9x32x32xf32, #tpu.memory_space<vmem>>, %arg6: memref<1x32x256xf32, #tpu.memory_space<vmem>>, %arg7: memref<1x32x128xf32, #tpu.memory_space<vmem>>) attributes {dimension_semantics = [#tpu.dimension_semantics<parallel>], iteration_bounds = array<i64: 2>, scalar_prefetch = 0 : i64, scratch_operands = 0 : i64, tpu.core_type = #tpu.core_type<tc>, window_params = [{transform_indices = @transform_0, window_bounds = array<i64: 1, 32, 256>}, {pipeline_mode = #tpu.pipeline_mode<synchronous>, transform_indices = @transform_1, window_bounds = array<i64: 32, 1>}, {pipeline_mode = #tpu.pipeline_mode<synchronous>, transform_indices = @transform_2, window_bounds = array<i64: 32, 1>}, {pipeline_mode = #tpu.pipeline_mode<synchronous>, transform_indices = @transform_3, window_bounds = array<i64: 9, 256>}, {pipeline_mode = #tpu.pipeline_mode<synchronous>, transform_indices = @transform_4, window_bounds = array<i64: 9, 32, 32>}, {transform_indices = @transform_5, window_bounds = array<i64: 1, 32, 256>}, {transform_indices = @transform_6, window_bounds = array<i64: 1, 32, 128>}]} {
    %c0 = arith.constant 0 : index
    %c0_0 = arith.constant 0 : index
    %c0_1 = arith.constant 0 : index
    %0 = vector.load %arg1[%c0, %c0_0, %c0_1] : memref<1x32x256xf32, #tpu.memory_space<vmem>>, vector<1x32x256xf32>
    %1 = vector.shape_cast %0 : vector<1x32x256xf32> to vector<32x256xf32>
    %c0_2 = arith.constant 0 : index
    %c0_3 = arith.constant 0 : index
    %2 = vector.load %arg2[%c0_2, %c0_3] : memref<32x1xf32, #tpu.memory_space<vmem>>, vector<32x1xf32>
    %3 = vector.broadcast %2 : vector<32x1xf32> to vector<32x256xf32>
    %4 = arith.mulf %1, %3 : vector<32x256xf32>
    %c0_4 = arith.constant 0 : index
    %c0_5 = arith.constant 0 : index
    %5 = vector.load %arg3[%c0_4, %c0_5] : memref<32x1xf32, #tpu.memory_space<vmem>>, vector<32x1xf32>
    %6 = vector.broadcast %5 : vector<32x1xf32> to vector<32x256xf32>
    %7 = arith.addf %4, %6 : vector<32x256xf32>
    %cst = arith.constant 0.000000e+00 : f32
    %8 = vector.broadcast %cst : f32 to vector<32x256xf32>
    %9 = arith.maximumf %7, %8 : vector<32x256xf32>
    %c0_6 = arith.constant 0 : index
    %c0_7 = arith.constant 0 : index
    %10 = vector.load %arg4[%c0_6, %c0_7] : memref<9x256xf32, #tpu.memory_space<vmem>>, vector<9x256xf32>
    %cst_8 = arith.constant 0.000000e+00 : f32
    %11 = vector.broadcast %cst_8 : f32 to vector<32x256xf32>
    %c17_i32 = arith.constant 17 : i32
    %12 = tpu.dynamic_rotate %9 by %c17_i32 dim 1 : vector<32x256xf32>, i32 -> vector<32x256xf32>
    %13 = vector.extract_strided_slice %10 {offsets = [0, 0], sizes = [1, 256], strides = [1, 1]} : vector<9x256xf32> to vector<1x256xf32>
    %14 = vector.broadcast %13 : vector<1x256xf32> to vector<32x256xf32>
    %15 = arith.mulf %12, %14 : vector<32x256xf32>
    %c0_9 = arith.constant 0 : index
    %c0_10 = arith.constant 0 : index
    %c0_11 = arith.constant 0 : index
    %16 = vector.load %arg5[%c0_9, %c0_10, %c0_11] : memref<9x32x32xf32, #tpu.memory_space<vmem>>, vector<1x32x32xf32>
    %17 = vector.shape_cast %16 : vector<1x32x32xf32> to vector<32x32xf32>
    %cst_12 = arith.constant dense<0.000000e+00> : vector<32x256xf32>
    %18 = tpu.matmul %17, %15, %cst_12 {dimension_numbers = #tpu.dot_dimension_numbers<[1], [0], [0], [1], [0, 0, 1, 1], [], []>} : vector<32x32xf32>, vector<32x256xf32>, vector<32x256xf32> -> vector<32x256xf32>
    %19 = arith.addf %11, %18 : vector<32x256xf32>
    %c16_i32 = arith.constant 16 : i32
    %20 = tpu.dynamic_rotate %9 by %c16_i32 dim 1 : vector<32x256xf32>, i32 -> vector<32x256xf32>
    %21 = vector.extract_strided_slice %10 {offsets = [1, 0], sizes = [1, 256], strides = [1, 1]} : vector<9x256xf32> to vector<1x256xf32>
    %22 = vector.broadcast %21 : vector<1x256xf32> to vector<32x256xf32>
    %23 = arith.mulf %20, %22 : vector<32x256xf32>
    %c1 = arith.constant 1 : index
    %c0_13 = arith.constant 0 : index
    %c0_14 = arith.constant 0 : index
    %24 = vector.load %arg5[%c1, %c0_13, %c0_14] : memref<9x32x32xf32, #tpu.memory_space<vmem>>, vector<1x32x32xf32>
    %25 = vector.shape_cast %24 : vector<1x32x32xf32> to vector<32x32xf32>
    %cst_15 = arith.constant dense<0.000000e+00> : vector<32x256xf32>
    %26 = tpu.matmul %25, %23, %cst_15 {dimension_numbers = #tpu.dot_dimension_numbers<[1], [0], [0], [1], [0, 0, 1, 1], [], []>} : vector<32x32xf32>, vector<32x256xf32>, vector<32x256xf32> -> vector<32x256xf32>
    %27 = arith.addf %19, %26 : vector<32x256xf32>
    %c15_i32 = arith.constant 15 : i32
    %28 = tpu.dynamic_rotate %9 by %c15_i32 dim 1 : vector<32x256xf32>, i32 -> vector<32x256xf32>
    %29 = vector.extract_strided_slice %10 {offsets = [2, 0], sizes = [1, 256], strides = [1, 1]} : vector<9x256xf32> to vector<1x256xf32>
    %30 = vector.broadcast %29 : vector<1x256xf32> to vector<32x256xf32>
    %31 = arith.mulf %28, %30 : vector<32x256xf32>
    %c2 = arith.constant 2 : index
    %c0_16 = arith.constant 0 : index
    %c0_17 = arith.constant 0 : index
    %32 = vector.load %arg5[%c2, %c0_16, %c0_17] : memref<9x32x32xf32, #tpu.memory_space<vmem>>, vector<1x32x32xf32>
    %33 = vector.shape_cast %32 : vector<1x32x32xf32> to vector<32x32xf32>
    %cst_18 = arith.constant dense<0.000000e+00> : vector<32x256xf32>
    %34 = tpu.matmul %33, %31, %cst_18 {dimension_numbers = #tpu.dot_dimension_numbers<[1], [0], [0], [1], [0, 0, 1, 1], [], []>} : vector<32x32xf32>, vector<32x256xf32>, vector<32x256xf32> -> vector<32x256xf32>
    %35 = arith.addf %27, %34 : vector<32x256xf32>
    %c1_i32 = arith.constant 1 : i32
    %36 = tpu.dynamic_rotate %9 by %c1_i32 dim 1 : vector<32x256xf32>, i32 -> vector<32x256xf32>
    %37 = vector.extract_strided_slice %10 {offsets = [3, 0], sizes = [1, 256], strides = [1, 1]} : vector<9x256xf32> to vector<1x256xf32>
    %38 = vector.broadcast %37 : vector<1x256xf32> to vector<32x256xf32>
    %39 = arith.mulf %36, %38 : vector<32x256xf32>
    %c3 = arith.constant 3 : index
    %c0_19 = arith.constant 0 : index
    %c0_20 = arith.constant 0 : index
    %40 = vector.load %arg5[%c3, %c0_19, %c0_20] : memref<9x32x32xf32, #tpu.memory_space<vmem>>, vector<1x32x32xf32>
    %41 = vector.shape_cast %40 : vector<1x32x32xf32> to vector<32x32xf32>
    %cst_21 = arith.constant dense<0.000000e+00> : vector<32x256xf32>
    %42 = tpu.matmul %41, %39, %cst_21 {dimension_numbers = #tpu.dot_dimension_numbers<[1], [0], [0], [1], [0, 0, 1, 1], [], []>} : vector<32x32xf32>, vector<32x256xf32>, vector<32x256xf32> -> vector<32x256xf32>
    %43 = arith.addf %35, %42 : vector<32x256xf32>
    %c4 = arith.constant 4 : index
    %c0_22 = arith.constant 0 : index
    %c0_23 = arith.constant 0 : index
    %44 = vector.load %arg5[%c4, %c0_22, %c0_23] : memref<9x32x32xf32, #tpu.memory_space<vmem>>, vector<1x32x32xf32>
    %45 = vector.shape_cast %44 : vector<1x32x32xf32> to vector<32x32xf32>
    %cst_24 = arith.constant dense<0.000000e+00> : vector<32x256xf32>
    %46 = tpu.matmul %45, %9, %cst_24 {dimension_numbers = #tpu.dot_dimension_numbers<[1], [0], [0], [1], [0, 0, 1, 1], [], []>} : vector<32x32xf32>, vector<32x256xf32>, vector<32x256xf32> -> vector<32x256xf32>
    %47 = arith.addf %43, %46 : vector<32x256xf32>
    %c255_i32 = arith.constant 255 : i32
    %48 = tpu.dynamic_rotate %9 by %c255_i32 dim 1 : vector<32x256xf32>, i32 -> vector<32x256xf32>
    %49 = vector.extract_strided_slice %10 {offsets = [5, 0], sizes = [1, 256], strides = [1, 1]} : vector<9x256xf32> to vector<1x256xf32>
    %50 = vector.broadcast %49 : vector<1x256xf32> to vector<32x256xf32>
    %51 = arith.mulf %48, %50 : vector<32x256xf32>
    %c5 = arith.constant 5 : index
    %c0_25 = arith.constant 0 : index
    %c0_26 = arith.constant 0 : index
    %52 = vector.load %arg5[%c5, %c0_25, %c0_26] : memref<9x32x32xf32, #tpu.memory_space<vmem>>, vector<1x32x32xf32>
    %53 = vector.shape_cast %52 : vector<1x32x32xf32> to vector<32x32xf32>
    %cst_27 = arith.constant dense<0.000000e+00> : vector<32x256xf32>
    %54 = tpu.matmul %53, %51, %cst_27 {dimension_numbers = #tpu.dot_dimension_numbers<[1], [0], [0], [1], [0, 0, 1, 1], [], []>} : vector<32x32xf32>, vector<32x256xf32>, vector<32x256xf32> -> vector<32x256xf32>
    %55 = arith.addf %47, %54 : vector<32x256xf32>
    %c241_i32 = arith.constant 241 : i32
    %56 = tpu.dynamic_rotate %9 by %c241_i32 dim 1 : vector<32x256xf32>, i32 -> vector<32x256xf32>
    %57 = vector.extract_strided_slice %10 {offsets = [6, 0], sizes = [1, 256], strides = [1, 1]} : vector<9x256xf32> to vector<1x256xf32>
    %58 = vector.broadcast %57 : vector<1x256xf32> to vector<32x256xf32>
    %59 = arith.mulf %56, %58 : vector<32x256xf32>
    %c6 = arith.constant 6 : index
    %c0_28 = arith.constant 0 : index
    %c0_29 = arith.constant 0 : index
    %60 = vector.load %arg5[%c6, %c0_28, %c0_29] : memref<9x32x32xf32, #tpu.memory_space<vmem>>, vector<1x32x32xf32>
    %61 = vector.shape_cast %60 : vector<1x32x32xf32> to vector<32x32xf32>
    %cst_30 = arith.constant dense<0.000000e+00> : vector<32x256xf32>
    %62 = tpu.matmul %61, %59, %cst_30 {dimension_numbers = #tpu.dot_dimension_numbers<[1], [0], [0], [1], [0, 0, 1, 1], [], []>} : vector<32x32xf32>, vector<32x256xf32>, vector<32x256xf32> -> vector<32x256xf32>
    %63 = arith.addf %55, %62 : vector<32x256xf32>
    %c240_i32 = arith.constant 240 : i32
    %64 = tpu.dynamic_rotate %9 by %c240_i32 dim 1 : vector<32x256xf32>, i32 -> vector<32x256xf32>
    %65 = vector.extract_strided_slice %10 {offsets = [7, 0], sizes = [1, 256], strides = [1, 1]} : vector<9x256xf32> to vector<1x256xf32>
    %66 = vector.broadcast %65 : vector<1x256xf32> to vector<32x256xf32>
    %67 = arith.mulf %64, %66 : vector<32x256xf32>
    %c7 = arith.constant 7 : index
    %c0_31 = arith.constant 0 : index
    %c0_32 = arith.constant 0 : index
    %68 = vector.load %arg5[%c7, %c0_31, %c0_32] : memref<9x32x32xf32, #tpu.memory_space<vmem>>, vector<1x32x32xf32>
    %69 = vector.shape_cast %68 : vector<1x32x32xf32> to vector<32x32xf32>
    %cst_33 = arith.constant dense<0.000000e+00> : vector<32x256xf32>
    %70 = tpu.matmul %69, %67, %cst_33 {dimension_numbers = #tpu.dot_dimension_numbers<[1], [0], [0], [1], [0, 0, 1, 1], [], []>} : vector<32x32xf32>, vector<32x256xf32>, vector<32x256xf32> -> vector<32x256xf32>
    %71 = arith.addf %63, %70 : vector<32x256xf32>
    %c239_i32 = arith.constant 239 : i32
    %72 = tpu.dynamic_rotate %9 by %c239_i32 dim 1 : vector<32x256xf32>, i32 -> vector<32x256xf32>
    %73 = vector.extract_strided_slice %10 {offsets = [8, 0], sizes = [1, 256], strides = [1, 1]} : vector<9x256xf32> to vector<1x256xf32>
    %74 = vector.broadcast %73 : vector<1x256xf32> to vector<32x256xf32>
    %75 = arith.mulf %72, %74 : vector<32x256xf32>
    %c8 = arith.constant 8 : index
    %c0_34 = arith.constant 0 : index
    %c0_35 = arith.constant 0 : index
    %76 = vector.load %arg5[%c8, %c0_34, %c0_35] : memref<9x32x32xf32, #tpu.memory_space<vmem>>, vector<1x32x32xf32>
    %77 = vector.shape_cast %76 : vector<1x32x32xf32> to vector<32x32xf32>
    %cst_36 = arith.constant dense<0.000000e+00> : vector<32x256xf32>
    %78 = tpu.matmul %77, %75, %cst_36 {dimension_numbers = #tpu.dot_dimension_numbers<[1], [0], [0], [1], [0, 0, 1, 1], [], []>} : vector<32x32xf32>, vector<32x256xf32>, vector<32x256xf32> -> vector<32x256xf32>
    %79 = arith.addf %71, %78 : vector<32x256xf32>
    %c0_37 = arith.constant 0 : index
    %c0_38 = arith.constant 0 : index
    %c0_39 = arith.constant 0 : index
    %80 = vector.load %arg6[%c0_37, %c0_38, %c0_39] : memref<1x32x256xf32, #tpu.memory_space<vmem>>, vector<1x32x256xf32>
    %81 = vector.shape_cast %80 : vector<1x32x256xf32> to vector<32x256xf32>
    %82 = vector.shape_cast %79 : vector<32x256xf32> to vector<1x32x256xf32>
    tpu.vector_store %arg6[%c0_37, %c0_38, %c0_39], %82 {strides = array<i32>} : memref<1x32x256xf32, #tpu.memory_space<vmem>>, vector<1x32x256xf32>,
    %cst_40 = arith.constant dense<0.000000e+00> : vector<32xf32>
    %83 = vector.multi_reduction <add>, %79, %cst_40 [1] : vector<32x256xf32> to vector<32xf32>
    %84 = vector.shape_cast %83 : vector<32xf32> to vector<32x1xf32>
    %85 = arith.mulf %79, %79 : vector<32x256xf32>
    %cst_41 = arith.constant dense<0.000000e+00> : vector<32xf32>
    %86 = vector.multi_reduction <add>, %85, %cst_41 [1] : vector<32x256xf32> to vector<32xf32>
    %87 = vector.shape_cast %86 : vector<32xf32> to vector<32x1xf32>
    %88 = tpu.iota {dimensions = array<i32: 1>} : vector<32x128xi32>
    %c0_i32 = arith.constant 0 : i32
    %89 = vector.broadcast %c0_i32 : i32 to vector<32x128xi32>
    %90 = arith.cmpi eq, %88, %89 : vector<32x128xi32>
    %c1_i32_42 = arith.constant 1 : i32
    %91 = vector.broadcast %c1_i32_42 : i32 to vector<32x128xi32>
    %92 = arith.cmpi eq, %88, %91 : vector<32x128xi32>
    %cst_43 = arith.constant 0.000000e+00 : f32
    %93 = vector.shape_cast %87 : vector<32x1xf32> to vector<32x1xf32>
    %94 = vector.broadcast %93 : vector<32x1xf32> to vector<32x128xf32>
    %95 = vector.broadcast %cst_43 : f32 to vector<32x128xf32>
    %96 = arith.select %92, %94, %95 : vector<32x128xi1>, vector<32x128xf32>
    %97 = vector.shape_cast %84 : vector<32x1xf32> to vector<32x1xf32>
    %98 = vector.broadcast %97 : vector<32x1xf32> to vector<32x128xf32>
    %99 = arith.select %90, %98, %96 : vector<32x128xi1>, vector<32x128xf32>
    %c0_44 = arith.constant 0 : index
    %c0_45 = arith.constant 0 : index
    %c0_46 = arith.constant 0 : index
    %100 = vector.load %arg7[%c0_44, %c0_45, %c0_46] : memref<1x32x128xf32, #tpu.memory_space<vmem>>, vector<1x32x128xf32>
    %101 = vector.shape_cast %100 : vector<1x32x128xf32> to vector<32x128xf32>
    %102 = vector.shape_cast %99 : vector<32x128xf32> to vector<1x32x128xf32>
    tpu.vector_store %arg7[%c0_44, %c0_45, %c0_46], %102 {strides = array<i32>} : memref<1x32x128xf32, #tpu.memory_space<vmem>>, vector<1x32x128xf32>,
    return
  }
  func.func @transform_0(%arg0: i32) -> (i32, i32, i32) {
    %c0_i32 = arith.constant 0 : i32
    %c0_i32_0 = arith.constant 0 : i32
    %c0_i32_1 = arith.constant 0 : i32
    return %arg0, %c0_i32, %c0_i32_0 : i32, i32, i32
  }
  func.func @transform_1(%arg0: i32) -> (i32, i32) {
    %c0_i32 = arith.constant 0 : i32
    %c0_i32_0 = arith.constant 0 : i32
    %c0_i32_1 = arith.constant 0 : i32
    return %c0_i32, %c0_i32_0 : i32, i32
  }
  func.func @transform_2(%arg0: i32) -> (i32, i32) {
    %c0_i32 = arith.constant 0 : i32
    %c0_i32_0 = arith.constant 0 : i32
    %c0_i32_1 = arith.constant 0 : i32
    return %c0_i32, %c0_i32_0 : i32, i32
  }
  func.func @transform_3(%arg0: i32) -> (i32, i32) {
    %c0_i32 = arith.constant 0 : i32
    %c0_i32_0 = arith.constant 0 : i32
    %c0_i32_1 = arith.constant 0 : i32
    return %c0_i32, %c0_i32_0 : i32, i32
  }
  func.func @transform_4(%arg0: i32) -> (i32, i32, i32) {
    %c0_i32 = arith.constant 0 : i32
    %c0_i32_0 = arith.constant 0 : i32
    %c0_i32_1 = arith.constant 0 : i32
    %c0_i32_2 = arith.constant 0 : i32
    return %c0_i32, %c0_i32_0, %c0_i32_1 : i32, i32, i32
  }
  func.func @transform_5(%arg0: i32) -> (i32, i32, i32) {
    %c0_i32 = arith.constant 0 : i32
    %c0_i32_0 = arith.constant 0 : i32
    %c0_i32_1 = arith.constant 0 : i32
    return %arg0, %c0_i32, %c0_i32_0 : i32, i32, i32
  }
  func.func @transform_6(%arg0: i32) -> (i32, i32, i32) {
    %c0_i32 = arith.constant 0 : i32
    %c0_i32_0 = arith.constant 0 : i32
    %c0_i32_1 = arith.constant 0 : i32
    return %arg0, %c0_i32, %c0_i32_0 : i32, i32, i32
  }
}

module attributes {stable_mosaic.version = 11 : i64} {
  func.func @_head_kernel(%arg0: i32, %arg1: memref<1x32x256xf32, #tpu.memory_space<vmem>>, %arg2: memref<32x1xf32, #tpu.memory_space<vmem>>, %arg3: memref<32x1xf32, #tpu.memory_space<vmem>>, %arg4: memref<32x32xf32, #tpu.memory_space<vmem>>, %arg5: memref<32x1xf32, #tpu.memory_space<vmem>>, %arg6: memref<1x32x256xf32, #tpu.memory_space<vmem>>, %arg7: memref<1x32x256xf32, #tpu.memory_space<vmem>>) attributes {dimension_semantics = [#tpu.dimension_semantics<parallel>], iteration_bounds = array<i64: 2>, scalar_prefetch = 0 : i64, scratch_operands = 0 : i64, tpu.core_type = #tpu.core_type<tc>, window_params = [{transform_indices = @transform_0, window_bounds = array<i64: 1, 32, 256>}, {pipeline_mode = #tpu.pipeline_mode<synchronous>, transform_indices = @transform_1, window_bounds = array<i64: 32, 1>}, {pipeline_mode = #tpu.pipeline_mode<synchronous>, transform_indices = @transform_2, window_bounds = array<i64: 32, 1>}, {pipeline_mode = #tpu.pipeline_mode<synchronous>, transform_indices = @transform_3, window_bounds = array<i64: 32, 32>}, {pipeline_mode = #tpu.pipeline_mode<synchronous>, transform_indices = @transform_4, window_bounds = array<i64: 32, 1>}, {transform_indices = @transform_5, window_bounds = array<i64: 1, 32, 256>}, {transform_indices = @transform_6, window_bounds = array<i64: 1, 32, 256>}]} {
    %c0 = arith.constant 0 : index
    %c0_0 = arith.constant 0 : index
    %c0_1 = arith.constant 0 : index
    %0 = vector.load %arg1[%c0, %c0_0, %c0_1] : memref<1x32x256xf32, #tpu.memory_space<vmem>>, vector<1x32x256xf32>
    %1 = vector.shape_cast %0 : vector<1x32x256xf32> to vector<32x256xf32>
    %c0_2 = arith.constant 0 : index
    %c0_3 = arith.constant 0 : index
    %2 = vector.load %arg2[%c0_2, %c0_3] : memref<32x1xf32, #tpu.memory_space<vmem>>, vector<32x1xf32>
    %3 = vector.broadcast %2 : vector<32x1xf32> to vector<32x256xf32>
    %4 = arith.mulf %1, %3 : vector<32x256xf32>
    %c0_4 = arith.constant 0 : index
    %c0_5 = arith.constant 0 : index
    %5 = vector.load %arg3[%c0_4, %c0_5] : memref<32x1xf32, #tpu.memory_space<vmem>>, vector<32x1xf32>
    %6 = vector.broadcast %5 : vector<32x1xf32> to vector<32x256xf32>
    %7 = arith.addf %4, %6 : vector<32x256xf32>
    %cst = arith.constant 0.000000e+00 : f32
    %8 = vector.broadcast %cst : f32 to vector<32x256xf32>
    %9 = arith.maximumf %7, %8 : vector<32x256xf32>
    %c0_6 = arith.constant 0 : index
    %c0_7 = arith.constant 0 : index
    %c0_8 = arith.constant 0 : index
    %10 = vector.load %arg6[%c0_6, %c0_7, %c0_8] : memref<1x32x256xf32, #tpu.memory_space<vmem>>, vector<1x32x256xf32>
    %11 = vector.shape_cast %10 : vector<1x32x256xf32> to vector<32x256xf32>
    %12 = vector.shape_cast %9 : vector<32x256xf32> to vector<1x32x256xf32>
    tpu.vector_store %arg6[%c0_6, %c0_7, %c0_8], %12 {strides = array<i32>} : memref<1x32x256xf32, #tpu.memory_space<vmem>>, vector<1x32x256xf32>,
    %c0_9 = arith.constant 0 : index
    %c0_10 = arith.constant 0 : index
    %13 = vector.load %arg4[%c0_9, %c0_10] : memref<32x32xf32, #tpu.memory_space<vmem>>, vector<32x32xf32>
    %cst_11 = arith.constant dense<0.000000e+00> : vector<32x256xf32>
    %14 = tpu.matmul %13, %9, %cst_11 {dimension_numbers = #tpu.dot_dimension_numbers<[1], [0], [0], [1], [0, 0, 1, 1], [], []>} : vector<32x32xf32>, vector<32x256xf32>, vector<32x256xf32> -> vector<32x256xf32>
    %c0_12 = arith.constant 0 : index
    %c0_13 = arith.constant 0 : index
    %15 = vector.load %arg5[%c0_12, %c0_13] : memref<32x1xf32, #tpu.memory_space<vmem>>, vector<32x1xf32>
    %16 = vector.broadcast %15 : vector<32x1xf32> to vector<32x256xf32>
    %17 = arith.addf %14, %16 : vector<32x256xf32>
    %c0_14 = arith.constant 0 : index
    %c0_15 = arith.constant 0 : index
    %c0_16 = arith.constant 0 : index
    %18 = vector.load %arg7[%c0_14, %c0_15, %c0_16] : memref<1x32x256xf32, #tpu.memory_space<vmem>>, vector<1x32x256xf32>
    %19 = vector.shape_cast %18 : vector<1x32x256xf32> to vector<32x256xf32>
    %20 = vector.shape_cast %17 : vector<32x256xf32> to vector<1x32x256xf32>
    tpu.vector_store %arg7[%c0_14, %c0_15, %c0_16], %20 {strides = array<i32>} : memref<1x32x256xf32, #tpu.memory_space<vmem>>, vector<1x32x256xf32>,
    return
  }
  func.func @transform_0(%arg0: i32) -> (i32, i32, i32) {
    %c0_i32 = arith.constant 0 : i32
    %c0_i32_0 = arith.constant 0 : i32
    %c0_i32_1 = arith.constant 0 : i32
    return %arg0, %c0_i32, %c0_i32_0 : i32, i32, i32
  }
  func.func @transform_1(%arg0: i32) -> (i32, i32) {
    %c0_i32 = arith.constant 0 : i32
    %c0_i32_0 = arith.constant 0 : i32
    %c0_i32_1 = arith.constant 0 : i32
    return %c0_i32, %c0_i32_0 : i32, i32
  }
  func.func @transform_2(%arg0: i32) -> (i32, i32) {
    %c0_i32 = arith.constant 0 : i32
    %c0_i32_0 = arith.constant 0 : i32
    %c0_i32_1 = arith.constant 0 : i32
    return %c0_i32, %c0_i32_0 : i32, i32
  }
  func.func @transform_3(%arg0: i32) -> (i32, i32) {
    %c0_i32 = arith.constant 0 : i32
    %c0_i32_0 = arith.constant 0 : i32
    %c0_i32_1 = arith.constant 0 : i32
    return %c0_i32, %c0_i32_0 : i32, i32
  }
  func.func @transform_4(%arg0: i32) -> (i32, i32) {
    %c0_i32 = arith.constant 0 : i32
    %c0_i32_0 = arith.constant 0 : i32
    %c0_i32_1 = arith.constant 0 : i32
    return %c0_i32, %c0_i32_0 : i32, i32
  }
  func.func @transform_5(%arg0: i32) -> (i32, i32, i32) {
    %c0_i32 = arith.constant 0 : i32
    %c0_i32_0 = arith.constant 0 : i32
    %c0_i32_1 = arith.constant 0 : i32
    return %arg0, %c0_i32, %c0_i32_0 : i32, i32, i32
  }
  func.func @transform_6(%arg0: i32) -> (i32, i32, i32) {
    %c0_i32 = arith.constant 0 : i32
    %c0_i32_0 = arith.constant 0 : i32
    %c0_i32_1 = arith.constant 0 : i32
    return %arg0, %c0_i32, %c0_i32_0 : i32, i32, i32
  }
}

module attributes {stable_mosaic.version = 11 : i64} {
  func.func @_upsample_add_kernel(%arg0: i32, %arg1: i32, %arg2: memref<1x512x16xf32, #tpu.memory_space<vmem>>, %arg3: memref<16x64xf32, #tpu.memory_space<vmem>>, %arg4: memref<1x512x64xf32, #tpu.memory_space<vmem>>, %arg5: memref<1x512x64xf32, #tpu.memory_space<vmem>>) attributes {dimension_semantics = [#tpu.dimension_semantics<parallel>, #tpu.dimension_semantics<parallel>], iteration_bounds = array<i64: 2, 1>, scalar_prefetch = 0 : i64, scratch_operands = 0 : i64, tpu.core_type = #tpu.core_type<tc>, window_params = [{transform_indices = @transform_0, window_bounds = array<i64: 1, 512, 16>}, {pipeline_mode = #tpu.pipeline_mode<synchronous>, transform_indices = @transform_1, window_bounds = array<i64: 16, 64>}, {transform_indices = @transform_2, window_bounds = array<i64: 1, 512, 64>}, {transform_indices = @transform_3, window_bounds = array<i64: 1, 512, 64>}]} {
    %c0 = arith.constant 0 : index
    %c0_0 = arith.constant 0 : index
    %c0_1 = arith.constant 0 : index
    %0 = vector.load %arg4[%c0, %c0_0, %c0_1] : memref<1x512x64xf32, #tpu.memory_space<vmem>>, vector<1x512x64xf32>
    %1 = vector.shape_cast %0 : vector<1x512x64xf32> to vector<512x64xf32>
    %c0_2 = arith.constant 0 : index
    %c0_3 = arith.constant 0 : index
    %c0_4 = arith.constant 0 : index
    %2 = vector.load %arg2[%c0_2, %c0_3, %c0_4] : memref<1x512x16xf32, #tpu.memory_space<vmem>>, vector<1x512x16xf32>
    %3 = vector.shape_cast %2 : vector<1x512x16xf32> to vector<512x16xf32>
    %c0_5 = arith.constant 0 : index
    %c0_6 = arith.constant 0 : index
    %4 = vector.load %arg3[%c0_5, %c0_6] : memref<16x64xf32, #tpu.memory_space<vmem>>, vector<16x64xf32>
    %cst = arith.constant dense<0.000000e+00> : vector<512x64xf32>
    %5 = tpu.matmul %3, %4, %cst {dimension_numbers = #tpu.dot_dimension_numbers<[1], [0], [0], [1], [0, 0, 1, 1], [], []>} : vector<512x16xf32>, vector<16x64xf32>, vector<512x64xf32> -> vector<512x64xf32>
    %6 = arith.addf %1, %5 : vector<512x64xf32>
    %c0_7 = arith.constant 0 : index
    %c0_8 = arith.constant 0 : index
    %c0_9 = arith.constant 0 : index
    %7 = vector.load %arg5[%c0_7, %c0_8, %c0_9] : memref<1x512x64xf32, #tpu.memory_space<vmem>>, vector<1x512x64xf32>
    %8 = vector.shape_cast %7 : vector<1x512x64xf32> to vector<512x64xf32>
    %9 = vector.shape_cast %6 : vector<512x64xf32> to vector<1x512x64xf32>
    tpu.vector_store %arg5[%c0_7, %c0_8, %c0_9], %9 {strides = array<i32>} : memref<1x512x64xf32, #tpu.memory_space<vmem>>, vector<1x512x64xf32>,
    return
  }
  func.func @transform_0(%arg0: i32, %arg1: i32) -> (i32, i32, i32) {
    %c0_i32 = arith.constant 0 : i32
    %c0_i32_0 = arith.constant 0 : i32
    return %arg0, %arg1, %c0_i32 : i32, i32, i32
  }
  func.func @transform_1(%arg0: i32, %arg1: i32) -> (i32, i32) {
    %c0_i32 = arith.constant 0 : i32
    %c0_i32_0 = arith.constant 0 : i32
    %c0_i32_1 = arith.constant 0 : i32
    return %c0_i32, %c0_i32_0 : i32, i32
  }
  func.func @transform_2(%arg0: i32, %arg1: i32) -> (i32, i32, i32) {
    %c0_i32 = arith.constant 0 : i32
    %c0_i32_0 = arith.constant 0 : i32
    return %arg0, %arg1, %c0_i32 : i32, i32, i32
  }
  func.func @transform_3(%arg0: i32, %arg1: i32) -> (i32, i32, i32) {
    %c0_i32 = arith.constant 0 : i32
    %c0_i32_0 = arith.constant 0 : i32
    return %arg0, %arg1, %c0_i32 : i32, i32, i32
  }
}

</mosaic_0001>

<llo_original>
// kernel: frru_forward.5
$region0: #{frru_forward.5}
  #allocation0 [shape = 'u32[]', space=smem, size = 0x4, offset = 0x4, fixed_abs, tag = 'smem constant byte address 0x4 - core index']
  #allocation1 [shape = 'u32[72,128]{1,0:T(1,128)}', space=vmem, size = 0x9000, scoped, tag = 'internal scratch']
  %s0 = inlined_call_operand.vmem [shape: f32[2,32,256], index: 0, kind: input, shape index: {}]
  %s1 = inlined_call_operand.vmem [shape: f32[32,1], index: 1, kind: input, shape index: {}]
  %s2 = inlined_call_operand.vmem [shape: f32[32,1], index: 2, kind: input, shape index: {}]
  %s3 = inlined_call_operand.vmem [shape: f32[9,256], index: 3, kind: input, shape index: {}]
  %s4 = inlined_call_operand.vmem [shape: f32[9,32,32], index: 4, kind: input, shape index: {}]
  %s5 = inlined_call_operand.vmem [shape: f32[2,32,256], index: 5, kind: output, shape index: {0}]
  %s6 = inlined_call_operand.vmem [shape: f32[2,32,128], index: 6, kind: output, shape index: {1}]
  %7 = xla_tuple %s5, %s6
  %s8 = sld [smem:[#allocation0]]
  $region61: #{frru_forward.5} parent=0
    _
  %s10 = ssub.s32 1, %s8
  %s11 = scalar_select 0, %s10, %s8
  loop: start=0, step=1, limit=4
  $region2: #{frru_forward.5} parent=0 // loop_pre_header
    _
  $region3: #{frru_forward.5} parent=0 // loop_header
    %s13 = sphi 0, %s17
    %p14 = scmp.ge.s32.totalorder %s13, 4
    %s23 = sphi 0, %s25
    %s26 = sphi 0, %s23
    %s27 = sphi 0, %s26
    %s43 = sphi 0, %s27
    %s47 = sphi 0, %s47
    %s49 = sphi 0, %s47
    %s50 = sphi 0, %s49
    %s64 = sphi 0, %s50
    %s68 = sphi 0, %s68
    %s70 = sphi 0, %s68
    %s71 = sphi 0, %s70
    %s85 = sphi 0, %s71
    %s89 = sphi 0, %s89
    %s91 = sphi 0, %s89
    %s92 = sphi 0, %s91
    %s106 = sphi 0, %s92
    %s110 = sphi 0, %s110
    %s112 = sphi 0, %s110
    %s113 = sphi 0, %s112
    %s127 = sphi 0, %s113
    %s133 = sphi 0, %s135
    %s136 = sphi 0, %s133
    %s137 = sphi 0, %s136
    %s153 = sphi 0, %s137
    %s159 = sphi 0, %s161
    %s162 = sphi 0, %s159
    %s163 = sphi 0, %s162
    %s179 = sphi 0, %s163
  $region4: #{frru_forward.5} parent=0 // loop_header_branch
    %16 = sbr.rel (%p14) target = $region8
  $region5: #{frru_forward.5} parent=0 // loop_body
    %s18 = ssub.s32 %s13, 1
    %s19 = ssub.s32 %s13, 2
    %s20 = sadd.s32 %s13, 1
    %s21 = ssub.s32 %s13, %s20
    %p22 = scmp.eq.s32.totalorder %s21, 0
    %s24 = sadd.s32 %s23, 1
    %s25 = scalar_select %p22, %s23, %s24
    %p28 = pneg %p22
    %p29 = scmp.eq.s32.totalorder %s13, 1
    %p30 = por %p28, %p29
    %p31 = scmp.ne.s32.totalorder %s23, %s26
    %p32 = scmp.eq.s32.totalorder %s13, 0
    %p33 = por %p31, %p32
    %p34 = scmp.ne.s32.totalorder %s23, %s26
    %p35 = scmp.eq.s32.totalorder %s18, 1
    %p36 = por %p34, %p35
    %p37 = scmp.ne.s32.totalorder %s26, %s27
    %p38 = scmp.eq.s32.totalorder %s18, 0
    %p39 = por %p37, %p38
    %p40 = scmp.ne.s32.totalorder %s26, %s27
    %p41 = scmp.eq.s32.totalorder %s19, 1
    %p42 = por %p40, %p41
    %p44 = scmp.ne.s32.totalorder %s27, %s43
    %p45 = scmp.eq.s32.totalorder %s19, 0
    %p46 = por %p44, %p45
    %s48 = sadd.s32 %s47, 1
    %p51 = scmp.eq.s32.totalorder %s13, 1
    %p52 = scmp.ne.s32.totalorder %s47, %s49
    %p53 = scmp.eq.s32.totalorder %s13, 0
    %p54 = por %p52, %p53
    %p55 = scmp.ne.s32.totalorder %s47, %s49
    %p56 = scmp.eq.s32.totalorder %s18, 1
    %p57 = por %p55, %p56
    %p58 = scmp.ne.s32.totalorder %s49, %s50
    %p59 = scmp.eq.s32.totalorder %s18, 0
    %p60 = por %p58, %p59
    %p61 = scmp.ne.s32.totalorder %s49, %s50
    %p62 = scmp.eq.s32.totalorder %s19, 1
    %p63 = por %p61, %p62
    %p65 = scmp.ne.s32.totalorder %s50, %s64
    %p66 = scmp.eq.s32.totalorder %s19, 0
    %p67 = por %p65, %p66
    %s69 = sadd.s32 %s68, 1
    %p72 = scmp.eq.s32.totalorder %s13, 1
    %p73 = scmp.ne.s32.totalorder %s68, %s70
    %p74 = scmp.eq.s32.totalorder %s13, 0
    %p75 = por %p73, %p74
    %p76 = scmp.ne.s32.totalorder %s68, %s70
    %p77 = scmp.eq.s32.totalorder %s18, 1
    %p78 = por %p76, %p77
    %p79 = scmp.ne.s32.totalorder %s70, %s71
    %p80 = scmp.eq.s32.totalorder %s18, 0
    %p81 = por %p79, %p80
    %p82 = scmp.ne.s32.totalorder %s70, %s71
    %p83 = scmp.eq.s32.totalorder %s19, 1
    %p84 = por %p82, %p83
    %p86 = scmp.ne.s32.totalorder %s71, %s85
    %p87 = scmp.eq.s32.totalorder %s19, 0
    %p88 = por %p86, %p87
    %s90 = sadd.s32 %s89, 1
    %p93 = scmp.eq.s32.totalorder %s13, 1
    %p94 = scmp.ne.s32.totalorder %s89, %s91
    %p95 = scmp.eq.s32.totalorder %s13, 0
    %p96 = por %p94, %p95
    %p97 = scmp.ne.s32.totalorder %s89, %s91
    %p98 = scmp.eq.s32.totalorder %s18, 1
    %p99 = por %p97, %p98
    %p100 = scmp.ne.s32.totalorder %s91, %s92
    %p101 = scmp.eq.s32.totalorder %s18, 0
    %p102 = por %p100, %p101
    %p103 = scmp.ne.s32.totalorder %s91, %s92
    %p104 = scmp.eq.s32.totalorder %s19, 1
    %p105 = por %p103, %p104
    %p107 = scmp.ne.s32.totalorder %s92, %s106
    %p108 = scmp.eq.s32.totalorder %s19, 0
    %p109 = por %p107, %p108
    %s111 = sadd.s32 %s110, 1
    %p114 = scmp.eq.s32.totalorder %s13, 1
    %p115 = scmp.ne.s32.totalorder %s110, %s112
    %p116 = scmp.eq.s32.totalorder %s13, 0
    %p117 = por %p115, %p116
    %p118 = scmp.ne.s32.totalorder %s110, %s112
    %p119 = scmp.eq.s32.totalorder %s18, 1
    %p120 = por %p118, %p119
    %p121 = scmp.ne.s32.totalorder %s112, %s113
    %p122 = scmp.eq.s32.totalorder %s18, 0
    %p123 = por %p121, %p122
    %p124 = scmp.ne.s32.totalorder %s112, %s113
    %p125 = scmp.eq.s32.totalorder %s19, 1
    %p126 = por %p124, %p125
    %p128 = scmp.ne.s32.totalorder %s113, %s127
    %p129 = scmp.eq.s32.totalorder %s19, 0
    %p130 = por %p128, %p129
    %s131 = ssub.s32 %s13, %s20
    %p132 = scmp.eq.s32.totalorder %s131, 0
    %s134 = sadd.s32 %s133, 1
    %s135 = scalar_select %p132, %s133, %s134
    %p138 = pneg %p132
    %p139 = scmp.eq.s32.totalorder %s13, 1
    %p140 = por %p138, %p139
    %p141 = scmp.ne.s32.totalorder %s133, %s136
    %p142 = scmp.eq.s32.totalorder %s13, 0
    %p143 = por %p141, %p142
    %p144 = scmp.ne.s32.totalorder %s133, %s136
    %p145 = scmp.eq.s32.totalorder %s18, 1
    %p146 = por %p144, %p145
    %p147 = scmp.ne.s32.totalorder %s136, %s137
    %p148 = scmp.eq.s32.totalorder %s18, 0
    %p149 = por %p147, %p148
    %p150 = scmp.ne.s32.totalorder %s136, %s137
    %p151 = scmp.eq.s32.totalorder %s19, 1
    %p152 = por %p150, %p151
    %p154 = scmp.ne.s32.totalorder %s137, %s153
    %p155 = scmp.eq.s32.totalorder %s19, 0
    %p156 = por %p154, %p155
    %s157 = ssub.s32 %s13, %s20
    %p158 = scmp.eq.s32.totalorder %s157, 0
    %s160 = sadd.s32 %s159, 1
    %s161 = scalar_select %p158, %s159, %s160
    %p164 = pneg %p158
    %p165 = scmp.eq.s32.totalorder %s13, 1
    %p166 = por %p164, %p165
    %p167 = scmp.ne.s32.totalorder %s159, %s162
    %p168 = scmp.eq.s32.totalorder %s13, 0
    %p169 = por %p167, %p168
    %p170 = scmp.ne.s32.totalorder %s159, %s162
    %p171 = scmp.eq.s32.totalorder %s18, 1
    %p172 = por %p170, %p171
    %p173 = scmp.ne.s32.totalorder %s162, %s163
    %p174 = scmp.eq.s32.totalorder %s18, 0
    %p175 = por %p173, %p174
    %p176 = scmp.ne.s32.totalorder %s162, %s163
    %p177 = scmp.eq.s32.totalorder %s19, 1
    %p178 = por %p176, %p177
    %p180 = scmp.ne.s32.totalorder %s163, %s179
    %p181 = scmp.eq.s32.totalorder %s19, 0
    %p182 = por %p180, %p181
    %p183 = scmp.le.s32.totalorder 1, %s13
    %p184 = scmp.lt.s32.totalorder %s13, 3
    %p185 = pnand %p183, %p184
    %p186 = pneg %p185
    // Predicated region
    $region9: #{frru_forward.5} parent=5 // pred_check
      _
    $region10: #{frru_forward.5} parent=5 // pred_check_branch
      %188 = sbr.rel (%p185) target = $region12
    $region11: #{frru_forward.5} parent=5 // pred_region
      %s189 = ssub.s32 %s13, 1
      // Predicated region
      $region13: #{frru_forward.5} parent=11 // pred_check
        %p190 = pneg %p60
      $region14: #{frru_forward.5} parent=11 // pred_check_branch
        %192 = sbr.rel (%p190) target = $region16
      $region15: #{frru_forward.5} parent=11 // pred_region
        _
      $region16: #{frru_forward.5} parent=11 // pred_fallthru
        _
      // Predicated region
      $region17: #{frru_forward.5} parent=11 // pred_check
        %p193 = pneg %p81
      $region18: #{frru_forward.5} parent=11 // pred_check_branch
        %195 = sbr.rel (%p193) target = $region20
      $region19: #{frru_forward.5} parent=11 // pred_region
        _
      $region20: #{frru_forward.5} parent=11 // pred_fallthru
        _
      // Predicated region
      $region21: #{frru_forward.5} parent=11 // pred_check
        %p196 = pneg %p102
      $region22: #{frru_forward.5} parent=11 // pred_check_branch
        %198 = sbr.rel (%p196) target = $region24
      $region23: #{frru_forward.5} parent=11 // pred_region
        _
      $region24: #{frru_forward.5} parent=11 // pred_fallthru
        _
      // Predicated region
      $region25: #{frru_forward.5} parent=11 // pred_check
        %p199 = pneg %p123
      $region26: #{frru_forward.5} parent=11 // pred_check_branch
        %201 = sbr.rel (%p199) target = $region28
      $region27: #{frru_forward.5} parent=11 // pred_region
        _
      $region28: #{frru_forward.5} parent=11 // pred_fallthru
        _
    $region12: #{frru_forward.5} parent=5 // pred_fallthru
      _
    %p202 = scmp.lt.s32.totalorder %s13, 2
    // Predicated region
    $region29: #{frru_forward.5} parent=5 // pred_check
      %p203 = pneg %p202
    $region30: #{frru_forward.5} parent=5 // pred_check_branch
      %205 = sbr.rel (%p203) target = $region32
    $region31: #{frru_forward.5} parent=5 // pred_region
      // Predicated region
      $region33: #{frru_forward.5} parent=31 // pred_check
        %p206 = pneg %p33
      $region34: #{frru_forward.5} parent=31 // pred_check_branch
        %208 = sbr.rel (%p206) target = $region36
      $region35: #{frru_forward.5} parent=31 // pred_region
        %p209 = scmp.lt.s32.totalorder %s13, 1
        %s210 = scalar_select %p209, %s13, 1
        %s211 = smul.addr %s210, 8
        %s212 = smul.addr %s211, 8
        %s213 = scalar_lea.vmem %s0, %s212
      $region36: #{frru_forward.5} parent=31 // pred_fallthru
        _
    $region32: #{frru_forward.5} parent=5 // pred_fallthru
      _
    %p214 = scmp.le.s32.totalorder 1, %s13
    %p215 = scmp.lt.s32.totalorder %s13, 3
    %p216 = pnand %p214, %p215
    %p217 = pneg %p216
    // Predicated region
    $region37: #{frru_forward.5} parent=5 // pred_check
      _
    $region38: #{frru_forward.5} parent=5 // pred_check_branch
      %219 = sbr.rel (%p216) target = $region40
    $region39: #{frru_forward.5} parent=5 // pred_region
      %s220 = ssub.s32 %s13, 1
      %p221 = scmp.lt.s32.totalorder %s18, 1
      %s222 = scalar_select %p221, %s18, 1
      %s223 = smul.addr %s222, 8
      %s224 = smul.addr %s223, 8
      %s225 = scalar_lea.vmem %s0, %s224
      %p226 = pneg %p39
      %p227 = pneg %p36
      %p228 = pneg %p60
      %p229 = pneg %p57
      %p230 = pneg %p81
      %p231 = pneg %p78
      %p232 = pneg %p102
      %p233 = pneg %p99
      %p234 = pneg %p123
      %p235 = pneg %p120
      %p236 = pneg %p149
      %p237 = pneg %p146
      %p238 = scmp.lt.s32.totalorder %s18, 1
      %s239 = scalar_select %p238, %s18, 1
      %s240 = smul.addr %s239, 8
      %s241 = smul.addr %s240, 8
      %s242 = scalar_lea.vmem %s5, %s241
      %p243 = pneg %p175
      %p244 = pneg %p172
      %p245 = scmp.lt.s32.totalorder %s18, 1
      %s246 = scalar_select %p245, %s18, 1
      %s247 = smul.addr %s246, 4
      %s248 = smul.addr %s247, 8
      %s249 = scalar_lea.vmem %s6, %s248
      %p250 = scmp.lt.s32.totalorder %s18, 1
      %s251 = scalar_select %p250, %s18, 1
      %s252 = smul.addr %s251, 8
      %s253 = smul.addr %s252, 8
      %s254 = scalar_lea.vmem %s0, %s253
      %p255 = scmp.lt.s32.totalorder %s18, 1
      %s256 = scalar_select %p255, %s18, 1
      %s257 = smul.addr %s256, 8
      %s258 = smul.addr %s257, 8
      %s259 = scalar_lea.vmem %s5, %s258
      %p260 = scmp.lt.s32.totalorder %s18, 1
      %s261 = scalar_select %p260, %s18, 1
      %s262 = smul.addr %s261, 4
      %s263 = smul.addr %s262, 8
      %s264 = scalar_lea.vmem %s6, %s263
      %v265 = vld [vmem:[%s254] sm:$0xff]
      %v266 = vld [vmem:[%s254 + $0x8] sm:$0xff]
      %v267 = vld [vmem:[%s254 + $0x10] sm:$0xff]
      %v268 = vld [vmem:[%s254 + $0x18] sm:$0xff]
      %v269 = vld [vmem:[%s254 + $0x20] sm:$0xff]
      %v270 = vld [vmem:[%s254 + $0x28] sm:$0xff]
      %v271 = vld [vmem:[%s254 + $0x30] sm:$0xff]
      %v272 = vld [vmem:[%s254 + $0x38] sm:$0xff]
      %v273 = vld [vmem:[%s1] sm:$0xff]
      %v274 = vld [vmem:[%s1 + $0x8] sm:$0xff]
      %v275 = vld [vmem:[%s1 + $0x10] sm:$0xff]
      %v276 = vld [vmem:[%s1 + $0x18] sm:$0xff]
      %278 = vset.pattern.permute.xlu0 0
      %279 = vperm.xlu0 %278, %v273
      %v280 = vpop.permute.xlu0 %279
      %283 = vset.pattern.permute.xlu0 0
      %284 = vperm.xlu0 %283, %v274
      %v285 = vpop.permute.xlu0 %284
      %288 = vset.pattern.permute.xlu0 0
      %289 = vperm.xlu0 %288, %v275
      %v290 = vpop.permute.xlu0 %289
      %293 = vset.pattern.permute.xlu0 0
      %294 = vperm.xlu0 %293, %v276
      %v295 = vpop.permute.xlu0 %294
      %v297 = vmul.f32 %v265, %v280
      %v298 = vmul.f32 %v266, %v280
      %v299 = vmul.f32 %v267, %v285
      %v300 = vmul.f32 %v268, %v285
      %v301 = vmul.f32 %v269, %v290
      %v302 = vmul.f32 %v270, %v290
      %v303 = vmul.f32 %v271, %v295
      %v304 = vmul.f32 %v272, %v295
      %v305 = vld [vmem:[%s2] sm:$0xff]
      %v306 = vld [vmem:[%s2 + $0x8] sm:$0xff]
      %v307 = vld [vmem:[%s2 + $0x10] sm:$0xff]
      %v308 = vld [vmem:[%s2 + $0x18] sm:$0xff]
      %310 = vset.pattern.permute.xlu0 0
      %311 = vperm.xlu0 %310, %v305
      %v312 = vpop.permute.xlu0 %311
      %315 = vset.pattern.permute.xlu0 0
      %316 = vperm.xlu0 %315, %v306
      %v317 = vpop.permute.xlu0 %316
      %320 = vset.pattern.permute.xlu0 0
      %321 = vperm.xlu0 %320, %v307
      %v322 = vpop.permute.xlu0 %321
      %325 = vset.pattern.permute.xlu0 0
      %326 = vperm.xlu0 %325, %v308
      %v327 = vpop.permute.xlu0 %326
      %v329 = vadd.f32 %v297, %v312
      %v330 = vadd.f32 %v298, %v312
      %v331 = vadd.f32 %v299, %v317
      %v332 = vadd.f32 %v300, %v317
      %v333 = vadd.f32 %v301, %v322
      %v334 = vadd.f32 %v302, %v322
      %v335 = vadd.f32 %v303, %v327
      %v336 = vadd.f32 %v304, %v327
      %v337 = vmax.f32 %v329, 0.0
      %v338 = vmax.f32 %v330, 0.0
      %v339 = vmax.f32 %v331, 0.0
      %v340 = vmax.f32 %v332, 0.0
      %v341 = vmax.f32 %v333, 0.0
      %v342 = vmax.f32 %v334, 0.0
      %v343 = vmax.f32 %v335, 0.0
      %v344 = vmax.f32 %v336, 0.0
      %v345 = vld [vmem:[%s3] sm:$0xff]
      %v346 = vld [vmem:[%s3 + $0x8] sm:$0xff]
      %v347 = vld [vmem:[%s3 + $0x10] sm:$0x1]
      %v348 = vld [vmem:[%s3 + $0x18] sm:$0x1]
      %349 = vrot.lane.b32.xlu0 %v337, 17
      %v350 = vpop.permute.xlu0 %349
      %351 = vrot.lane.b32.xlu0 %v339, 17
      %v352 = vpop.permute.xlu0 %351
      %353 = vrot.lane.b32.xlu0 %v341, 17
      %v354 = vpop.permute.xlu0 %353
      %355 = vrot.lane.b32.xlu0 %v343, 17
      %v356 = vpop.permute.xlu0 %355
      %357 = vrot.lane.b32.xlu0 %v338, 17
      %v358 = vpop.permute.xlu0 %357
      %359 = vrot.lane.b32.xlu0 %v340, 17
      %v360 = vpop.permute.xlu0 %359
      %361 = vrot.lane.b32.xlu0 %v342, 17
      %v362 = vpop.permute.xlu0 %361
      %363 = vrot.lane.b32.xlu0 %v344, 17
      %v364 = vpop.permute.xlu0 %363
      %v365 = vlaneseq
      %v366 = vand.u32 %v365, 127
      %vm367 = vcmp.lt.s32.totalorder %v366, 17
      %v368 = vsel %vm367, %v350, %v358
      %v369 = vsel %vm367, %v352, %v360
      %v370 = vsel %vm367, %v354, %v362
      %v371 = vsel %vm367, %v356, %v364
      %v372 = vsel %vm367, %v358, %v350
      %v373 = vsel %vm367, %v360, %v352
      %v374 = vsel %vm367, %v362, %v354
      %v375 = vsel %vm367, %v364, %v356
      %v376 = vperm.slane %v345, 0
      %v377 = vperm.slane %v346, 0
      %v378 = vmul.f32 %v372, %v376
      %v379 = vmul.f32 %v368, %v377
      %v380 = vmul.f32 %v373, %v376
      %v381 = vmul.f32 %v369, %v377
      %v382 = vmul.f32 %v374, %v376
      %v383 = vmul.f32 %v370, %v377
      %v384 = vmul.f32 %v375, %v376
      %v385 = vmul.f32 %v371, %v377
      %v386 = vld [vmem:[%s4] sm:$0xff]
      %v387 = vld [vmem:[%s4 + $0x8] sm:$0xff]
      %v388 = vld [vmem:[%s4 + $0x10] sm:$0xff]
      %v389 = vld [vmem:[%s4 + $0x18] sm:$0xff]
      %390 = vrot.lane.b32.xlu0 %v337, 16
      %v391 = vpop.permute.xlu0 %390
      %392 = vrot.lane.b32.xlu0 %v339, 16
      %v393 = vpop.permute.xlu0 %392
      %394 = vrot.lane.b32.xlu0 %v341, 16
      %v395 = vpop.permute.xlu0 %394
      %396 = vrot.lane.b32.xlu0 %v343, 16
      %v397 = vpop.permute.xlu0 %396
      %398 = vrot.lane.b32.xlu0 %v338, 16
      %v399 = vpop.permute.xlu0 %398
      %400 = vrot.lane.b32.xlu0 %v340, 16
      %v401 = vpop.permute.xlu0 %400
      %402 = vrot.lane.b32.xlu0 %v342, 16
      %v403 = vpop.permute.xlu0 %402
      %404 = vrot.lane.b32.xlu0 %v344, 16
      %v405 = vpop.permute.xlu0 %404
      %vm406 = vcmp.lt.s32.totalorder %v366, 16
      %v407 = vsel %vm406, %v391, %v399
      %v408 = vsel %vm406, %v393, %v401
      %v409 = vsel %vm406, %v395, %v403
      %v410 = vsel %vm406, %v397, %v405
      %v411 = vsel %vm406, %v399, %v391
      %v412 = vsel %vm406, %v401, %v393
      %v413 = vsel %vm406, %v403, %v395
      %v414 = vsel %vm406, %v405, %v397
      %v415 = vperm.slane %v345, 1
      %v416 = vperm.slane %v346, 1
      %v417 = vmul.f32 %v411, %v415
      %v418 = vmul.f32 %v407, %v416
      %v419 = vmul.f32 %v412, %v415
      %v420 = vmul.f32 %v408, %v416
      %v421 = vmul.f32 %v413, %v415
      %v422 = vmul.f32 %v409, %v416
      %v423 = vmul.f32 %v414, %v415
      %v424 = vmul.f32 %v410, %v416
      %s425 = scalar_lea.vmem %s4, 32
      %v426 = vld [vmem:[%s425] sm:$0xff]
      %v427 = vld [vmem:[%s425 + $0x8] sm:$0xff]
      %v428 = vld [vmem:[%s425 + $0x10] sm:$0xff]
      %v429 = vld [vmem:[%s425 + $0x18] sm:$0xff]
      %vm430 = vcmask 261120
      %v432 = vsel %vm430, %v426, 0
      %v435 = vsel %vm430, %v427, 0
      %v438 = vsel %vm430, %v428, 0
      %v441 = vsel %vm430, %v429, 0
      %443 = vmatpush.msra.mxu0 0.0
      %444 = vmatpush.msra.mxu0 0.0
      %445 = vmatpush.msra.mxu0 0.0
      %446 = vmatpush.msra.mxu0 0.0
      %447 = vmatpush.msra.mxu0 0.0
      %448 = vmatpush.msra.mxu0 0.0
      %449 = vmatpush.msra.mxu0 0.0
      %450 = vmatpush.msra.mxu0 0.0
      %451 = vmatpush.msra.mxu0 0.0
      %452 = vmatpush.msra.mxu0 0.0
      %453 = vmatpush.msra.mxu0 0.0
      %454 = vmatpush.msra.mxu0 0.0
      %455 = vmatpush.msra.mxu0 %v423
      %456 = vmatpush.msra.mxu0 %v421
      %457 = vmatpush.msra.mxu0 %v419
      %458 = vmatpush.msra.mxu0 %v417
      %459 = vmatmul.f32.gmra.mxu0 %v432
      %v460 = vpop.f32.mrf.mxu0
      %v461 = vadd.f32 0.0, %v460
      %462 = vmatmul.f32.gmra.mxu0 %v435
      %v463 = vpop.f32.mrf.mxu0
      %v464 = vadd.f32 0.0, %v463
      %465 = vmatmul.f32.gmra.mxu0 %v438
      %v466 = vpop.f32.mrf.mxu0
      %v467 = vadd.f32 0.0, %v466
      %468 = vmatmul.f32.gmra.mxu0 %v441
      %v469 = vpop.f32.mrf.mxu0
      %v470 = vadd.f32 0.0, %v469
      %471 = vdwg.mxu0
      %472 = vmatpush.msra.mxu0 0.0
      %473 = vmatpush.msra.mxu0 0.0
      %474 = vmatpush.msra.mxu0 0.0
      %475 = vmatpush.msra.mxu0 0.0
      %476 = vmatpush.msra.mxu0 0.0
      %477 = vmatpush.msra.mxu0 0.0
      %478 = vmatpush.msra.mxu0 0.0
      %479 = vmatpush.msra.mxu0 0.0
      %480 = vmatpush.msra.mxu0 0.0
      %481 = vmatpush.msra.mxu0 0.0
      %482 = vmatpush.msra.mxu0 0.0
      %483 = vmatpush.msra.mxu0 0.0
      %484 = vmatpush.msra.mxu0 %v424
      %485 = vmatpush.msra.mxu0 %v422
      %486 = vmatpush.msra.mxu0 %v420
      %487 = vmatpush.msra.mxu0 %v418
      %488 = vmatmul.f32.gmra.mxu0 %v432
      %v489 = vpop.f32.mrf.mxu0
      %v490 = vadd.f32 0.0, %v489
      %491 = vmatmul.f32.gmra.mxu0 %v435
      %v492 = vpop.f32.mrf.mxu0
      %v493 = vadd.f32 0.0, %v492
      %494 = vmatmul.f32.gmra.mxu0 %v438
      %v495 = vpop.f32.mrf.mxu0
      %v496 = vadd.f32 0.0, %v495
      %497 = vmatmul.f32.gmra.mxu0 %v441
      %v498 = vpop.f32.mrf.mxu0
      %v499 = vadd.f32 0.0, %v498
      %500 = vdwg.mxu0
      %v502 = vsel %vm430, %v386, 0
      %v505 = vsel %vm430, %v387, 0
      %v508 = vsel %vm430, %v388, 0
      %v511 = vsel %vm430, %v389, 0
      %513 = vmatpush.msra.mxu0 0.0
      %514 = vmatpush.msra.mxu0 0.0
      %515 = vmatpush.msra.mxu0 0.0
      %516 = vmatpush.msra.mxu0 0.0
      %517 = vmatpush.msra.mxu0 0.0
      %518 = vmatpush.msra.mxu0 0.0
      %519 = vmatpush.msra.mxu0 0.0
      %520 = vmatpush.msra.mxu0 0.0
      %521 = vmatpush.msra.mxu0 0.0
      %522 = vmatpush.msra.mxu0 0.0
      %523 = vmatpush.msra.mxu0 0.0
      %524 = vmatpush.msra.mxu0 0.0
      %525 = vmatpush.msra.mxu0 %v384
      %526 = vmatpush.msra.mxu0 %v382
      %527 = vmatpush.msra.mxu0 %v380
      %528 = vmatpush.msra.mxu0 %v378
      %529 = vmatmul.f32.gmra.mxu0 %v502
      %v530 = vpop.f32.mrf.mxu0
      %v531 = vadd.f32 %v461, %v530
      %532 = vmatmul.f32.gmra.mxu0 %v505
      %v533 = vpop.f32.mrf.mxu0
      %v534 = vadd.f32 %v464, %v533
      %535 = vmatmul.f32.gmra.mxu0 %v508
      %v536 = vpop.f32.mrf.mxu0
      %v537 = vadd.f32 %v467, %v536
      %538 = vmatmul.f32.gmra.mxu0 %v511
      %v539 = vpop.f32.mrf.mxu0
      %v540 = vadd.f32 %v470, %v539
      %541 = vdwg.mxu0
      %542 = vmatpush.msra.mxu0 0.0
      %543 = vmatpush.msra.mxu0 0.0
      %544 = vmatpush.msra.mxu0 0.0
      %545 = vmatpush.msra.mxu0 0.0
      %546 = vmatpush.msra.mxu0 0.0
      %547 = vmatpush.msra.mxu0 0.0
      %548 = vmatpush.msra.mxu0 0.0
      %549 = vmatpush.msra.mxu0 0.0
      %550 = vmatpush.msra.mxu0 0.0
      %551 = vmatpush.msra.mxu0 0.0
      %552 = vmatpush.msra.mxu0 0.0
      %553 = vmatpush.msra.mxu0 0.0
      %554 = vmatpush.msra.mxu0 %v385
      %555 = vmatpush.msra.mxu0 %v383
      %556 = vmatpush.msra.mxu0 %v381
      %557 = vmatpush.msra.mxu0 %v379
      %558 = vmatmul.f32.gmra.mxu0 %v502
      %v559 = vpop.f32.mrf.mxu0
      %v560 = vadd.f32 %v490, %v559
      %561 = vmatmul.f32.gmra.mxu0 %v505
      %v562 = vpop.f32.mrf.mxu0
      %v563 = vadd.f32 %v493, %v562
      %564 = vmatmul.f32.gmra.mxu0 %v508
      %v565 = vpop.f32.mrf.mxu0
      %v566 = vadd.f32 %v496, %v565
      %567 = vmatmul.f32.gmra.mxu0 %v511
      %v568 = vpop.f32.mrf.mxu0
      %v569 = vadd.f32 %v499, %v568
      %570 = vdwg.mxu0
      %571 = vrot.lane.b32.xlu0 %v337, 15
      %v572 = vpop.permute.xlu0 %571
      %573 = vrot.lane.b32.xlu0 %v339, 15
      %v574 = vpop.permute.xlu0 %573
      %575 = vrot.lane.b32.xlu0 %v341, 15
      %v576 = vpop.permute.xlu0 %575
      %577 = vrot.lane.b32.xlu0 %v343, 15
      %v578 = vpop.permute.xlu0 %577
      %579 = vrot.lane.b32.xlu0 %v338, 15
      %v580 = vpop.permute.xlu0 %579
      %581 = vrot.lane.b32.xlu0 %v340, 15
      %v582 = vpop.permute.xlu0 %581
      %583 = vrot.lane.b32.xlu0 %v342, 15
      %v584 = vpop.permute.xlu0 %583
      %585 = vrot.lane.b32.xlu0 %v344, 15
      %v586 = vpop.permute.xlu0 %585
      %vm587 = vcmp.lt.s32.totalorder %v366, 15
      %v588 = vsel %vm587, %v572, %v580
      %v589 = vsel %vm587, %v574, %v582
      %v590 = vsel %vm587, %v576, %v584
      %v591 = vsel %vm587, %v578, %v586
      %v592 = vsel %vm587, %v580, %v572
      %v593 = vsel %vm587, %v582, %v574
      %v594 = vsel %vm587, %v584, %v576
      %v595 = vsel %vm587, %v586, %v578
      %v596 = vperm.slane %v345, 2
      %v597 = vperm.slane %v346, 2
      %v598 = vmul.f32 %v592, %v596
      %v599 = vmul.f32 %v588, %v597
      %v600 = vmul.f32 %v593, %v596
      %v601 = vmul.f32 %v589, %v597
      %v602 = vmul.f32 %v594, %v596
      %v603 = vmul.f32 %v590, %v597
      %v604 = vmul.f32 %v595, %v596
      %v605 = vmul.f32 %v591, %v597
      %s606 = scalar_lea.vmem %s4, 64
      %v607 = vld [vmem:[%s606] sm:$0xff]
      %v608 = vld [vmem:[%s606 + $0x8] sm:$0xff]
      %v609 = vld [vmem:[%s606 + $0x10] sm:$0xff]
      %v610 = vld [vmem:[%s606 + $0x18] sm:$0xff]
      %v612 = vsel %vm430, %v607, 0
      %v615 = vsel %vm430, %v608, 0
      %v618 = vsel %vm430, %v609, 0
      %v621 = vsel %vm430, %v610, 0
      %623 = vmatpush.msra.mxu0 0.0
      %624 = vmatpush.msra.mxu0 0.0
      %625 = vmatpush.msra.mxu0 0.0
      %626 = vmatpush.msra.mxu0 0.0
      %627 = vmatpush.msra.mxu0 0.0
      %628 = vmatpush.msra.mxu0 0.0
      %629 = vmatpush.msra.mxu0 0.0
      %630 = vmatpush.msra.mxu0 0.0
      %631 = vmatpush.msra.mxu0 0.0
      %632 = vmatpush.msra.mxu0 0.0
      %633 = vmatpush.msra.mxu0 0.0
      %634 = vmatpush.msra.mxu0 0.0
      %635 = vmatpush.msra.mxu0 %v604
      %636 = vmatpush.msra.mxu0 %v602
      %637 = vmatpush.msra.mxu0 %v600
      %638 = vmatpush.msra.mxu0 %v598
      %639 = vmatmul.f32.gmra.mxu0 %v612
      %v640 = vpop.f32.mrf.mxu0
      %v641 = vadd.f32 0.0, %v640
      %642 = vmatmul.f32.gmra.mxu0 %v615
      %v643 = vpop.f32.mrf.mxu0
      %v644 = vadd.f32 0.0, %v643
      %645 = vmatmul.f32.gmra.mxu0 %v618
      %v646 = vpop.f32.mrf.mxu0
      %v647 = vadd.f32 0.0, %v646
      %648 = vmatmul.f32.gmra.mxu0 %v621
      %v649 = vpop.f32.mrf.mxu0
      %v650 = vadd.f32 0.0, %v649
      %651 = vdwg.mxu0
      %652 = vmatpush.msra.mxu0 0.0
      %653 = vmatpush.msra.mxu0 0.0
      %654 = vmatpush.msra.mxu0 0.0
      %655 = vmatpush.msra.mxu0 0.0
      %656 = vmatpush.msra.mxu0 0.0
      %657 = vmatpush.msra.mxu0 0.0
      %658 = vmatpush.msra.mxu0 0.0
      %659 = vmatpush.msra.mxu0 0.0
      %660 = vmatpush.msra.mxu0 0.0
      %661 = vmatpush.msra.mxu0 0.0
      %662 = vmatpush.msra.mxu0 0.0
      %663 = vmatpush.msra.mxu0 0.0
      %664 = vmatpush.msra.mxu0 %v605
      %665 = vmatpush.msra.mxu0 %v603
      %666 = vmatpush.msra.mxu0 %v601
      %667 = vmatpush.msra.mxu0 %v599
      %668 = vmatmul.f32.gmra.mxu0 %v612
      %v669 = vpop.f32.mrf.mxu0
      %v670 = vadd.f32 0.0, %v669
      %671 = vmatmul.f32.gmra.mxu0 %v615
      %v672 = vpop.f32.mrf.mxu0
      %v673 = vadd.f32 0.0, %v672
      %674 = vmatmul.f32.gmra.mxu0 %v618
      %v675 = vpop.f32.mrf.mxu0
      %v676 = vadd.f32 0.0, %v675
      %677 = vmatmul.f32.gmra.mxu0 %v621
      %v678 = vpop.f32.mrf.mxu0
      %v679 = vadd.f32 0.0, %v678
      %680 = vdwg.mxu0
      %v681 = vadd.f32 %v531, %v641
      %v682 = vadd.f32 %v560, %v670
      %v683 = vadd.f32 %v534, %v644
      %v684 = vadd.f32 %v563, %v673
      %v685 = vadd.f32 %v537, %v647
      %v686 = vadd.f32 %v566, %v676
      %v687 = vadd.f32 %v540, %v650
      %v688 = vadd.f32 %v569, %v679
      %689 = vrot.lane.b32.xlu0 %v337, 1
      %v690 = vpop.permute.xlu0 %689
      %691 = vrot.lane.b32.xlu0 %v339, 1
      %v692 = vpop.permute.xlu0 %691
      %693 = vrot.lane.b32.xlu0 %v341, 1
      %v694 = vpop.permute.xlu0 %693
      %695 = vrot.lane.b32.xlu0 %v343, 1
      %v696 = vpop.permute.xlu0 %695
      %697 = vrot.lane.b32.xlu0 %v338, 1
      %v698 = vpop.permute.xlu0 %697
      %699 = vrot.lane.b32.xlu0 %v340, 1
      %v700 = vpop.permute.xlu0 %699
      %701 = vrot.lane.b32.xlu0 %v342, 1
      %v702 = vpop.permute.xlu0 %701
      %703 = vrot.lane.b32.xlu0 %v344, 1
      %v704 = vpop.permute.xlu0 %703
      %vm705 = vcmp.lt.s32.totalorder %v366, 1
      %v706 = vsel %vm705, %v690, %v698
      %v707 = vsel %vm705, %v692, %v700
      %v708 = vsel %vm705, %v694, %v702
      %v709 = vsel %vm705, %v696, %v704
      %v710 = vsel %vm705, %v698, %v690
      %v711 = vsel %vm705, %v700, %v692
      %v712 = vsel %vm705, %v702, %v694
      %v713 = vsel %vm705, %v704, %v696
      %v714 = vperm.slane %v345, 3
      %v715 = vperm.slane %v346, 3
      %v716 = vmul.f32 %v710, %v714
      %v717 = vmul.f32 %v706, %v715
      %v718 = vmul.f32 %v711, %v714
      %v719 = vmul.f32 %v707, %v715
      %v720 = vmul.f32 %v712, %v714
      %v721 = vmul.f32 %v708, %v715
      %v722 = vmul.f32 %v713, %v714
      %v723 = vmul.f32 %v709, %v715
      %s724 = scalar_lea.vmem %s4, 96
      %v725 = vld [vmem:[%s724] sm:$0xff]
      %v726 = vld [vmem:[%s724 + $0x8] sm:$0xff]
      %v727 = vld [vmem:[%s724 + $0x10] sm:$0xff]
      %v728 = vld [vmem:[%s724 + $0x18] sm:$0xff]
      %v730 = vsel %vm430, %v725, 0
      %v733 = vsel %vm430, %v726, 0
      %v736 = vsel %vm430, %v727, 0
      %v739 = vsel %vm430, %v728, 0
      %741 = vmatpush.msra.mxu0 0.0
      %742 = vmatpush.msra.mxu0 0.0
      %743 = vmatpush.msra.mxu0 0.0
      %744 = vmatpush.msra.mxu0 0.0
      %745 = vmatpush.msra.mxu0 0.0
      %746 = vmatpush.msra.mxu0 0.0
      %747 = vmatpush.msra.mxu0 0.0
      %748 = vmatpush.msra.mxu0 0.0
      %749 = vmatpush.msra.mxu0 0.0
      %750 = vmatpush.msra.mxu0 0.0
      %751 = vmatpush.msra.mxu0 0.0
      %752 = vmatpush.msra.mxu0 0.0
      %753 = vmatpush.msra.mxu0 %v722
      %754 = vmatpush.msra.mxu0 %v720
      %755 = vmatpush.msra.mxu0 %v718
      %756 = vmatpush.msra.mxu0 %v716
      %757 = vmatmul.f32.gmra.mxu0 %v730
      %v758 = vpop.f32.mrf.mxu0
      %v759 = vadd.f32 0.0, %v758
      %760 = vmatmul.f32.gmra.mxu0 %v733
      %v761 = vpop.f32.mrf.mxu0
      %v762 = vadd.f32 0.0, %v761
      %763 = vmatmul.f32.gmra.mxu0 %v736
      %v764 = vpop.f32.mrf.mxu0
      %v765 = vadd.f32 0.0, %v764
      %766 = vmatmul.f32.gmra.mxu0 %v739
      %v767 = vpop.f32.mrf.mxu0
      %v768 = vadd.f32 0.0, %v767
      %769 = vdwg.mxu0
      %770 = vmatpush.msra.mxu0 0.0
      %771 = vmatpush.msra.mxu0 0.0
      %772 = vmatpush.msra.mxu0 0.0
      %773 = vmatpush.msra.mxu0 0.0
      %774 = vmatpush.msra.mxu0 0.0
      %775 = vmatpush.msra.mxu0 0.0
      %776 = vmatpush.msra.mxu0 0.0
      %777 = vmatpush.msra.mxu0 0.0
      %778 = vmatpush.msra.mxu0 0.0
      %779 = vmatpush.msra.mxu0 0.0
      %780 = vmatpush.msra.mxu0 0.0
      %781 = vmatpush.msra.mxu0 0.0
      %782 = vmatpush.msra.mxu0 %v723
      %783 = vmatpush.msra.mxu0 %v721
      %784 = vmatpush.msra.mxu0 %v719
      %785 = vmatpush.msra.mxu0 %v717
      %786 = vmatmul.f32.gmra.mxu0 %v730
      %v787 = vpop.f32.mrf.mxu0
      %v788 = vadd.f32 0.0, %v787
      %789 = vmatmul.f32.gmra.mxu0 %v733
      %v790 = vpop.f32.mrf.mxu0
      %v791 = vadd.f32 0.0, %v790
      %792 = vmatmul.f32.gmra.mxu0 %v736
      %v793 = vpop.f32.mrf.mxu0
      %v794 = vadd.f32 0.0, %v793
      %795 = vmatmul.f32.gmra.mxu0 %v739
      %v796 = vpop.f32.mrf.mxu0
      %v797 = vadd.f32 0.0, %v796
      %798 = vdwg.mxu0
      %v799 = vadd.f32 %v681, %v759
      %v800 = vadd.f32 %v682, %v788
      %v801 = vadd.f32 %v683, %v762
      %v802 = vadd.f32 %v684, %v791
      %v803 = vadd.f32 %v685, %v765
      %v804 = vadd.f32 %v686, %v794
      %v805 = vadd.f32 %v687, %v768
      %v806 = vadd.f32 %v688, %v797
      %s807 = scalar_lea.vmem %s4, 128
      %v808 = vld [vmem:[%s807] sm:$0xff]
      %v809 = vld [vmem:[%s807 + $0x8] sm:$0xff]
      %v810 = vld [vmem:[%s807 + $0x10] sm:$0xff]
      %v811 = vld [vmem:[%s807 + $0x18] sm:$0xff]
      %v813 = vsel %vm430, %v808, 0
      %v816 = vsel %vm430, %v809, 0
      %v819 = vsel %vm430, %v810, 0
      %v822 = vsel %vm430, %v811, 0
      %824 = vmatpush.msra.mxu0 0.0
      %825 = vmatpush.msra.mxu0 0.0
      %826 = vmatpush.msra.mxu0 0.0
      %827 = vmatpush.msra.mxu0 0.0
      %828 = vmatpush.msra.mxu0 0.0
      %829 = vmatpush.msra.mxu0 0.0
      %830 = vmatpush.msra.mxu0 0.0
      %831 = vmatpush.msra.mxu0 0.0
      %832 = vmatpush.msra.mxu0 0.0
      %833 = vmatpush.msra.mxu0 0.0
      %834 = vmatpush.msra.mxu0 0.0
      %835 = vmatpush.msra.mxu0 0.0
      %836 = vmatpush.msra.mxu0 %v343
      %837 = vmatpush.msra.mxu0 %v341
      %838 = vmatpush.msra.mxu0 %v339
      %839 = vmatpush.msra.mxu0 %v337
      %840 = vmatmul.f32.gmra.mxu0 %v813
      %v841 = vpop.f32.mrf.mxu0
      %v842 = vadd.f32 0.0, %v841
      %843 = vmatmul.f32.gmra.mxu0 %v816
      %v844 = vpop.f32.mrf.mxu0
      %v845 = vadd.f32 0.0, %v844
      %846 = vmatmul.f32.gmra.mxu0 %v819
      %v847 = vpop.f32.mrf.mxu0
      %v848 = vadd.f32 0.0, %v847
      %849 = vmatmul.f32.gmra.mxu0 %v822
      %v850 = vpop.f32.mrf.mxu0
      %v851 = vadd.f32 0.0, %v850
      %852 = vdwg.mxu0
      %853 = vmatpush.msra.mxu0 0.0
      %854 = vmatpush.msra.mxu0 0.0
      %855 = vmatpush.msra.mxu0 0.0
      %856 = vmatpush.msra.mxu0 0.0
      %857 = vmatpush.msra.mxu0 0.0
      %858 = vmatpush.msra.mxu0 0.0
      %859 = vmatpush.msra.mxu0 0.0
      %860 = vmatpush.msra.mxu0 0.0
      %861 = vmatpush.msra.mxu0 0.0
      %862 = vmatpush.msra.mxu0 0.0
      %863 = vmatpush.msra.mxu0 0.0
      %864 = vmatpush.msra.mxu0 0.0
      %865 = vmatpush.msra.mxu0 %v344
      %866 = vmatpush.msra.mxu0 %v342
      %867 = vmatpush.msra.mxu0 %v340
      %868 = vmatpush.msra.mxu0 %v338
      %869 = vmatmul.f32.gmra.mxu0 %v813
      %v870 = vpop.f32.mrf.mxu0
      %v871 = vadd.f32 0.0, %v870
      %872 = vmatmul.f32.gmra.mxu0 %v816
      %v873 = vpop.f32.mrf.mxu0
      %v874 = vadd.f32 0.0, %v873
      %875 = vmatmul.f32.gmra.mxu0 %v819
      %v876 = vpop.f32.mrf.mxu0
      %v877 = vadd.f32 0.0, %v876
      %878 = vmatmul.f32.gmra.mxu0 %v822
      %v879 = vpop.f32.mrf.mxu0
      %v880 = vadd.f32 0.0, %v879
      %881 = vdwg.mxu0
      %v882 = vadd.f32 %v799, %v842
      %v883 = vadd.f32 %v800, %v871
      %v884 = vadd.f32 %v801, %v845
      %v885 = vadd.f32 %v802, %v874
      %v886 = vadd.f32 %v803, %v848
      %v887 = vadd.f32 %v804, %v877
      %v888 = vadd.f32 %v805, %v851
      %v889 = vadd.f32 %v806, %v880
      %890 = vrot.lane.b32.xlu0 %v337, 127
      %v891 = vpop.permute.xlu0 %890
      %892 = vrot.lane.b32.xlu0 %v339, 127
      %v893 = vpop.permute.xlu0 %892
      %894 = vrot.lane.b32.xlu0 %v341, 127
      %v895 = vpop.permute.xlu0 %894
      %896 = vrot.lane.b32.xlu0 %v343, 127
      %v897 = vpop.permute.xlu0 %896
      %898 = vrot.lane.b32.xlu0 %v338, 127
      %v899 = vpop.permute.xlu0 %898
      %900 = vrot.lane.b32.xlu0 %v340, 127
      %v901 = vpop.permute.xlu0 %900
      %902 = vrot.lane.b32.xlu0 %v342, 127
      %v903 = vpop.permute.xlu0 %902
      %904 = vrot.lane.b32.xlu0 %v344, 127
      %v905 = vpop.permute.xlu0 %904
      %vm906 = vcmp.lt.s32.totalorder %v366, 127
      %v907 = vsel %vm906, %v891, %v899
      %v908 = vsel %vm906, %v893, %v901
      %v909 = vsel %vm906, %v895, %v903
      %v910 = vsel %vm906, %v897, %v905
      %v911 = vsel %vm906, %v899, %v891
      %v912 = vsel %vm906, %v901, %v893
      %v913 = vsel %vm906, %v903, %v895
      %v914 = vsel %vm906, %v905, %v897
      %v915 = vperm.slane %v345, 5
      %v916 = vperm.slane %v346, 5
      %v917 = vmul.f32 %v907, %v915
      %v918 = vmul.f32 %v911, %v916
      %v919 = vmul.f32 %v908, %v915
      %v920 = vmul.f32 %v912, %v916
      %v921 = vmul.f32 %v909, %v915
      %v922 = vmul.f32 %v913, %v916
      %v923 = vmul.f32 %v910, %v915
      %v924 = vmul.f32 %v914, %v916
      %s925 = scalar_lea.vmem %s4, 160
      %v926 = vld [vmem:[%s925] sm:$0xff]
      %v927 = vld [vmem:[%s925 + $0x8] sm:$0xff]
      %v928 = vld [vmem:[%s925 + $0x10] sm:$0xff]
      %v929 = vld [vmem:[%s925 + $0x18] sm:$0xff]
      %v931 = vsel %vm430, %v926, 0
      %v934 = vsel %vm430, %v927, 0
      %v937 = vsel %vm430, %v928, 0
      %v940 = vsel %vm430, %v929, 0
      %942 = vmatpush.msra.mxu0 0.0
      %943 = vmatpush.msra.mxu0 0.0
      %944 = vmatpush.msra.mxu0 0.0
      %945 = vmatpush.msra.mxu0 0.0
      %946 = vmatpush.msra.mxu0 0.0
      %947 = vmatpush.msra.mxu0 0.0
      %948 = vmatpush.msra.mxu0 0.0
      %949 = vmatpush.msra.mxu0 0.0
      %950 = vmatpush.msra.mxu0 0.0
      %951 = vmatpush.msra.mxu0 0.0
      %952 = vmatpush.msra.mxu0 0.0
      %953 = vmatpush.msra.mxu0 0.0
      %954 = vmatpush.msra.mxu0 %v923
      %955 = vmatpush.msra.mxu0 %v921
      %956 = vmatpush.msra.mxu0 %v919
      %957 = vmatpush.msra.mxu0 %v917
      %958 = vmatmul.f32.gmra.mxu0 %v931
      %v959 = vpop.f32.mrf.mxu0
      %v960 = vadd.f32 0.0, %v959
      %961 = vmatmul.f32.gmra.mxu0 %v934
      %v962 = vpop.f32.mrf.mxu0
      %v963 = vadd.f32 0.0, %v962
      %964 = vmatmul.f32.gmra.mxu0 %v937
      %v965 = vpop.f32.mrf.mxu0
      %v966 = vadd.f32 0.0, %v965
      %967 = vmatmul.f32.gmra.mxu0 %v940
      %v968 = vpop.f32.mrf.mxu0
      %v969 = vadd.f32 0.0, %v968
      %970 = vdwg.mxu0
      %971 = vmatpush.msra.mxu0 0.0
      %972 = vmatpush.msra.mxu0 0.0
      %973 = vmatpush.msra.mxu0 0.0
      %974 = vmatpush.msra.mxu0 0.0
      %975 = vmatpush.msra.mxu0 0.0
      %976 = vmatpush.msra.mxu0 0.0
      %977 = vmatpush.msra.mxu0 0.0
      %978 = vmatpush.msra.mxu0 0.0
      %979 = vmatpush.msra.mxu0 0.0
      %980 = vmatpush.msra.mxu0 0.0
      %981 = vmatpush.msra.mxu0 0.0
      %982 = vmatpush.msra.mxu0 0.0
      %983 = vmatpush.msra.mxu0 %v924
      %984 = vmatpush.msra.mxu0 %v922
      %985 = vmatpush.msra.mxu0 %v920
      %986 = vmatpush.msra.mxu0 %v918
      %987 = vmatmul.f32.gmra.mxu0 %v931
      %v988 = vpop.f32.mrf.mxu0
      %v989 = vadd.f32 0.0, %v988
      %990 = vmatmul.f32.gmra.mxu0 %v934
      %v991 = vpop.f32.mrf.mxu0
      %v992 = vadd.f32 0.0, %v991
      %993 = vmatmul.f32.gmra.mxu0 %v937
      %v994 = vpop.f32.mrf.mxu0
      %v995 = vadd.f32 0.0, %v994
      %996 = vmatmul.f32.gmra.mxu0 %v940
      %v997 = vpop.f32.mrf.mxu0
      %v998 = vadd.f32 0.0, %v997
      %999 = vdwg.mxu0
      %v1000 = vadd.f32 %v882, %v960
      %v1001 = vadd.f32 %v883, %v989
      %v1002 = vadd.f32 %v884, %v963
      %v1003 = vadd.f32 %v885, %v992
      %v1004 = vadd.f32 %v886, %v966
      %v1005 = vadd.f32 %v887, %v995
      %v1006 = vadd.f32 %v888, %v969
      %v1007 = vadd.f32 %v889, %v998
      %1008 = vrot.lane.b32.xlu0 %v337, 113
      %v1009 = vpop.permute.xlu0 %1008
      %1010 = vrot.lane.b32.xlu0 %v339, 113
      %v1011 = vpop.permute.xlu0 %1010
      %1012 = vrot.lane.b32.xlu0 %v341, 113
      %v1013 = vpop.permute.xlu0 %1012
      %1014 = vrot.lane.b32.xlu0 %v343, 113
      %v1015 = vpop.permute.xlu0 %1014
      %1016 = vrot.lane.b32.xlu0 %v338, 113
      %v1017 = vpop.permute.xlu0 %1016
      %1018 = vrot.lane.b32.xlu0 %v340, 113
      %v1019 = vpop.permute.xlu0 %1018
      %1020 = vrot.lane.b32.xlu0 %v342, 113
      %v1021 = vpop.permute.xlu0 %1020
      %1022 = vrot.lane.b32.xlu0 %v344, 113
      %v1023 = vpop.permute.xlu0 %1022
      %vm1024 = vcmp.lt.s32.totalorder %v366, 113
      %v1025 = vsel %vm1024, %v1009, %v1017
      %v1026 = vsel %vm1024, %v1011, %v1019
      %v1027 = vsel %vm1024, %v1013, %v1021
      %v1028 = vsel %vm1024, %v1015, %v1023
      %v1029 = vsel %vm1024, %v1017, %v1009
      %v1030 = vsel %vm1024, %v1019, %v1011
      %v1031 = vsel %vm1024, %v1021, %v1013
      %v1032 = vsel %vm1024, %v1023, %v1015
      %v1033 = vperm.slane %v345, 6
      %v1034 = vperm.slane %v346, 6
      %v1035 = vmul.f32 %v1025, %v1033
      %v1036 = vmul.f32 %v1029, %v1034
      %v1037 = vmul.f32 %v1026, %v1033
      %v1038 = vmul.f32 %v1030, %v1034
      %v1039 = vmul.f32 %v1027, %v1033
      %v1040 = vmul.f32 %v1031, %v1034
      %v1041 = vmul.f32 %v1028, %v1033
      %v1042 = vmul.f32 %v1032, %v1034
      %s1043 = scalar_lea.vmem %s4, 192
      %v1044 = vld [vmem:[%s1043] sm:$0xff]
      %v1045 = vld [vmem:[%s1043 + $0x8] sm:$0xff]
      %v1046 = vld [vmem:[%s1043 + $0x10] sm:$0xff]
      %v1047 = vld [vmem:[%s1043 + $0x18] sm:$0xff]
      %v1049 = vsel %vm430, %v1044, 0
      %v1052 = vsel %vm430, %v1045, 0
      %v1055 = vsel %vm430, %v1046, 0
      %v1058 = vsel %vm430, %v1047, 0
      %1060 = vmatpush.msra.mxu0 0.0
      %1061 = vmatpush.msra.mxu0 0.0
      %1062 = vmatpush.msra.mxu0 0.0
      %1063 = vmatpush.msra.mxu0 0.0
      %1064 = vmatpush.msra.mxu0 0.0
      %1065 = vmatpush.msra.mxu0 0.0
      %1066 = vmatpush.msra.mxu0 0.0
      %1067 = vmatpush.msra.mxu0 0.0
      %1068 = vmatpush.msra.mxu0 0.0
      %1069 = vmatpush.msra.mxu0 0.0
      %1070 = vmatpush.msra.mxu0 0.0
      %1071 = vmatpush.msra.mxu0 0.0
      %1072 = vmatpush.msra.mxu0 %v1041
      %1073 = vmatpush.msra.mxu0 %v1039
      %1074 = vmatpush.msra.mxu0 %v1037
      %1075 = vmatpush.msra.mxu0 %v1035
      %1076 = vmatmul.f32.gmra.mxu0 %v1049
      %v1077 = vpop.f32.mrf.mxu0
      %v1078 = vadd.f32 0.0, %v1077
      %1079 = vmatmul.f32.gmra.mxu0 %v1052
      %v1080 = vpop.f32.mrf.mxu0
      %v1081 = vadd.f32 0.0, %v1080
      %1082 = vmatmul.f32.gmra.mxu0 %v1055
      %v1083 = vpop.f32.mrf.mxu0
      %v1084 = vadd.f32 0.0, %v1083
      %1085 = vmatmul.f32.gmra.mxu0 %v1058
      %v1086 = vpop.f32.mrf.mxu0
      %v1087 = vadd.f32 0.0, %v1086
      %1088 = vdwg.mxu0
      %1089 = vmatpush.msra.mxu0 0.0
      %1090 = vmatpush.msra.mxu0 0.0
      %1091 = vmatpush.msra.mxu0 0.0
      %1092 = vmatpush.msra.mxu0 0.0
      %1093 = vmatpush.msra.mxu0 0.0
      %1094 = vmatpush.msra.mxu0 0.0
      %1095 = vmatpush.msra.mxu0 0.0
      %1096 = vmatpush.msra.mxu0 0.0
      %1097 = vmatpush.msra.mxu0 0.0
      %1098 = vmatpush.msra.mxu0 0.0
      %1099 = vmatpush.msra.mxu0 0.0
      %1100 = vmatpush.msra.mxu0 0.0
      %1101 = vmatpush.msra.mxu0 %v1042
      %1102 = vmatpush.msra.mxu0 %v1040
      %1103 = vmatpush.msra.mxu0 %v1038
      %1104 = vmatpush.msra.mxu0 %v1036
      %1105 = vmatmul.f32.gmra.mxu0 %v1049
      %v1106 = vpop.f32.mrf.mxu0
      %v1107 = vadd.f32 0.0, %v1106
      %1108 = vmatmul.f32.gmra.mxu0 %v1052
      %v1109 = vpop.f32.mrf.mxu0
      %v1110 = vadd.f32 0.0, %v1109
      %1111 = vmatmul.f32.gmra.mxu0 %v1055
      %v1112 = vpop.f32.mrf.mxu0
      %v1113 = vadd.f32 0.0, %v1112
      %1114 = vmatmul.f32.gmra.mxu0 %v1058
      %v1115 = vpop.f32.mrf.mxu0
      %v1116 = vadd.f32 0.0, %v1115
      %1117 = vdwg.mxu0
      %v1118 = vadd.f32 %v1000, %v1078
      %v1119 = vadd.f32 %v1001, %v1107
      %v1120 = vadd.f32 %v1002, %v1081
      %v1121 = vadd.f32 %v1003, %v1110
      %v1122 = vadd.f32 %v1004, %v1084
      %v1123 = vadd.f32 %v1005, %v1113
      %v1124 = vadd.f32 %v1006, %v1087
      %v1125 = vadd.f32 %v1007, %v1116
      %1126 = vrot.lane.b32.xlu0 %v337, 112
      %v1127 = vpop.permute.xlu0 %1126
      %1128 = vrot.lane.b32.xlu0 %v339, 112
      %v1129 = vpop.permute.xlu0 %1128
      %1130 = vrot.lane.b32.xlu0 %v341, 112
      %v1131 = vpop.permute.xlu0 %1130
      %1132 = vrot.lane.b32.xlu0 %v343, 112
      %v1133 = vpop.permute.xlu0 %1132
      %1134 = vrot.lane.b32.xlu0 %v338, 112
      %v1135 = vpop.permute.xlu0 %1134
      %1136 = vrot.lane.b32.xlu0 %v340, 112
      %v1137 = vpop.permute.xlu0 %1136
      %1138 = vrot.lane.b32.xlu0 %v342, 112
      %v1139 = vpop.permute.xlu0 %1138
      %1140 = vrot.lane.b32.xlu0 %v344, 112
      %v1141 = vpop.permute.xlu0 %1140
      %vm1142 = vcmp.lt.s32.totalorder %v366, 112
      %v1143 = vsel %vm1142, %v1127, %v1135
      %v1144 = vsel %vm1142, %v1129, %v1137
      %v1145 = vsel %vm1142, %v1131, %v1139
      %v1146 = vsel %vm1142, %v1133, %v1141
      %v1147 = vsel %vm1142, %v1135, %v1127
      %v1148 = vsel %vm1142, %v1137, %v1129
      %v1149 = vsel %vm1142, %v1139, %v1131
      %v1150 = vsel %vm1142, %v1141, %v1133
      %v1151 = vperm.slane %v345, 7
      %v1152 = vperm.slane %v346, 7
      %v1153 = vmul.f32 %v1143, %v1151
      %v1154 = vmul.f32 %v1147, %v1152
      %v1155 = vmul.f32 %v1144, %v1151
      %v1156 = vmul.f32 %v1148, %v1152
      %v1157 = vmul.f32 %v1145, %v1151
      %v1158 = vmul.f32 %v1149, %v1152
      %v1159 = vmul.f32 %v1146, %v1151
      %v1160 = vmul.f32 %v1150, %v1152
      %s1161 = scalar_lea.vmem %s4, 224
      %v1162 = vld [vmem:[%s1161] sm:$0xff]
      %v1163 = vld [vmem:[%s1161 + $0x8] sm:$0xff]
      %v1164 = vld [vmem:[%s1161 + $0x10] sm:$0xff]
      %v1165 = vld [vmem:[%s1161 + $0x18] sm:$0xff]
      %v1167 = vsel %vm430, %v1162, 0
      %v1170 = vsel %vm430, %v1163, 0
      %v1173 = vsel %vm430, %v1164, 0
      %v1176 = vsel %vm430, %v1165, 0
      %1178 = vmatpush.msra.mxu0 0.0
      %1179 = vmatpush.msra.mxu0 0.0
      %1180 = vmatpush.msra.mxu0 0.0
      %1181 = vmatpush.msra.mxu0 0.0
      %1182 = vmatpush.msra.mxu0 0.0
      %1183 = vmatpush.msra.mxu0 0.0
      %1184 = vmatpush.msra.mxu0 0.0
      %1185 = vmatpush.msra.mxu0 0.0
      %1186 = vmatpush.msra.mxu0 0.0
      %1187 = vmatpush.msra.mxu0 0.0
      %1188 = vmatpush.msra.mxu0 0.0
      %1189 = vmatpush.msra.mxu0 0.0
      %1190 = vmatpush.msra.mxu0 %v1159
      %1191 = vmatpush.msra.mxu0 %v1157
      %1192 = vmatpush.msra.mxu0 %v1155
      %1193 = vmatpush.msra.mxu0 %v1153
      %1194 = vmatmul.f32.gmra.mxu0 %v1167
      %v1195 = vpop.f32.mrf.mxu0
      %v1196 = vadd.f32 0.0, %v1195
      %1197 = vmatmul.f32.gmra.mxu0 %v1170
      %v1198 = vpop.f32.mrf.mxu0
      %v1199 = vadd.f32 0.0, %v1198
      %1200 = vmatmul.f32.gmra.mxu0 %v1173
      %v1201 = vpop.f32.mrf.mxu0
      %v1202 = vadd.f32 0.0, %v1201
      %1203 = vmatmul.f32.gmra.mxu0 %v1176
      %v1204 = vpop.f32.mrf.mxu0
      %v1205 = vadd.f32 0.0, %v1204
      %1206 = vdwg.mxu0
      %1207 = vmatpush.msra.mxu0 0.0
      %1208 = vmatpush.msra.mxu0 0.0
      %1209 = vmatpush.msra.mxu0 0.0
      %1210 = vmatpush.msra.mxu0 0.0
      %1211 = vmatpush.msra.mxu0 0.0
      %1212 = vmatpush.msra.mxu0 0.0
      %1213 = vmatpush.msra.mxu0 0.0
      %1214 = vmatpush.msra.mxu0 0.0
      %1215 = vmatpush.msra.mxu0 0.0
      %1216 = vmatpush.msra.mxu0 0.0
      %1217 = vmatpush.msra.mxu0 0.0
      %1218 = vmatpush.msra.mxu0 0.0
      %1219 = vmatpush.msra.mxu0 %v1160
      %1220 = vmatpush.msra.mxu0 %v1158
      %1221 = vmatpush.msra.mxu0 %v1156
      %1222 = vmatpush.msra.mxu0 %v1154
      %1223 = vmatmul.f32.gmra.mxu0 %v1167
      %v1224 = vpop.f32.mrf.mxu0
      %v1225 = vadd.f32 0.0, %v1224
      %1226 = vmatmul.f32.gmra.mxu0 %v1170
      %v1227 = vpop.f32.mrf.mxu0
      %v1228 = vadd.f32 0.0, %v1227
      %1229 = vmatmul.f32.gmra.mxu0 %v1173
      %v1230 = vpop.f32.mrf.mxu0
      %v1231 = vadd.f32 0.0, %v1230
      %1232 = vmatmul.f32.gmra.mxu0 %v1176
      %v1233 = vpop.f32.mrf.mxu0
      %v1234 = vadd.f32 0.0, %v1233
      %1235 = vdwg.mxu0
      %v1236 = vadd.f32 %v1118, %v1196
      %v1237 = vadd.f32 %v1119, %v1225
      %v1238 = vadd.f32 %v1120, %v1199
      %v1239 = vadd.f32 %v1121, %v1228
      %v1240 = vadd.f32 %v1122, %v1202
      %v1241 = vadd.f32 %v1123, %v1231
      %v1242 = vadd.f32 %v1124, %v1205
      %v1243 = vadd.f32 %v1125, %v1234
      %1244 = vrot.lane.b32.xlu0 %v337, 111
      %v1245 = vpop.permute.xlu0 %1244
      %1246 = vrot.lane.b32.xlu0 %v339, 111
      %v1247 = vpop.permute.xlu0 %1246
      %1248 = vrot.lane.b32.xlu0 %v341, 111
      %v1249 = vpop.permute.xlu0 %1248
      %1250 = vrot.lane.b32.xlu0 %v343, 111
      %v1251 = vpop.permute.xlu0 %1250
      %1252 = vrot.lane.b32.xlu0 %v338, 111
      %v1253 = vpop.permute.xlu0 %1252
      %1254 = vrot.lane.b32.xlu0 %v340, 111
      %v1255 = vpop.permute.xlu0 %1254
      %1256 = vrot.lane.b32.xlu0 %v342, 111
      %v1257 = vpop.permute.xlu0 %1256
      %1258 = vrot.lane.b32.xlu0 %v344, 111
      %v1259 = vpop.permute.xlu0 %1258
      %vm1260 = vcmp.lt.s32.totalorder %v366, 111
      %v1261 = vsel %vm1260, %v1245, %v1253
      %v1262 = vsel %vm1260, %v1247, %v1255
      %v1263 = vsel %vm1260, %v1249, %v1257
      %v1264 = vsel %vm1260, %v1251, %v1259
      %v1265 = vsel %vm1260, %v1253, %v1245
      %v1266 = vsel %vm1260, %v1255, %v1247
      %v1267 = vsel %vm1260, %v1257, %v1249
      %v1268 = vsel %vm1260, %v1259, %v1251
      %v1269 = vperm.slane %v347, 0
      %v1270 = vperm.slane %v348, 0
      %v1271 = vmul.f32 %v1261, %v1269
      %v1272 = vmul.f32 %v1265, %v1270
      %v1273 = vmul.f32 %v1262, %v1269
      %v1274 = vmul.f32 %v1266, %v1270
      %v1275 = vmul.f32 %v1263, %v1269
      %v1276 = vmul.f32 %v1267, %v1270
      %v1277 = vmul.f32 %v1264, %v1269
      %v1278 = vmul.f32 %v1268, %v1270
      %s1279 = scalar_lea.vmem %s4, 256
      %v1280 = vld [vmem:[%s1279] sm:$0xff]
      %v1281 = vld [vmem:[%s1279 + $0x8] sm:$0xff]
      %v1282 = vld [vmem:[%s1279 + $0x10] sm:$0xff]
      %v1283 = vld [vmem:[%s1279 + $0x18] sm:$0xff]
      %v1285 = vsel %vm430, %v1280, 0
      %v1288 = vsel %vm430, %v1281, 0
      %v1291 = vsel %vm430, %v1282, 0
      %v1294 = vsel %vm430, %v1283, 0
      %1296 = vmatpush.msra.mxu0 0.0
      %1297 = vmatpush.msra.mxu0 0.0
      %1298 = vmatpush.msra.mxu0 0.0
      %1299 = vmatpush.msra.mxu0 0.0
      %1300 = vmatpush.msra.mxu0 0.0
      %1301 = vmatpush.msra.mxu0 0.0
      %1302 = vmatpush.msra.mxu0 0.0
      %1303 = vmatpush.msra.mxu0 0.0
      %1304 = vmatpush.msra.mxu0 0.0
      %1305 = vmatpush.msra.mxu0 0.0
      %1306 = vmatpush.msra.mxu0 0.0
      %1307 = vmatpush.msra.mxu0 0.0
      %1308 = vmatpush.msra.mxu0 %v1277
      %1309 = vmatpush.msra.mxu0 %v1275
      %1310 = vmatpush.msra.mxu0 %v1273
      %1311 = vmatpush.msra.mxu0 %v1271
      %1312 = vmatmul.f32.gmra.mxu0 %v1285
      %v1313 = vpop.f32.mrf.mxu0
      %v1314 = vadd.f32 0.0, %v1313
      %1315 = vmatmul.f32.gmra.mxu0 %v1288
      %v1316 = vpop.f32.mrf.mxu0
      %v1317 = vadd.f32 0.0, %v1316
      %1318 = vmatmul.f32.gmra.mxu0 %v1291
      %v1319 = vpop.f32.mrf.mxu0
      %v1320 = vadd.f32 0.0, %v1319
      %1321 = vmatmul.f32.gmra.mxu0 %v1294
      %v1322 = vpop.f32.mrf.mxu0
      %v1323 = vadd.f32 0.0, %v1322
      %1324 = vdwg.mxu0
      %1325 = vmatpush.msra.mxu0 0.0
      %1326 = vmatpush.msra.mxu0 0.0
      %1327 = vmatpush.msra.mxu0 0.0
      %1328 = vmatpush.msra.mxu0 0.0
      %1329 = vmatpush.msra.mxu0 0.0
      %1330 = vmatpush.msra.mxu0 0.0
      %1331 = vmatpush.msra.mxu0 0.0
      %1332 = vmatpush.msra.mxu0 0.0
      %1333 = vmatpush.msra.mxu0 0.0
      %1334 = vmatpush.msra.mxu0 0.0
      %1335 = vmatpush.msra.mxu0 0.0
      %1336 = vmatpush.msra.mxu0 0.0
      %1337 = vmatpush.msra.mxu0 %v1278
      %1338 = vmatpush.msra.mxu0 %v1276
      %1339 = vmatpush.msra.mxu0 %v1274
      %1340 = vmatpush.msra.mxu0 %v1272
      %1341 = vmatmul.f32.gmra.mxu0 %v1285
      %v1342 = vpop.f32.mrf.mxu0
      %v1343 = vadd.f32 0.0, %v1342
      %1344 = vmatmul.f32.gmra.mxu0 %v1288
      %v1345 = vpop.f32.mrf.mxu0
      %v1346 = vadd.f32 0.0, %v1345
      %1347 = vmatmul.f32.gmra.mxu0 %v1291
      %v1348 = vpop.f32.mrf.mxu0
      %v1349 = vadd.f32 0.0, %v1348
      %1350 = vmatmul.f32.gmra.mxu0 %v1294
      %v1351 = vpop.f32.mrf.mxu0
      %v1352 = vadd.f32 0.0, %v1351
      %1353 = vdwg.mxu0
      %v1354 = vadd.f32 %v1236, %v1314
      %v1355 = vadd.f32 %v1237, %v1343
      %v1356 = vadd.f32 %v1238, %v1317
      %v1357 = vadd.f32 %v1239, %v1346
      %v1358 = vadd.f32 %v1240, %v1320
      %v1359 = vadd.f32 %v1241, %v1349
      %v1360 = vadd.f32 %v1242, %v1323
      %v1361 = vadd.f32 %v1243, %v1352
      %1362 = vst [vmem:[%s259] sm:$0xff] %v1354
      %1363 = vst [vmem:[%s259 + $0x8] sm:$0xff] %v1355
      %1364 = vst [vmem:[%s259 + $0x10] sm:$0xff] %v1356
      %1365 = vst [vmem:[%s259 + $0x18] sm:$0xff] %v1357
      %1366 = vst [vmem:[%s259 + $0x20] sm:$0xff] %v1358
      %1367 = vst [vmem:[%s259 + $0x28] sm:$0xff] %v1359
      %1368 = vst [vmem:[%s259 + $0x30] sm:$0xff] %v1360
      %1369 = vst [vmem:[%s259 + $0x38] sm:$0xff] %v1361
      %v1370 = vadd.f32 %v1354, %v1355
      %1371 = vadd.xlane.f32.xlu0 %v1370
      %v1372 = vpop.xlane.xlu0 %1371
      %v1373 = vadd.f32 %v1356, %v1357
      %1374 = vadd.xlane.f32.xlu0 %v1373
      %v1375 = vpop.xlane.xlu0 %1374
      %v1376 = vadd.f32 %v1358, %v1359
      %1377 = vadd.xlane.f32.xlu0 %v1376
      %v1378 = vpop.xlane.xlu0 %1377
      %v1379 = vadd.f32 %v1360, %v1361
      %1380 = vadd.xlane.f32.xlu0 %v1379
      %v1381 = vpop.xlane.xlu0 %1380
      %v1382 = vmul.f32 %v1354, %v1354
      %v1383 = vmul.f32 %v1355, %v1355
      %v1384 = vmul.f32 %v1356, %v1356
      %v1385 = vmul.f32 %v1357, %v1357
      %v1386 = vmul.f32 %v1358, %v1358
      %v1387 = vmul.f32 %v1359, %v1359
      %v1388 = vmul.f32 %v1360, %v1360
      %v1389 = vmul.f32 %v1361, %v1361
      %v1390 = vadd.f32 %v1382, %v1383
      %1391 = vadd.xlane.f32.xlu0 %v1390
      %v1392 = vpop.xlane.xlu0 %1391
      %v1393 = vadd.f32 %v1384, %v1385
      %1394 = vadd.xlane.f32.xlu0 %v1393
      %v1395 = vpop.xlane.xlu0 %1394
      %v1396 = vadd.f32 %v1386, %v1387
      %1397 = vadd.xlane.f32.xlu0 %v1396
      %v1398 = vpop.xlane.xlu0 %1397
      %v1399 = vadd.f32 %v1388, %v1389
      %1400 = vadd.xlane.f32.xlu0 %v1399
      %v1401 = vpop.xlane.xlu0 %1400
      %vm1402 = vcmp.eq.s32.totalorder %v366, 0
      %vm1403 = vcmp.eq.s32.totalorder %v366, 1
      %v1404 = vsel %vm1403, %v1392, 0.0
      %v1405 = vsel %vm1403, %v1395, 0.0
      %v1406 = vsel %vm1403, %v1398, 0.0
      %v1407 = vsel %vm1403, %v1401, 0.0
      %v1408 = vsel %vm1402, %v1372, %v1404
      %v1409 = vsel %vm1402, %v1375, %v1405
      %v1410 = vsel %vm1402, %v1378, %v1406
      %v1411 = vsel %vm1402, %v1381, %v1407
      %1412 = vst [vmem:[%s264] sm:$0xff] %v1408
      %1413 = vst [vmem:[%s264 + $0x8] sm:$0xff] %v1409
      %1414 = vst [vmem:[%s264 + $0x10] sm:$0xff] %v1410
      %1415 = vst [vmem:[%s264 + $0x18] sm:$0xff] %v1411
      %p1416 = scmp.lt.s32.totalorder %s18, 1
      %s1417 = scalar_select %p1416, %s18, 1
      %s1418 = smul.addr %s1417, 8
      %s1419 = smul.addr %s1418, 8
      %s1420 = scalar_lea.vmem %s5, %s1419
      %p1421 = scmp.lt.s32.totalorder %s18, 1
      %s1422 = scalar_select %p1421, %s18, 1
      %s1423 = smul.addr %s1422, 4
      %s1424 = smul.addr %s1423, 8
      %s1425 = scalar_lea.vmem %s6, %s1424
      // Predicated region
      $region41: #{frru_forward.5} parent=39 // pred_check
        %p1426 = pneg %p146
      $region42: #{frru_forward.5} parent=39 // pred_check_branch
        %1428 = sbr.rel (%p1426) target = $region44
      $region43: #{frru_forward.5} parent=39 // pred_region
        _
      $region44: #{frru_forward.5} parent=39 // pred_fallthru
        _
      // Predicated region
      $region45: #{frru_forward.5} parent=39 // pred_check
        %p1429 = pneg %p172
      $region46: #{frru_forward.5} parent=39 // pred_check_branch
        %1431 = sbr.rel (%p1429) target = $region48
      $region47: #{frru_forward.5} parent=39 // pred_region
        _
      $region48: #{frru_forward.5} parent=39 // pred_fallthru
        _
    $region40: #{frru_forward.5} parent=5 // pred_fallthru
      _
    %p1432 = scmp.le.s32.totalorder 2, %s13
    // Predicated region
    $region49: #{frru_forward.5} parent=5 // pred_check
      %p1433 = pneg %p1432
    $region50: #{frru_forward.5} parent=5 // pred_check_branch
      %1435 = sbr.rel (%p1433) target = $region52
    $region51: #{frru_forward.5} parent=5 // pred_region
      %s1436 = ssub.s32 %s13, 2
      // Predicated region
      $region53: #{frru_forward.5} parent=51 // pred_check
        %p1437 = pneg %p152
      $region54: #{frru_forward.5} parent=51 // pred_check_branch
        %1439 = sbr.rel (%p1437) target = $region56
      $region55: #{frru_forward.5} parent=51 // pred_region
        %p1440 = scmp.lt.s32.totalorder %s19, 1
        %s1441 = scalar_select %p1440, %s19, 1
        %s1442 = smul.addr %s1441, 8
        %s1443 = smul.addr %s1442, 8
        %s1444 = scalar_lea.vmem %s5, %s1443
      $region56: #{frru_forward.5} parent=51 // pred_fallthru
        _
      // Predicated region
      $region57: #{frru_forward.5} parent=51 // pred_check
        %p1445 = pneg %p178
      $region58: #{frru_forward.5} parent=51 // pred_check_branch
        %1447 = sbr.rel (%p1445) target = $region60
      $region59: #{frru_forward.5} parent=51 // pred_region
        %p1448 = scmp.lt.s32.totalorder %s19, 1
        %s1449 = scalar_select %p1448, %s19, 1
        %s1450 = smul.addr %s1449, 4
        %s1451 = smul.addr %s1450, 8
        %s1452 = scalar_lea.vmem %s6, %s1451
      $region60: #{frru_forward.5} parent=51 // pred_fallthru
        _
    $region52: #{frru_forward.5} parent=5 // pred_fallthru
      _
  $region6: #{frru_forward.5} parent=0 // loop_footer
    %s17 = sadd.s32 1, %s13
  $region7: #{frru_forward.5} parent=0 // loop_footer_branch
    %12 = sbr.rel target = $region3
  $region8: #{frru_forward.5} parent=0 // loop_exit
    _

// kernel: frru_forward.4
$region0: #{frru_forward.4}
  #allocation0 [shape = 'u32[]', space=smem, size = 0x4, offset = 0x4, fixed_abs, tag = 'smem constant byte address 0x4 - core index']
  #allocation1 [shape = 'u32[72,128]{1,0:T(1,128)}', space=vmem, size = 0x9000, scoped, tag = 'internal scratch']
  %s0 = inlined_call_operand.vmem [shape: f32[2,16,256], index: 0, kind: input, shape index: {}]
  %s1 = inlined_call_operand.vmem [shape: f32[2,32,256], index: 1, kind: input, shape index: {}]
  %s2 = inlined_call_operand.vmem [shape: f32[9,256], index: 2, kind: input, shape index: {}]
  %s3 = inlined_call_operand.vmem [shape: f32[9,32,16], index: 3, kind: input, shape index: {}]
  %s4 = inlined_call_operand.vmem [shape: f32[9,32,32], index: 4, kind: input, shape index: {}]
  %s5 = inlined_call_operand.vmem [shape: f32[2,32,256], index: 5, kind: output, shape index: {0}]
  %s6 = inlined_call_operand.vmem [shape: f32[2,32,128], index: 6, kind: output, shape index: {1}]
  %7 = xla_tuple %s5, %s6
  %s8 = sld [smem:[#allocation0]]
  $region61: #{frru_forward.4} parent=0
    _
  %s10 = ssub.s32 1, %s8
  %s11 = scalar_select 0, %s10, %s8
  loop: start=0, step=1, limit=4
  $region2: #{frru_forward.4} parent=0 // loop_pre_header
    _
  $region3: #{frru_forward.4} parent=0 // loop_header
    %s13 = sphi 0, %s17
    %p14 = scmp.ge.s32.totalorder %s13, 4
    %s23 = sphi 0, %s25
    %s26 = sphi 0, %s23
    %s27 = sphi 0, %s26
    %s43 = sphi 0, %s27
    %s49 = sphi 0, %s51
    %s52 = sphi 0, %s49
    %s53 = sphi 0, %s52
    %s69 = sphi 0, %s53
    %s73 = sphi 0, %s73
    %s75 = sphi 0, %s73
    %s76 = sphi 0, %s75
    %s90 = sphi 0, %s76
    %s94 = sphi 0, %s94
    %s96 = sphi 0, %s94
    %s97 = sphi 0, %s96
    %s111 = sphi 0, %s97
    %s115 = sphi 0, %s115
    %s117 = sphi 0, %s115
    %s118 = sphi 0, %s117
    %s132 = sphi 0, %s118
    %s138 = sphi 0, %s140
    %s141 = sphi 0, %s138
    %s142 = sphi 0, %s141
    %s158 = sphi 0, %s142
    %s164 = sphi 0, %s166
    %s167 = sphi 0, %s164
    %s168 = sphi 0, %s167
    %s184 = sphi 0, %s168
  $region4: #{frru_forward.4} parent=0 // loop_header_branch
    %16 = sbr.rel (%p14) target = $region8
  $region5: #{frru_forward.4} parent=0 // loop_body
    %s18 = ssub.s32 %s13, 1
    %s19 = ssub.s32 %s13, 2
    %s20 = sadd.s32 %s13, 1
    %s21 = ssub.s32 %s13, %s20
    %p22 = scmp.eq.s32.totalorder %s21, 0
    %s24 = sadd.s32 %s23, 1
    %s25 = scalar_select %p22, %s23, %s24
    %p28 = pneg %p22
    %p29 = scmp.eq.s32.totalorder %s13, 1
    %p30 = por %p28, %p29
    %p31 = scmp.ne.s32.totalorder %s23, %s26
    %p32 = scmp.eq.s32.totalorder %s13, 0
    %p33 = por %p31, %p32
    %p34 = scmp.ne.s32.totalorder %s23, %s26
    %p35 = scmp.eq.s32.totalorder %s18, 1
    %p36 = por %p34, %p35
    %p37 = scmp.ne.s32.totalorder %s26, %s27
    %p38 = scmp.eq.s32.totalorder %s18, 0
    %p39 = por %p37, %p38
    %p40 = scmp.ne.s32.totalorder %s26, %s27
    %p41 = scmp.eq.s32.totalorder %s19, 1
    %p42 = por %p40, %p41
    %p44 = scmp.ne.s32.totalorder %s27, %s43
    %p45 = scmp.eq.s32.totalorder %s19, 0
    %p46 = por %p44, %p45
    %s47 = ssub.s32 %s13, %s20
    %p48 = scmp.eq.s32.totalorder %s47, 0
    %s50 = sadd.s32 %s49, 1
    %s51 = scalar_select %p48, %s49, %s50
    %p54 = pneg %p48
    %p55 = scmp.eq.s32.totalorder %s13, 1
    %p56 = por %p54, %p55
    %p57 = scmp.ne.s32.totalorder %s49, %s52
    %p58 = scmp.eq.s32.totalorder %s13, 0
    %p59 = por %p57, %p58
    %p60 = scmp.ne.s32.totalorder %s49, %s52
    %p61 = scmp.eq.s32.totalorder %s18, 1
    %p62 = por %p60, %p61
    %p63 = scmp.ne.s32.totalorder %s52, %s53
    %p64 = scmp.eq.s32.totalorder %s18, 0
    %p65 = por %p63, %p64
    %p66 = scmp.ne.s32.totalorder %s52, %s53
    %p67 = scmp.eq.s32.totalorder %s19, 1
    %p68 = por %p66, %p67
    %p70 = scmp.ne.s32.totalorder %s53, %s69
    %p71 = scmp.eq.s32.totalorder %s19, 0
    %p72 = por %p70, %p71
    %s74 = sadd.s32 %s73, 1
    %p77 = scmp.eq.s32.totalorder %s13, 1
    %p78 = scmp.ne.s32.totalorder %s73, %s75
    %p79 = scmp.eq.s32.totalorder %s13, 0
    %p80 = por %p78, %p79
    %p81 = scmp.ne.s32.totalorder %s73, %s75
    %p82 = scmp.eq.s32.totalorder %s18, 1
    %p83 = por %p81, %p82
    %p84 = scmp.ne.s32.totalorder %s75, %s76
    %p85 = scmp.eq.s32.totalorder %s18, 0
    %p86 = por %p84, %p85
    %p87 = scmp.ne.s32.totalorder %s75, %s76
    %p88 = scmp.eq.s32.totalorder %s19, 1
    %p89 = por %p87, %p88
    %p91 = scmp.ne.s32.totalorder %s76, %s90
    %p92 = scmp.eq.s32.totalorder %s19, 0
    %p93 = por %p91, %p92
    %s95 = sadd.s32 %s94, 1
    %p98 = scmp.eq.s32.totalorder %s13, 1
    %p99 = scmp.ne.s32.totalorder %s94, %s96
    %p100 = scmp.eq.s32.totalorder %s13, 0
    %p101 = por %p99, %p100
    %p102 = scmp.ne.s32.totalorder %s94, %s96
    %p103 = scmp.eq.s32.totalorder %s18, 1
    %p104 = por %p102, %p103
    %p105 = scmp.ne.s32.totalorder %s96, %s97
    %p106 = scmp.eq.s32.totalorder %s18, 0
    %p107 = por %p105, %p106
    %p108 = scmp.ne.s32.totalorder %s96, %s97
    %p109 = scmp.eq.s32.totalorder %s19, 1
    %p110 = por %p108, %p109
    %p112 = scmp.ne.s32.totalorder %s97, %s111
    %p113 = scmp.eq.s32.totalorder %s19, 0
    %p114 = por %p112, %p113
    %s116 = sadd.s32 %s115, 1
    %p119 = scmp.eq.s32.totalorder %s13, 1
    %p120 = scmp.ne.s32.totalorder %s115, %s117
    %p121 = scmp.eq.s32.totalorder %s13, 0
    %p122 = por %p120, %p121
    %p123 = scmp.ne.s32.totalorder %s115, %s117
    %p124 = scmp.eq.s32.totalorder %s18, 1
    %p125 = por %p123, %p124
    %p126 = scmp.ne.s32.totalorder %s117, %s118
    %p127 = scmp.eq.s32.totalorder %s18, 0
    %p128 = por %p126, %p127
    %p129 = scmp.ne.s32.totalorder %s117, %s118
    %p130 = scmp.eq.s32.totalorder %s19, 1
    %p131 = por %p129, %p130
    %p133 = scmp.ne.s32.totalorder %s118, %s132
    %p134 = scmp.eq.s32.totalorder %s19, 0
    %p135 = por %p133, %p134
    %s136 = ssub.s32 %s13, %s20
    %p137 = scmp.eq.s32.totalorder %s136, 0
    %s139 = sadd.s32 %s138, 1
    %s140 = scalar_select %p137, %s138, %s139
    %p143 = pneg %p137
    %p144 = scmp.eq.s32.totalorder %s13, 1
    %p145 = por %p143, %p144
    %p146 = scmp.ne.s32.totalorder %s138, %s141
    %p147 = scmp.eq.s32.totalorder %s13, 0
    %p148 = por %p146, %p147
    %p149 = scmp.ne.s32.totalorder %s138, %s141
    %p150 = scmp.eq.s32.totalorder %s18, 1
    %p151 = por %p149, %p150
    %p152 = scmp.ne.s32.totalorder %s141, %s142
    %p153 = scmp.eq.s32.totalorder %s18, 0
    %p154 = por %p152, %p153
    %p155 = scmp.ne.s32.totalorder %s141, %s142
    %p156 = scmp.eq.s32.totalorder %s19, 1
    %p157 = por %p155, %p156
    %p159 = scmp.ne.s32.totalorder %s142, %s158
    %p160 = scmp.eq.s32.totalorder %s19, 0
    %p161 = por %p159, %p160
    %s162 = ssub.s32 %s13, %s20
    %p163 = scmp.eq.s32.totalorder %s162, 0
    %s165 = sadd.s32 %s164, 1
    %s166 = scalar_select %p163, %s164, %s165
    %p169 = pneg %p163
    %p170 = scmp.eq.s32.totalorder %s13, 1
    %p171 = por %p169, %p170
    %p172 = scmp.ne.s32.totalorder %s164, %s167
    %p173 = scmp.eq.s32.totalorder %s13, 0
    %p174 = por %p172, %p173
    %p175 = scmp.ne.s32.totalorder %s164, %s167
    %p176 = scmp.eq.s32.totalorder %s18, 1
    %p177 = por %p175, %p176
    %p178 = scmp.ne.s32.totalorder %s167, %s168
    %p179 = scmp.eq.s32.totalorder %s18, 0
    %p180 = por %p178, %p179
    %p181 = scmp.ne.s32.totalorder %s167, %s168
    %p182 = scmp.eq.s32.totalorder %s19, 1
    %p183 = por %p181, %p182
    %p185 = scmp.ne.s32.totalorder %s168, %s184
    %p186 = scmp.eq.s32.totalorder %s19, 0
    %p187 = por %p185, %p186
    %p188 = scmp.le.s32.totalorder 1, %s13
    %p189 = scmp.lt.s32.totalorder %s13, 3
    %p190 = pnand %p188, %p189
    %p191 = pneg %p190
    // Predicated region
    $region9: #{frru_forward.4} parent=5 // pred_check
      _
    $region10: #{frru_forward.4} parent=5 // pred_check_branch
      %193 = sbr.rel (%p190) target = $region12
    $region11: #{frru_forward.4} parent=5 // pred_region
      %s194 = ssub.s32 %s13, 1
      // Predicated region
      $region13: #{frru_forward.4} parent=11 // pred_check
        %p195 = pneg %p86
      $region14: #{frru_forward.4} parent=11 // pred_check_branch
        %197 = sbr.rel (%p195) target = $region16
      $region15: #{frru_forward.4} parent=11 // pred_region
        _
      $region16: #{frru_forward.4} parent=11 // pred_fallthru
        _
      // Predicated region
      $region17: #{frru_forward.4} parent=11 // pred_check
        %p198 = pneg %p107
      $region18: #{frru_forward.4} parent=11 // pred_check_branch
        %200 = sbr.rel (%p198) target = $region20
      $region19: #{frru_forward.4} parent=11 // pred_region
        _
      $region20: #{frru_forward.4} parent=11 // pred_fallthru
        _
      // Predicated region
      $region21: #{frru_forward.4} parent=11 // pred_check
        %p201 = pneg %p128
      $region22: #{frru_forward.4} parent=11 // pred_check_branch
        %203 = sbr.rel (%p201) target = $region24
      $region23: #{frru_forward.4} parent=11 // pred_region
        _
      $region24: #{frru_forward.4} parent=11 // pred_fallthru
        _
    $region12: #{frru_forward.4} parent=5 // pred_fallthru
      _
    %p204 = scmp.lt.s32.totalorder %s13, 2
    // Predicated region
    $region25: #{frru_forward.4} parent=5 // pred_check
      %p205 = pneg %p204
    $region26: #{frru_forward.4} parent=5 // pred_check_branch
      %207 = sbr.rel (%p205) target = $region28
    $region27: #{frru_forward.4} parent=5 // pred_region
      // Predicated region
      $region29: #{frru_forward.4} parent=27 // pred_check
        %p208 = pneg %p33
      $region30: #{frru_forward.4} parent=27 // pred_check_branch
        %210 = sbr.rel (%p208) target = $region32
      $region31: #{frru_forward.4} parent=27 // pred_region
        %p211 = scmp.lt.s32.totalorder %s13, 1
        %s212 = scalar_select %p211, %s13, 1
        %s213 = smul.addr %s212, 4
        %s214 = smul.addr %s213, 8
        %s215 = scalar_lea.vmem %s0, %s214
      $region32: #{frru_forward.4} parent=27 // pred_fallthru
        _
      // Predicated region
      $region33: #{frru_forward.4} parent=27 // pred_check
        %p216 = pneg %p59
      $region34: #{frru_forward.4} parent=27 // pred_check_branch
        %218 = sbr.rel (%p216) target = $region36
      $region35: #{frru_forward.4} parent=27 // pred_region
        %p219 = scmp.lt.s32.totalorder %s13, 1
        %s220 = scalar_select %p219, %s13, 1
        %s221 = smul.addr %s220, 8
        %s222 = smul.addr %s221, 8
        %s223 = scalar_lea.vmem %s1, %s222
      $region36: #{frru_forward.4} parent=27 // pred_fallthru
        _
    $region28: #{frru_forward.4} parent=5 // pred_fallthru
      _
    %p224 = scmp.le.s32.totalorder 1, %s13
    %p225 = scmp.lt.s32.totalorder %s13, 3
    %p226 = pnand %p224, %p225
    %p227 = pneg %p226
    // Predicated region
    $region37: #{frru_forward.4} parent=5 // pred_check
      _
    $region38: #{frru_forward.4} parent=5 // pred_check_branch
      %229 = sbr.rel (%p226) target = $region40
    $region39: #{frru_forward.4} parent=5 // pred_region
      %s230 = ssub.s32 %s13, 1
      %p231 = scmp.lt.s32.totalorder %s18, 1
      %s232 = scalar_select %p231, %s18, 1
      %s233 = smul.addr %s232, 4
      %s234 = smul.addr %s233, 8
      %s235 = scalar_lea.vmem %s0, %s234
      %p236 = pneg %p39
      %p237 = pneg %p36
      %p238 = scmp.lt.s32.totalorder %s18, 1
      %s239 = scalar_select %p238, %s18, 1
      %s240 = smul.addr %s239, 8
      %s241 = smul.addr %s240, 8
      %s242 = scalar_lea.vmem %s1, %s241
      %p243 = pneg %p65
      %p244 = pneg %p62
      %p245 = pneg %p86
      %p246 = pneg %p83
      %p247 = pneg %p107
      %p248 = pneg %p104
      %p249 = pneg %p128
      %p250 = pneg %p125
      %p251 = pneg %p154
      %p252 = pneg %p151
      %p253 = scmp.lt.s32.totalorder %s18, 1
      %s254 = scalar_select %p253, %s18, 1
      %s255 = smul.addr %s254, 8
      %s256 = smul.addr %s255, 8
      %s257 = scalar_lea.vmem %s5, %s256
      %p258 = pneg %p180
      %p259 = pneg %p177
      %p260 = scmp.lt.s32.totalorder %s18, 1
      %s261 = scalar_select %p260, %s18, 1
      %s262 = smul.addr %s261, 4
      %s263 = smul.addr %s262, 8
      %s264 = scalar_lea.vmem %s6, %s263
      %p265 = scmp.lt.s32.totalorder %s18, 1
      %s266 = scalar_select %p265, %s18, 1
      %s267 = smul.addr %s266, 4
      %s268 = smul.addr %s267, 8
      %s269 = scalar_lea.vmem %s0, %s268
      %p270 = scmp.lt.s32.totalorder %s18, 1
      %s271 = scalar_select %p270, %s18, 1
      %s272 = smul.addr %s271, 8
      %s273 = smul.addr %s272, 8
      %s274 = scalar_lea.vmem %s1, %s273
      %p275 = scmp.lt.s32.totalorder %s18, 1
      %s276 = scalar_select %p275, %s18, 1
      %s277 = smul.addr %s276, 8
      %s278 = smul.addr %s277, 8
      %s279 = scalar_lea.vmem %s5, %s278
      %p280 = scmp.lt.s32.totalorder %s18, 1
      %s281 = scalar_select %p280, %s18, 1
      %s282 = smul.addr %s281, 4
      %s283 = smul.addr %s282, 8
      %s284 = scalar_lea.vmem %s6, %s283
      %v285 = vld [vmem:[%s2] sm:$0xff]
      %v286 = vld [vmem:[%s2 + $0x8] sm:$0xff]
      %v287 = vld [vmem:[%s2 + $0x10] sm:$0x1]
      %v288 = vld [vmem:[%s2 + $0x18] sm:$0x1]
      %v289 = vld [vmem:[%s269] sm:$0xff]
      %v290 = vld [vmem:[%s269 + $0x8] sm:$0xff]
      %v291 = vld [vmem:[%s269 + $0x10] sm:$0xff]
      %v292 = vld [vmem:[%s269 + $0x18] sm:$0xff]
      %293 = vrot.lane.b32.xlu0 %v289, 17
      %v294 = vpop.permute.xlu0 %293
      %295 = vrot.lane.b32.xlu0 %v291, 17
      %v296 = vpop.permute.xlu0 %295
      %297 = vrot.lane.b32.xlu0 %v290, 17
      %v298 = vpop.permute.xlu0 %297
      %299 = vrot.lane.b32.xlu0 %v292, 17
      %v300 = vpop.permute.xlu0 %299
      %v301 = vlaneseq
      %v302 = vand.u32 %v301, 127
      %vm303 = vcmp.lt.s32.totalorder %v302, 17
      %v304 = vsel %vm303, %v294, %v298
      %v305 = vsel %vm303, %v296, %v300
      %v306 = vsel %vm303, %v298, %v294
      %v307 = vsel %vm303, %v300, %v296
      %v308 = vperm.slane %v285, 0
      %v309 = vperm.slane %v286, 0
      %v310 = vmul.f32 %v306, %v308
      %v311 = vmul.f32 %v304, %v309
      %v312 = vmul.f32 %v307, %v308
      %v313 = vmul.f32 %v305, %v309
      %v314 = vld [vmem:[%s3] sm:$0xff]
      %v315 = vld [vmem:[%s3 + $0x8] sm:$0xff]
      %v316 = vld [vmem:[%s3 + $0x10] sm:$0xff]
      %v317 = vld [vmem:[%s3 + $0x18] sm:$0xff]
      %318 = vrot.lane.b32.xlu0 %v289, 16
      %v319 = vpop.permute.xlu0 %318
      %320 = vrot.lane.b32.xlu0 %v291, 16
      %v321 = vpop.permute.xlu0 %320
      %322 = vrot.lane.b32.xlu0 %v290, 16
      %v323 = vpop.permute.xlu0 %322
      %324 = vrot.lane.b32.xlu0 %v292, 16
      %v325 = vpop.permute.xlu0 %324
      %vm326 = vcmp.lt.s32.totalorder %v302, 16
      %v327 = vsel %vm326, %v319, %v323
      %v328 = vsel %vm326, %v321, %v325
      %v329 = vsel %vm326, %v323, %v319
      %v330 = vsel %vm326, %v325, %v321
      %v331 = vperm.slane %v285, 1
      %v332 = vperm.slane %v286, 1
      %v333 = vmul.f32 %v329, %v331
      %v334 = vmul.f32 %v327, %v332
      %v335 = vmul.f32 %v330, %v331
      %v336 = vmul.f32 %v328, %v332
      %s337 = scalar_lea.vmem %s3, 32
      %v338 = vld [vmem:[%s337] sm:$0xff]
      %v339 = vld [vmem:[%s337 + $0x8] sm:$0xff]
      %v340 = vld [vmem:[%s337 + $0x10] sm:$0xff]
      %v341 = vld [vmem:[%s337 + $0x18] sm:$0xff]
      %vm342 = vcmask 130048
      %v344 = vsel %vm342, %v338, 0
      %v347 = vsel %vm342, %v339, 0
      %v350 = vsel %vm342, %v340, 0
      %v353 = vsel %vm342, %v341, 0
      %355 = vmatpush.msra.mxu0 0.0
      %356 = vmatpush.msra.mxu0 0.0
      %357 = vmatpush.msra.mxu0 0.0
      %358 = vmatpush.msra.mxu0 0.0
      %359 = vmatpush.msra.mxu0 0.0
      %360 = vmatpush.msra.mxu0 0.0
      %361 = vmatpush.msra.mxu0 0.0
      %362 = vmatpush.msra.mxu0 0.0
      %363 = vmatpush.msra.mxu0 0.0
      %364 = vmatpush.msra.mxu0 0.0
      %365 = vmatpush.msra.mxu0 0.0
      %366 = vmatpush.msra.mxu0 0.0
      %367 = vmatpush.msra.mxu0 0.0
      %368 = vmatpush.msra.mxu0 0.0
      %369 = vmatpush.msra.mxu0 %v335
      %370 = vmatpush.msra.mxu0 %v333
      %371 = vmatmul.f32.gmra.mxu0 %v344
      %v372 = vpop.f32.mrf.mxu0
      %v373 = vadd.f32 0.0, %v372
      %374 = vmatmul.f32.gmra.mxu0 %v347
      %v375 = vpop.f32.mrf.mxu0
      %v376 = vadd.f32 0.0, %v375
      %377 = vmatmul.f32.gmra.mxu0 %v350
      %v378 = vpop.f32.mrf.mxu0
      %v379 = vadd.f32 0.0, %v378
      %380 = vmatmul.f32.gmra.mxu0 %v353
      %v381 = vpop.f32.mrf.mxu0
      %v382 = vadd.f32 0.0, %v381
      %383 = vdwg.mxu0
      %384 = vmatpush.msra.mxu0 0.0
      %385 = vmatpush.msra.mxu0 0.0
      %386 = vmatpush.msra.mxu0 0.0
      %387 = vmatpush.msra.mxu0 0.0
      %388 = vmatpush.msra.mxu0 0.0
      %389 = vmatpush.msra.mxu0 0.0
      %390 = vmatpush.msra.mxu0 0.0
      %391 = vmatpush.msra.mxu0 0.0
      %392 = vmatpush.msra.mxu0 0.0
      %393 = vmatpush.msra.mxu0 0.0
      %394 = vmatpush.msra.mxu0 0.0
      %395 = vmatpush.msra.mxu0 0.0
      %396 = vmatpush.msra.mxu0 0.0
      %397 = vmatpush.msra.mxu0 0.0
      %398 = vmatpush.msra.mxu0 %v336
      %399 = vmatpush.msra.mxu0 %v334
      %400 = vmatmul.f32.gmra.mxu0 %v344
      %v401 = vpop.f32.mrf.mxu0
      %v402 = vadd.f32 0.0, %v401
      %403 = vmatmul.f32.gmra.mxu0 %v347
      %v404 = vpop.f32.mrf.mxu0
      %v405 = vadd.f32 0.0, %v404
      %406 = vmatmul.f32.gmra.mxu0 %v350
      %v407 = vpop.f32.mrf.mxu0
      %v408 = vadd.f32 0.0, %v407
      %409 = vmatmul.f32.gmra.mxu0 %v353
      %v410 = vpop.f32.mrf.mxu0
      %v411 = vadd.f32 0.0, %v410
      %412 = vdwg.mxu0
      %v414 = vsel %vm342, %v314, 0
      %v417 = vsel %vm342, %v315, 0
      %v420 = vsel %vm342, %v316, 0
      %v423 = vsel %vm342, %v317, 0
      %425 = vmatpush.msra.mxu0 0.0
      %426 = vmatpush.msra.mxu0 0.0
      %427 = vmatpush.msra.mxu0 0.0
      %428 = vmatpush.msra.mxu0 0.0
      %429 = vmatpush.msra.mxu0 0.0
      %430 = vmatpush.msra.mxu0 0.0
      %431 = vmatpush.msra.mxu0 0.0
      %432 = vmatpush.msra.mxu0 0.0
      %433 = vmatpush.msra.mxu0 0.0
      %434 = vmatpush.msra.mxu0 0.0
      %435 = vmatpush.msra.mxu0 0.0
      %436 = vmatpush.msra.mxu0 0.0
      %437 = vmatpush.msra.mxu0 0.0
      %438 = vmatpush.msra.mxu0 0.0
      %439 = vmatpush.msra.mxu0 %v312
      %440 = vmatpush.msra.mxu0 %v310
      %441 = vmatmul.f32.gmra.mxu0 %v414
      %v442 = vpop.f32.mrf.mxu0
      %v443 = vadd.f32 %v373, %v442
      %444 = vmatmul.f32.gmra.mxu0 %v417
      %v445 = vpop.f32.mrf.mxu0
      %v446 = vadd.f32 %v376, %v445
      %447 = vmatmul.f32.gmra.mxu0 %v420
      %v448 = vpop.f32.mrf.mxu0
      %v449 = vadd.f32 %v379, %v448
      %450 = vmatmul.f32.gmra.mxu0 %v423
      %v451 = vpop.f32.mrf.mxu0
      %v452 = vadd.f32 %v382, %v451
      %453 = vdwg.mxu0
      %454 = vmatpush.msra.mxu0 0.0
      %455 = vmatpush.msra.mxu0 0.0
      %456 = vmatpush.msra.mxu0 0.0
      %457 = vmatpush.msra.mxu0 0.0
      %458 = vmatpush.msra.mxu0 0.0
      %459 = vmatpush.msra.mxu0 0.0
      %460 = vmatpush.msra.mxu0 0.0
      %461 = vmatpush.msra.mxu0 0.0
      %462 = vmatpush.msra.mxu0 0.0
      %463 = vmatpush.msra.mxu0 0.0
      %464 = vmatpush.msra.mxu0 0.0
      %465 = vmatpush.msra.mxu0 0.0
      %466 = vmatpush.msra.mxu0 0.0
      %467 = vmatpush.msra.mxu0 0.0
      %468 = vmatpush.msra.mxu0 %v313
      %469 = vmatpush.msra.mxu0 %v311
      %470 = vmatmul.f32.gmra.mxu0 %v414
      %v471 = vpop.f32.mrf.mxu0
      %v472 = vadd.f32 %v402, %v471
      %473 = vmatmul.f32.gmra.mxu0 %v417
      %v474 = vpop.f32.mrf.mxu0
      %v475 = vadd.f32 %v405, %v474
      %476 = vmatmul.f32.gmra.mxu0 %v420
      %v477 = vpop.f32.mrf.mxu0
      %v478 = vadd.f32 %v408, %v477
      %479 = vmatmul.f32.gmra.mxu0 %v423
      %v480 = vpop.f32.mrf.mxu0
      %v481 = vadd.f32 %v411, %v480
      %482 = vdwg.mxu0
      %483 = vrot.lane.b32.xlu0 %v289, 15
      %v484 = vpop.permute.xlu0 %483
      %485 = vrot.lane.b32.xlu0 %v291, 15
      %v486 = vpop.permute.xlu0 %485
      %487 = vrot.lane.b32.xlu0 %v290, 15
      %v488 = vpop.permute.xlu0 %487
      %489 = vrot.lane.b32.xlu0 %v292, 15
      %v490 = vpop.permute.xlu0 %489
      %vm491 = vcmp.lt.s32.totalorder %v302, 15
      %v492 = vsel %vm491, %v484, %v488
      %v493 = vsel %vm491, %v486, %v490
      %v494 = vsel %vm491, %v488, %v484
      %v495 = vsel %vm491, %v490, %v486
      %v496 = vperm.slane %v285, 2
      %v497 = vperm.slane %v286, 2
      %v498 = vmul.f32 %v494, %v496
      %v499 = vmul.f32 %v492, %v497
      %v500 = vmul.f32 %v495, %v496
      %v501 = vmul.f32 %v493, %v497
      %s502 = scalar_lea.vmem %s3, 64
      %v503 = vld [vmem:[%s502] sm:$0xff]
      %v504 = vld [vmem:[%s502 + $0x8] sm:$0xff]
      %v505 = vld [vmem:[%s502 + $0x10] sm:$0xff]
      %v506 = vld [vmem:[%s502 + $0x18] sm:$0xff]
      %v508 = vsel %vm342, %v503, 0
      %v511 = vsel %vm342, %v504, 0
      %v514 = vsel %vm342, %v505, 0
      %v517 = vsel %vm342, %v506, 0
      %519 = vmatpush.msra.mxu0 0.0
      %520 = vmatpush.msra.mxu0 0.0
      %521 = vmatpush.msra.mxu0 0.0
      %522 = vmatpush.msra.mxu0 0.0
      %523 = vmatpush.msra.mxu0 0.0
      %524 = vmatpush.msra.mxu0 0.0
      %525 = vmatpush.msra.mxu0 0.0
      %526 = vmatpush.msra.mxu0 0.0
      %527 = vmatpush.msra.mxu0 0.0
      %528 = vmatpush.msra.mxu0 0.0
      %529 = vmatpush.msra.mxu0 0.0
      %530 = vmatpush.msra.mxu0 0.0
      %531 = vmatpush.msra.mxu0 0.0
      %532 = vmatpush.msra.mxu0 0.0
      %533 = vmatpush.msra.mxu0 %v500
      %534 = vmatpush.msra.mxu0 %v498
      %535 = vmatmul.f32.gmra.mxu0 %v508
      %v536 = vpop.f32.mrf.mxu0
      %v537 = vadd.f32 0.0, %v536
      %538 = vmatmul.f32.gmra.mxu0 %v511
      %v539 = vpop.f32.mrf.mxu0
      %v540 = vadd.f32 0.0, %v539
      %541 = vmatmul.f32.gmra.mxu0 %v514
      %v542 = vpop.f32.mrf.mxu0
      %v543 = vadd.f32 0.0, %v542
      %544 = vmatmul.f32.gmra.mxu0 %v517
      %v545 = vpop.f32.mrf.mxu0
      %v546 = vadd.f32 0.0, %v545
      %547 = vdwg.mxu0
      %548 = vmatpush.msra.mxu0 0.0
      %549 = vmatpush.msra.mxu0 0.0
      %550 = vmatpush.msra.mxu0 0.0
      %551 = vmatpush.msra.mxu0 0.0
      %552 = vmatpush.msra.mxu0 0.0
      %553 = vmatpush.msra.mxu0 0.0
      %554 = vmatpush.msra.mxu0 0.0
      %555 = vmatpush.msra.mxu0 0.0
      %556 = vmatpush.msra.mxu0 0.0
      %557 = vmatpush.msra.mxu0 0.0
      %558 = vmatpush.msra.mxu0 0.0
      %559 = vmatpush.msra.mxu0 0.0
      %560 = vmatpush.msra.mxu0 0.0
      %561 = vmatpush.msra.mxu0 0.0
      %562 = vmatpush.msra.mxu0 %v501
      %563 = vmatpush.msra.mxu0 %v499
      %564 = vmatmul.f32.gmra.mxu0 %v508
      %v565 = vpop.f32.mrf.mxu0
      %v566 = vadd.f32 0.0, %v565
      %567 = vmatmul.f32.gmra.mxu0 %v511
      %v568 = vpop.f32.mrf.mxu0
      %v569 = vadd.f32 0.0, %v568
      %570 = vmatmul.f32.gmra.mxu0 %v514
      %v571 = vpop.f32.mrf.mxu0
      %v572 = vadd.f32 0.0, %v571
      %573 = vmatmul.f32.gmra.mxu0 %v517
      %v574 = vpop.f32.mrf.mxu0
      %v575 = vadd.f32 0.0, %v574
      %576 = vdwg.mxu0
      %v577 = vadd.f32 %v443, %v537
      %v578 = vadd.f32 %v472, %v566
      %v579 = vadd.f32 %v446, %v540
      %v580 = vadd.f32 %v475, %v569
      %v581 = vadd.f32 %v449, %v543
      %v582 = vadd.f32 %v478, %v572
      %v583 = vadd.f32 %v452, %v546
      %v584 = vadd.f32 %v481, %v575
      %585 = vrot.lane.b32.xlu0 %v289, 1
      %v586 = vpop.permute.xlu0 %585
      %587 = vrot.lane.b32.xlu0 %v291, 1
      %v588 = vpop.permute.xlu0 %587
      %589 = vrot.lane.b32.xlu0 %v290, 1
      %v590 = vpop.permute.xlu0 %589
      %591 = vrot.lane.b32.xlu0 %v292, 1
      %v592 = vpop.permute.xlu0 %591
      %vm593 = vcmp.lt.s32.totalorder %v302, 1
      %v594 = vsel %vm593, %v586, %v590
      %v595 = vsel %vm593, %v588, %v592
      %v596 = vsel %vm593, %v590, %v586
      %v597 = vsel %vm593, %v592, %v588
      %v598 = vperm.slane %v285, 3
      %v599 = vperm.slane %v286, 3
      %v600 = vmul.f32 %v596, %v598
      %v601 = vmul.f32 %v594, %v599
      %v602 = vmul.f32 %v597, %v598
      %v603 = vmul.f32 %v595, %v599
      %s604 = scalar_lea.vmem %s3, 96
      %v605 = vld [vmem:[%s604] sm:$0xff]
      %v606 = vld [vmem:[%s604 + $0x8] sm:$0xff]
      %v607 = vld [vmem:[%s604 + $0x10] sm:$0xff]
      %v608 = vld [vmem:[%s604 + $0x18] sm:$0xff]
      %v610 = vsel %vm342, %v605, 0
      %v613 = vsel %vm342, %v606, 0
      %v616 = vsel %vm342, %v607, 0
      %v619 = vsel %vm342, %v608, 0
      %621 = vmatpush.msra.mxu0 0.0
      %622 = vmatpush.msra.mxu0 0.0
      %623 = vmatpush.msra.mxu0 0.0
      %624 = vmatpush.msra.mxu0 0.0
      %625 = vmatpush.msra.mxu0 0.0
      %626 = vmatpush.msra.mxu0 0.0
      %627 = vmatpush.msra.mxu0 0.0
      %628 = vmatpush.msra.mxu0 0.0
      %629 = vmatpush.msra.mxu0 0.0
      %630 = vmatpush.msra.mxu0 0.0
      %631 = vmatpush.msra.mxu0 0.0
      %632 = vmatpush.msra.mxu0 0.0
      %633 = vmatpush.msra.mxu0 0.0
      %634 = vmatpush.msra.mxu0 0.0
      %635 = vmatpush.msra.mxu0 %v602
      %636 = vmatpush.msra.mxu0 %v600
      %637 = vmatmul.f32.gmra.mxu0 %v610
      %v638 = vpop.f32.mrf.mxu0
      %v639 = vadd.f32 0.0, %v638
      %640 = vmatmul.f32.gmra.mxu0 %v613
      %v641 = vpop.f32.mrf.mxu0
      %v642 = vadd.f32 0.0, %v641
      %643 = vmatmul.f32.gmra.mxu0 %v616
      %v644 = vpop.f32.mrf.mxu0
      %v645 = vadd.f32 0.0, %v644
      %646 = vmatmul.f32.gmra.mxu0 %v619
      %v647 = vpop.f32.mrf.mxu0
      %v648 = vadd.f32 0.0, %v647
      %649 = vdwg.mxu0
      %650 = vmatpush.msra.mxu0 0.0
      %651 = vmatpush.msra.mxu0 0.0
      %652 = vmatpush.msra.mxu0 0.0
      %653 = vmatpush.msra.mxu0 0.0
      %654 = vmatpush.msra.mxu0 0.0
      %655 = vmatpush.msra.mxu0 0.0
      %656 = vmatpush.msra.mxu0 0.0
      %657 = vmatpush.msra.mxu0 0.0
      %658 = vmatpush.msra.mxu0 0.0
      %659 = vmatpush.msra.mxu0 0.0
      %660 = vmatpush.msra.mxu0 0.0
      %661 = vmatpush.msra.mxu0 0.0
      %662 = vmatpush.msra.mxu0 0.0
      %663 = vmatpush.msra.mxu0 0.0
      %664 = vmatpush.msra.mxu0 %v603
      %665 = vmatpush.msra.mxu0 %v601
      %666 = vmatmul.f32.gmra.mxu0 %v610
      %v667 = vpop.f32.mrf.mxu0
      %v668 = vadd.f32 0.0, %v667
      %669 = vmatmul.f32.gmra.mxu0 %v613
      %v670 = vpop.f32.mrf.mxu0
      %v671 = vadd.f32 0.0, %v670
      %672 = vmatmul.f32.gmra.mxu0 %v616
      %v673 = vpop.f32.mrf.mxu0
      %v674 = vadd.f32 0.0, %v673
      %675 = vmatmul.f32.gmra.mxu0 %v619
      %v676 = vpop.f32.mrf.mxu0
      %v677 = vadd.f32 0.0, %v676
      %678 = vdwg.mxu0
      %v679 = vadd.f32 %v577, %v639
      %v680 = vadd.f32 %v578, %v668
      %v681 = vadd.f32 %v579, %v642
      %v682 = vadd.f32 %v580, %v671
      %v683 = vadd.f32 %v581, %v645
      %v684 = vadd.f32 %v582, %v674
      %v685 = vadd.f32 %v583, %v648
      %v686 = vadd.f32 %v584, %v677
      %s687 = scalar_lea.vmem %s3, 128
      %v688 = vld [vmem:[%s687] sm:$0xff]
      %v689 = vld [vmem:[%s687 + $0x8] sm:$0xff]
      %v690 = vld [vmem:[%s687 + $0x10] sm:$0xff]
      %v691 = vld [vmem:[%s687 + $0x18] sm:$0xff]
      %v693 = vsel %vm342, %v688, 0
      %v696 = vsel %vm342, %v689, 0
      %v699 = vsel %vm342, %v690, 0
      %v702 = vsel %vm342, %v691, 0
      %704 = vmatpush.msra.mxu0 0.0
      %705 = vmatpush.msra.mxu0 0.0
      %706 = vmatpush.msra.mxu0 0.0
      %707 = vmatpush.msra.mxu0 0.0
      %708 = vmatpush.msra.mxu0 0.0
      %709 = vmatpush.msra.mxu0 0.0
      %710 = vmatpush.msra.mxu0 0.0
      %711 = vmatpush.msra.mxu0 0.0
      %712 = vmatpush.msra.mxu0 0.0
      %713 = vmatpush.msra.mxu0 0.0
      %714 = vmatpush.msra.mxu0 0.0
      %715 = vmatpush.msra.mxu0 0.0
      %716 = vmatpush.msra.mxu0 0.0
      %717 = vmatpush.msra.mxu0 0.0
      %718 = vmatpush.msra.mxu0 %v291
      %719 = vmatpush.msra.mxu0 %v289
      %720 = vmatmul.f32.gmra.mxu0 %v693
      %v721 = vpop.f32.mrf.mxu0
      %v722 = vadd.f32 0.0, %v721
      %723 = vmatmul.f32.gmra.mxu0 %v696
      %v724 = vpop.f32.mrf.mxu0
      %v725 = vadd.f32 0.0, %v724
      %726 = vmatmul.f32.gmra.mxu0 %v699
      %v727 = vpop.f32.mrf.mxu0
      %v728 = vadd.f32 0.0, %v727
      %729 = vmatmul.f32.gmra.mxu0 %v702
      %v730 = vpop.f32.mrf.mxu0
      %v731 = vadd.f32 0.0, %v730
      %732 = vdwg.mxu0
      %733 = vmatpush.msra.mxu0 0.0
      %734 = vmatpush.msra.mxu0 0.0
      %735 = vmatpush.msra.mxu0 0.0
      %736 = vmatpush.msra.mxu0 0.0
      %737 = vmatpush.msra.mxu0 0.0
      %738 = vmatpush.msra.mxu0 0.0
      %739 = vmatpush.msra.mxu0 0.0
      %740 = vmatpush.msra.mxu0 0.0
      %741 = vmatpush.msra.mxu0 0.0
      %742 = vmatpush.msra.mxu0 0.0
      %743 = vmatpush.msra.mxu0 0.0
      %744 = vmatpush.msra.mxu0 0.0
      %745 = vmatpush.msra.mxu0 0.0
      %746 = vmatpush.msra.mxu0 0.0
      %747 = vmatpush.msra.mxu0 %v292
      %748 = vmatpush.msra.mxu0 %v290
      %749 = vmatmul.f32.gmra.mxu0 %v693
      %v750 = vpop.f32.mrf.mxu0
      %v751 = vadd.f32 0.0, %v750
      %752 = vmatmul.f32.gmra.mxu0 %v696
      %v753 = vpop.f32.mrf.mxu0
      %v754 = vadd.f32 0.0, %v753
      %755 = vmatmul.f32.gmra.mxu0 %v699
      %v756 = vpop.f32.mrf.mxu0
      %v757 = vadd.f32 0.0, %v756
      %758 = vmatmul.f32.gmra.mxu0 %v702
      %v759 = vpop.f32.mrf.mxu0
      %v760 = vadd.f32 0.0, %v759
      %761 = vdwg.mxu0
      %v762 = vadd.f32 %v679, %v722
      %v763 = vadd.f32 %v680, %v751
      %v764 = vadd.f32 %v681, %v725
      %v765 = vadd.f32 %v682, %v754
      %v766 = vadd.f32 %v683, %v728
      %v767 = vadd.f32 %v684, %v757
      %v768 = vadd.f32 %v685, %v731
      %v769 = vadd.f32 %v686, %v760
      %770 = vrot.lane.b32.xlu0 %v289, 127
      %v771 = vpop.permute.xlu0 %770
      %772 = vrot.lane.b32.xlu0 %v291, 127
      %v773 = vpop.permute.xlu0 %772
      %774 = vrot.lane.b32.xlu0 %v290, 127
      %v775 = vpop.permute.xlu0 %774
      %776 = vrot.lane.b32.xlu0 %v292, 127
      %v777 = vpop.permute.xlu0 %776
      %vm778 = vcmp.lt.s32.totalorder %v302, 127
      %v779 = vsel %vm778, %v771, %v775
      %v780 = vsel %vm778, %v773, %v777
      %v781 = vsel %vm778, %v775, %v771
      %v782 = vsel %vm778, %v777, %v773
      %v783 = vperm.slane %v285, 5
      %v784 = vperm.slane %v286, 5
      %v785 = vmul.f32 %v779, %v783
      %v786 = vmul.f32 %v781, %v784
      %v787 = vmul.f32 %v780, %v783
      %v788 = vmul.f32 %v782, %v784
      %s789 = scalar_lea.vmem %s3, 160
      %v790 = vld [vmem:[%s789] sm:$0xff]
      %v791 = vld [vmem:[%s789 + $0x8] sm:$0xff]
      %v792 = vld [vmem:[%s789 + $0x10] sm:$0xff]
      %v793 = vld [vmem:[%s789 + $0x18] sm:$0xff]
      %v795 = vsel %vm342, %v790, 0
      %v798 = vsel %vm342, %v791, 0
      %v801 = vsel %vm342, %v792, 0
      %v804 = vsel %vm342, %v793, 0
      %806 = vmatpush.msra.mxu0 0.0
      %807 = vmatpush.msra.mxu0 0.0
      %808 = vmatpush.msra.mxu0 0.0
      %809 = vmatpush.msra.mxu0 0.0
      %810 = vmatpush.msra.mxu0 0.0
      %811 = vmatpush.msra.mxu0 0.0
      %812 = vmatpush.msra.mxu0 0.0
      %813 = vmatpush.msra.mxu0 0.0
      %814 = vmatpush.msra.mxu0 0.0
      %815 = vmatpush.msra.mxu0 0.0
      %816 = vmatpush.msra.mxu0 0.0
      %817 = vmatpush.msra.mxu0 0.0
      %818 = vmatpush.msra.mxu0 0.0
      %819 = vmatpush.msra.mxu0 0.0
      %820 = vmatpush.msra.mxu0 %v787
      %821 = vmatpush.msra.mxu0 %v785
      %822 = vmatmul.f32.gmra.mxu0 %v795
      %v823 = vpop.f32.mrf.mxu0
      %v824 = vadd.f32 0.0, %v823
      %825 = vmatmul.f32.gmra.mxu0 %v798
      %v826 = vpop.f32.mrf.mxu0
      %v827 = vadd.f32 0.0, %v826
      %828 = vmatmul.f32.gmra.mxu0 %v801
      %v829 = vpop.f32.mrf.mxu0
      %v830 = vadd.f32 0.0, %v829
      %831 = vmatmul.f32.gmra.mxu0 %v804
      %v832 = vpop.f32.mrf.mxu0
      %v833 = vadd.f32 0.0, %v832
      %834 = vdwg.mxu0
      %835 = vmatpush.msra.mxu0 0.0
      %836 = vmatpush.msra.mxu0 0.0
      %837 = vmatpush.msra.mxu0 0.0
      %838 = vmatpush.msra.mxu0 0.0
      %839 = vmatpush.msra.mxu0 0.0
      %840 = vmatpush.msra.mxu0 0.0
      %841 = vmatpush.msra.mxu0 0.0
      %842 = vmatpush.msra.mxu0 0.0
      %843 = vmatpush.msra.mxu0 0.0
      %844 = vmatpush.msra.mxu0 0.0
      %845 = vmatpush.msra.mxu0 0.0
      %846 = vmatpush.msra.mxu0 0.0
      %847 = vmatpush.msra.mxu0 0.0
      %848 = vmatpush.msra.mxu0 0.0
      %849 = vmatpush.msra.mxu0 %v788
      %850 = vmatpush.msra.mxu0 %v786
      %851 = vmatmul.f32.gmra.mxu0 %v795
      %v852 = vpop.f32.mrf.mxu0
      %v853 = vadd.f32 0.0, %v852
      %854 = vmatmul.f32.gmra.mxu0 %v798
      %v855 = vpop.f32.mrf.mxu0
      %v856 = vadd.f32 0.0, %v855
      %857 = vmatmul.f32.gmra.mxu0 %v801
      %v858 = vpop.f32.mrf.mxu0
      %v859 = vadd.f32 0.0, %v858
      %860 = vmatmul.f32.gmra.mxu0 %v804
      %v861 = vpop.f32.mrf.mxu0
      %v862 = vadd.f32 0.0, %v861
      %863 = vdwg.mxu0
      %v864 = vadd.f32 %v762, %v824
      %v865 = vadd.f32 %v763, %v853
      %v866 = vadd.f32 %v764, %v827
      %v867 = vadd.f32 %v765, %v856
      %v868 = vadd.f32 %v766, %v830
      %v869 = vadd.f32 %v767, %v859
      %v870 = vadd.f32 %v768, %v833
      %v871 = vadd.f32 %v769, %v862
      %872 = vrot.lane.b32.xlu0 %v289, 113
      %v873 = vpop.permute.xlu0 %872
      %874 = vrot.lane.b32.xlu0 %v291, 113
      %v875 = vpop.permute.xlu0 %874
      %876 = vrot.lane.b32.xlu0 %v290, 113
      %v877 = vpop.permute.xlu0 %876
      %878 = vrot.lane.b32.xlu0 %v292, 113
      %v879 = vpop.permute.xlu0 %878
      %vm880 = vcmp.lt.s32.totalorder %v302, 113
      %v881 = vsel %vm880, %v873, %v877
      %v882 = vsel %vm880, %v875, %v879
      %v883 = vsel %vm880, %v877, %v873
      %v884 = vsel %vm880, %v879, %v875
      %v885 = vperm.slane %v285, 6
      %v886 = vperm.slane %v286, 6
      %v887 = vmul.f32 %v881, %v885
      %v888 = vmul.f32 %v883, %v886
      %v889 = vmul.f32 %v882, %v885
      %v890 = vmul.f32 %v884, %v886
      %s891 = scalar_lea.vmem %s3, 192
      %v892 = vld [vmem:[%s891] sm:$0xff]
      %v893 = vld [vmem:[%s891 + $0x8] sm:$0xff]
      %v894 = vld [vmem:[%s891 + $0x10] sm:$0xff]
      %v895 = vld [vmem:[%s891 + $0x18] sm:$0xff]
      %v897 = vsel %vm342, %v892, 0
      %v900 = vsel %vm342, %v893, 0
      %v903 = vsel %vm342, %v894, 0
      %v906 = vsel %vm342, %v895, 0
      %908 = vmatpush.msra.mxu0 0.0
      %909 = vmatpush.msra.mxu0 0.0
      %910 = vmatpush.msra.mxu0 0.0
      %911 = vmatpush.msra.mxu0 0.0
      %912 = vmatpush.msra.mxu0 0.0
      %913 = vmatpush.msra.mxu0 0.0
      %914 = vmatpush.msra.mxu0 0.0
      %915 = vmatpush.msra.mxu0 0.0
      %916 = vmatpush.msra.mxu0 0.0
      %917 = vmatpush.msra.mxu0 0.0
      %918 = vmatpush.msra.mxu0 0.0
      %919 = vmatpush.msra.mxu0 0.0
      %920 = vmatpush.msra.mxu0 0.0
      %921 = vmatpush.msra.mxu0 0.0
      %922 = vmatpush.msra.mxu0 %v889
      %923 = vmatpush.msra.mxu0 %v887
      %924 = vmatmul.f32.gmra.mxu0 %v897
      %v925 = vpop.f32.mrf.mxu0
      %v926 = vadd.f32 0.0, %v925
      %927 = vmatmul.f32.gmra.mxu0 %v900
      %v928 = vpop.f32.mrf.mxu0
      %v929 = vadd.f32 0.0, %v928
      %930 = vmatmul.f32.gmra.mxu0 %v903
      %v931 = vpop.f32.mrf.mxu0
      %v932 = vadd.f32 0.0, %v931
      %933 = vmatmul.f32.gmra.mxu0 %v906
      %v934 = vpop.f32.mrf.mxu0
      %v935 = vadd.f32 0.0, %v934
      %936 = vdwg.mxu0
      %937 = vmatpush.msra.mxu0 0.0
      %938 = vmatpush.msra.mxu0 0.0
      %939 = vmatpush.msra.mxu0 0.0
      %940 = vmatpush.msra.mxu0 0.0
      %941 = vmatpush.msra.mxu0 0.0
      %942 = vmatpush.msra.mxu0 0.0
      %943 = vmatpush.msra.mxu0 0.0
      %944 = vmatpush.msra.mxu0 0.0
      %945 = vmatpush.msra.mxu0 0.0
      %946 = vmatpush.msra.mxu0 0.0
      %947 = vmatpush.msra.mxu0 0.0
      %948 = vmatpush.msra.mxu0 0.0
      %949 = vmatpush.msra.mxu0 0.0
      %950 = vmatpush.msra.mxu0 0.0
      %951 = vmatpush.msra.mxu0 %v890
      %952 = vmatpush.msra.mxu0 %v888
      %953 = vmatmul.f32.gmra.mxu0 %v897
      %v954 = vpop.f32.mrf.mxu0
      %v955 = vadd.f32 0.0, %v954
      %956 = vmatmul.f32.gmra.mxu0 %v900
      %v957 = vpop.f32.mrf.mxu0
      %v958 = vadd.f32 0.0, %v957
      %959 = vmatmul.f32.gmra.mxu0 %v903
      %v960 = vpop.f32.mrf.mxu0
      %v961 = vadd.f32 0.0, %v960
      %962 = vmatmul.f32.gmra.mxu0 %v906
      %v963 = vpop.f32.mrf.mxu0
      %v964 = vadd.f32 0.0, %v963
      %965 = vdwg.mxu0
      %v966 = vadd.f32 %v864, %v926
      %v967 = vadd.f32 %v865, %v955
      %v968 = vadd.f32 %v866, %v929
      %v969 = vadd.f32 %v867, %v958
      %v970 = vadd.f32 %v868, %v932
      %v971 = vadd.f32 %v869, %v961
      %v972 = vadd.f32 %v870, %v935
      %v973 = vadd.f32 %v871, %v964
      %974 = vrot.lane.b32.xlu0 %v289, 112
      %v975 = vpop.permute.xlu0 %974
      %976 = vrot.lane.b32.xlu0 %v291, 112
      %v977 = vpop.permute.xlu0 %976
      %978 = vrot.lane.b32.xlu0 %v290, 112
      %v979 = vpop.permute.xlu0 %978
      %980 = vrot.lane.b32.xlu0 %v292, 112
      %v981 = vpop.permute.xlu0 %980
      %vm982 = vcmp.lt.s32.totalorder %v302, 112
      %v983 = vsel %vm982, %v975, %v979
      %v984 = vsel %vm982, %v977, %v981
      %v985 = vsel %vm982, %v979, %v975
      %v986 = vsel %vm982, %v981, %v977
      %v987 = vperm.slane %v285, 7
      %v988 = vperm.slane %v286, 7
      %v989 = vmul.f32 %v983, %v987
      %v990 = vmul.f32 %v985, %v988
      %v991 = vmul.f32 %v984, %v987
      %v992 = vmul.f32 %v986, %v988
      %s993 = scalar_lea.vmem %s3, 224
      %v994 = vld [vmem:[%s993] sm:$0xff]
      %v995 = vld [vmem:[%s993 + $0x8] sm:$0xff]
      %v996 = vld [vmem:[%s993 + $0x10] sm:$0xff]
      %v997 = vld [vmem:[%s993 + $0x18] sm:$0xff]
      %v999 = vsel %vm342, %v994, 0
      %v1002 = vsel %vm342, %v995, 0
      %v1005 = vsel %vm342, %v996, 0
      %v1008 = vsel %vm342, %v997, 0
      %1010 = vmatpush.msra.mxu0 0.0
      %1011 = vmatpush.msra.mxu0 0.0
      %1012 = vmatpush.msra.mxu0 0.0
      %1013 = vmatpush.msra.mxu0 0.0
      %1014 = vmatpush.msra.mxu0 0.0
      %1015 = vmatpush.msra.mxu0 0.0
      %1016 = vmatpush.msra.mxu0 0.0
      %1017 = vmatpush.msra.mxu0 0.0
      %1018 = vmatpush.msra.mxu0 0.0
      %1019 = vmatpush.msra.mxu0 0.0
      %1020 = vmatpush.msra.mxu0 0.0
      %1021 = vmatpush.msra.mxu0 0.0
      %1022 = vmatpush.msra.mxu0 0.0
      %1023 = vmatpush.msra.mxu0 0.0
      %1024 = vmatpush.msra.mxu0 %v991
      %1025 = vmatpush.msra.mxu0 %v989
      %1026 = vmatmul.f32.gmra.mxu0 %v999
      %v1027 = vpop.f32.mrf.mxu0
      %v1028 = vadd.f32 0.0, %v1027
      %1029 = vmatmul.f32.gmra.mxu0 %v1002
      %v1030 = vpop.f32.mrf.mxu0
      %v1031 = vadd.f32 0.0, %v1030
      %1032 = vmatmul.f32.gmra.mxu0 %v1005
      %v1033 = vpop.f32.mrf.mxu0
      %v1034 = vadd.f32 0.0, %v1033
      %1035 = vmatmul.f32.gmra.mxu0 %v1008
      %v1036 = vpop.f32.mrf.mxu0
      %v1037 = vadd.f32 0.0, %v1036
      %1038 = vdwg.mxu0
      %1039 = vmatpush.msra.mxu0 0.0
      %1040 = vmatpush.msra.mxu0 0.0
      %1041 = vmatpush.msra.mxu0 0.0
      %1042 = vmatpush.msra.mxu0 0.0
      %1043 = vmatpush.msra.mxu0 0.0
      %1044 = vmatpush.msra.mxu0 0.0
      %1045 = vmatpush.msra.mxu0 0.0
      %1046 = vmatpush.msra.mxu0 0.0
      %1047 = vmatpush.msra.mxu0 0.0
      %1048 = vmatpush.msra.mxu0 0.0
      %1049 = vmatpush.msra.mxu0 0.0
      %1050 = vmatpush.msra.mxu0 0.0
      %1051 = vmatpush.msra.mxu0 0.0
      %1052 = vmatpush.msra.mxu0 0.0
      %1053 = vmatpush.msra.mxu0 %v992
      %1054 = vmatpush.msra.mxu0 %v990
      %1055 = vmatmul.f32.gmra.mxu0 %v999
      %v1056 = vpop.f32.mrf.mxu0
      %v1057 = vadd.f32 0.0, %v1056
      %1058 = vmatmul.f32.gmra.mxu0 %v1002
      %v1059 = vpop.f32.mrf.mxu0
      %v1060 = vadd.f32 0.0, %v1059
      %1061 = vmatmul.f32.gmra.mxu0 %v1005
      %v1062 = vpop.f32.mrf.mxu0
      %v1063 = vadd.f32 0.0, %v1062
      %1064 = vmatmul.f32.gmra.mxu0 %v1008
      %v1065 = vpop.f32.mrf.mxu0
      %v1066 = vadd.f32 0.0, %v1065
      %1067 = vdwg.mxu0
      %v1068 = vadd.f32 %v966, %v1028
      %v1069 = vadd.f32 %v967, %v1057
      %v1070 = vadd.f32 %v968, %v1031
      %v1071 = vadd.f32 %v969, %v1060
      %v1072 = vadd.f32 %v970, %v1034
      %v1073 = vadd.f32 %v971, %v1063
      %v1074 = vadd.f32 %v972, %v1037
      %v1075 = vadd.f32 %v973, %v1066
      %1076 = vrot.lane.b32.xlu0 %v289, 111
      %v1077 = vpop.permute.xlu0 %1076
      %1078 = vrot.lane.b32.xlu0 %v291, 111
      %v1079 = vpop.permute.xlu0 %1078
      %1080 = vrot.lane.b32.xlu0 %v290, 111
      %v1081 = vpop.permute.xlu0 %1080
      %1082 = vrot.lane.b32.xlu0 %v292, 111
      %v1083 = vpop.permute.xlu0 %1082
      %vm1084 = vcmp.lt.s32.totalorder %v302, 111
      %v1085 = vsel %vm1084, %v1077, %v1081
      %v1086 = vsel %vm1084, %v1079, %v1083
      %v1087 = vsel %vm1084, %v1081, %v1077
      %v1088 = vsel %vm1084, %v1083, %v1079
      %v1089 = vperm.slane %v287, 0
      %v1090 = vperm.slane %v288, 0
      %v1091 = vmul.f32 %v1085, %v1089
      %v1092 = vmul.f32 %v1087, %v1090
      %v1093 = vmul.f32 %v1086, %v1089
      %v1094 = vmul.f32 %v1088, %v1090
      %s1095 = scalar_lea.vmem %s3, 256
      %v1096 = vld [vmem:[%s1095] sm:$0xff]
      %v1097 = vld [vmem:[%s1095 + $0x8] sm:$0xff]
      %v1098 = vld [vmem:[%s1095 + $0x10] sm:$0xff]
      %v1099 = vld [vmem:[%s1095 + $0x18] sm:$0xff]
      %v1101 = vsel %vm342, %v1096, 0
      %v1104 = vsel %vm342, %v1097, 0
      %v1107 = vsel %vm342, %v1098, 0
      %v1110 = vsel %vm342, %v1099, 0
      %1112 = vmatpush.msra.mxu0 0.0
      %1113 = vmatpush.msra.mxu0 0.0
      %1114 = vmatpush.msra.mxu0 0.0
      %1115 = vmatpush.msra.mxu0 0.0
      %1116 = vmatpush.msra.mxu0 0.0
      %1117 = vmatpush.msra.mxu0 0.0
      %1118 = vmatpush.msra.mxu0 0.0
      %1119 = vmatpush.msra.mxu0 0.0
      %1120 = vmatpush.msra.mxu0 0.0
      %1121 = vmatpush.msra.mxu0 0.0
      %1122 = vmatpush.msra.mxu0 0.0
      %1123 = vmatpush.msra.mxu0 0.0
      %1124 = vmatpush.msra.mxu0 0.0
      %1125 = vmatpush.msra.mxu0 0.0
      %1126 = vmatpush.msra.mxu0 %v1093
      %1127 = vmatpush.msra.mxu0 %v1091
      %1128 = vmatmul.f32.gmra.mxu0 %v1101
      %v1129 = vpop.f32.mrf.mxu0
      %v1130 = vadd.f32 0.0, %v1129
      %1131 = vmatmul.f32.gmra.mxu0 %v1104
      %v1132 = vpop.f32.mrf.mxu0
      %v1133 = vadd.f32 0.0, %v1132
      %1134 = vmatmul.f32.gmra.mxu0 %v1107
      %v1135 = vpop.f32.mrf.mxu0
      %v1136 = vadd.f32 0.0, %v1135
      %1137 = vmatmul.f32.gmra.mxu0 %v1110
      %v1138 = vpop.f32.mrf.mxu0
      %v1139 = vadd.f32 0.0, %v1138
      %1140 = vdwg.mxu0
      %1141 = vmatpush.msra.mxu0 0.0
      %1142 = vmatpush.msra.mxu0 0.0
      %1143 = vmatpush.msra.mxu0 0.0
      %1144 = vmatpush.msra.mxu0 0.0
      %1145 = vmatpush.msra.mxu0 0.0
      %1146 = vmatpush.msra.mxu0 0.0
      %1147 = vmatpush.msra.mxu0 0.0
      %1148 = vmatpush.msra.mxu0 0.0
      %1149 = vmatpush.msra.mxu0 0.0
      %1150 = vmatpush.msra.mxu0 0.0
      %1151 = vmatpush.msra.mxu0 0.0
      %1152 = vmatpush.msra.mxu0 0.0
      %1153 = vmatpush.msra.mxu0 0.0
      %1154 = vmatpush.msra.mxu0 0.0
      %1155 = vmatpush.msra.mxu0 %v1094
      %1156 = vmatpush.msra.mxu0 %v1092
      %1157 = vmatmul.f32.gmra.mxu0 %v1101
      %v1158 = vpop.f32.mrf.mxu0
      %v1159 = vadd.f32 0.0, %v1158
      %1160 = vmatmul.f32.gmra.mxu0 %v1104
      %v1161 = vpop.f32.mrf.mxu0
      %v1162 = vadd.f32 0.0, %v1161
      %1163 = vmatmul.f32.gmra.mxu0 %v1107
      %v1164 = vpop.f32.mrf.mxu0
      %v1165 = vadd.f32 0.0, %v1164
      %1166 = vmatmul.f32.gmra.mxu0 %v1110
      %v1167 = vpop.f32.mrf.mxu0
      %v1168 = vadd.f32 0.0, %v1167
      %1169 = vdwg.mxu0
      %v1170 = vadd.f32 %v1068, %v1130
      %v1171 = vadd.f32 %v1069, %v1159
      %v1172 = vadd.f32 %v1070, %v1133
      %v1173 = vadd.f32 %v1071, %v1162
      %v1174 = vadd.f32 %v1072, %v1136
      %v1175 = vadd.f32 %v1073, %v1165
      %v1176 = vadd.f32 %v1074, %v1139
      %v1177 = vadd.f32 %v1075, %v1168
      %v1178 = vld [vmem:[%s274] sm:$0xff]
      %v1179 = vld [vmem:[%s274 + $0x8] sm:$0xff]
      %v1180 = vld [vmem:[%s274 + $0x10] sm:$0xff]
      %v1181 = vld [vmem:[%s274 + $0x18] sm:$0xff]
      %v1182 = vld [vmem:[%s274 + $0x20] sm:$0xff]
      %v1183 = vld [vmem:[%s274 + $0x28] sm:$0xff]
      %v1184 = vld [vmem:[%s274 + $0x30] sm:$0xff]
      %v1185 = vld [vmem:[%s274 + $0x38] sm:$0xff]
      %1186 = vrot.lane.b32.xlu0 %v1178, 17
      %v1187 = vpop.permute.xlu0 %1186
      %1188 = vrot.lane.b32.xlu0 %v1180, 17
      %v1189 = vpop.permute.xlu0 %1188
      %1190 = vrot.lane.b32.xlu0 %v1182, 17
      %v1191 = vpop.permute.xlu0 %1190
      %1192 = vrot.lane.b32.xlu0 %v1184, 17
      %v1193 = vpop.permute.xlu0 %1192
      %1194 = vrot.lane.b32.xlu0 %v1179, 17
      %v1195 = vpop.permute.xlu0 %1194
      %1196 = vrot.lane.b32.xlu0 %v1181, 17
      %v1197 = vpop.permute.xlu0 %1196
      %1198 = vrot.lane.b32.xlu0 %v1183, 17
      %v1199 = vpop.permute.xlu0 %1198
      %1200 = vrot.lane.b32.xlu0 %v1185, 17
      %v1201 = vpop.permute.xlu0 %1200
      %v1202 = vsel %vm303, %v1187, %v1195
      %v1203 = vsel %vm303, %v1189, %v1197
      %v1204 = vsel %vm303, %v1191, %v1199
      %v1205 = vsel %vm303, %v1193, %v1201
      %v1206 = vsel %vm303, %v1195, %v1187
      %v1207 = vsel %vm303, %v1197, %v1189
      %v1208 = vsel %vm303, %v1199, %v1191
      %v1209 = vsel %vm303, %v1201, %v1193
      %v1210 = vmul.f32 %v1206, %v308
      %v1211 = vmul.f32 %v1202, %v309
      %v1212 = vmul.f32 %v1207, %v308
      %v1213 = vmul.f32 %v1203, %v309
      %v1214 = vmul.f32 %v1208, %v308
      %v1215 = vmul.f32 %v1204, %v309
      %v1216 = vmul.f32 %v1209, %v308
      %v1217 = vmul.f32 %v1205, %v309
      %v1218 = vld [vmem:[%s4] sm:$0xff]
      %v1219 = vld [vmem:[%s4 + $0x8] sm:$0xff]
      %v1220 = vld [vmem:[%s4 + $0x10] sm:$0xff]
      %v1221 = vld [vmem:[%s4 + $0x18] sm:$0xff]
      %vm1222 = vcmask 261120
      %v1224 = vsel %vm1222, %v1218, 0
      %v1227 = vsel %vm1222, %v1219, 0
      %v1230 = vsel %vm1222, %v1220, 0
      %v1233 = vsel %vm1222, %v1221, 0
      %1235 = vmatpush.msra.mxu0 0.0
      %1236 = vmatpush.msra.mxu0 0.0
      %1237 = vmatpush.msra.mxu0 0.0
      %1238 = vmatpush.msra.mxu0 0.0
      %1239 = vmatpush.msra.mxu0 0.0
      %1240 = vmatpush.msra.mxu0 0.0
      %1241 = vmatpush.msra.mxu0 0.0
      %1242 = vmatpush.msra.mxu0 0.0
      %1243 = vmatpush.msra.mxu0 0.0
      %1244 = vmatpush.msra.mxu0 0.0
      %1245 = vmatpush.msra.mxu0 0.0
      %1246 = vmatpush.msra.mxu0 0.0
      %1247 = vmatpush.msra.mxu0 %v1216
      %1248 = vmatpush.msra.mxu0 %v1214
      %1249 = vmatpush.msra.mxu0 %v1212
      %1250 = vmatpush.msra.mxu0 %v1210
      %1251 = vmatmul.f32.gmra.mxu0 %v1224
      %v1252 = vpop.f32.mrf.mxu0
      %v1253 = vadd.f32 0.0, %v1252
      %1254 = vmatmul.f32.gmra.mxu0 %v1227
      %v1255 = vpop.f32.mrf.mxu0
      %v1256 = vadd.f32 0.0, %v1255
      %1257 = vmatmul.f32.gmra.mxu0 %v1230
      %v1258 = vpop.f32.mrf.mxu0
      %v1259 = vadd.f32 0.0, %v1258
      %1260 = vmatmul.f32.gmra.mxu0 %v1233
      %v1261 = vpop.f32.mrf.mxu0
      %v1262 = vadd.f32 0.0, %v1261
      %1263 = vdwg.mxu0
      %1264 = vmatpush.msra.mxu0 0.0
      %1265 = vmatpush.msra.mxu0 0.0
      %1266 = vmatpush.msra.mxu0 0.0
      %1267 = vmatpush.msra.mxu0 0.0
      %1268 = vmatpush.msra.mxu0 0.0
      %1269 = vmatpush.msra.mxu0 0.0
      %1270 = vmatpush.msra.mxu0 0.0
      %1271 = vmatpush.msra.mxu0 0.0
      %1272 = vmatpush.msra.mxu0 0.0
      %1273 = vmatpush.msra.mxu0 0.0
      %1274 = vmatpush.msra.mxu0 0.0
      %1275 = vmatpush.msra.mxu0 0.0
      %1276 = vmatpush.msra.mxu0 %v1217
      %1277 = vmatpush.msra.mxu0 %v1215
      %1278 = vmatpush.msra.mxu0 %v1213
      %1279 = vmatpush.msra.mxu0 %v1211
      %1280 = vmatmul.f32.gmra.mxu0 %v1224
      %v1281 = vpop.f32.mrf.mxu0
      %v1282 = vadd.f32 0.0, %v1281
      %1283 = vmatmul.f32.gmra.mxu0 %v1227
      %v1284 = vpop.f32.mrf.mxu0
      %v1285 = vadd.f32 0.0, %v1284
      %1286 = vmatmul.f32.gmra.mxu0 %v1230
      %v1287 = vpop.f32.mrf.mxu0
      %v1288 = vadd.f32 0.0, %v1287
      %1289 = vmatmul.f32.gmra.mxu0 %v1233
      %v1290 = vpop.f32.mrf.mxu0
      %v1291 = vadd.f32 0.0, %v1290
      %1292 = vdwg.mxu0
      %v1293 = vadd.f32 %v1170, %v1253
      %v1294 = vadd.f32 %v1171, %v1282
      %v1295 = vadd.f32 %v1172, %v1256
      %v1296 = vadd.f32 %v1173, %v1285
      %v1297 = vadd.f32 %v1174, %v1259
      %v1298 = vadd.f32 %v1175, %v1288
      %v1299 = vadd.f32 %v1176, %v1262
      %v1300 = vadd.f32 %v1177, %v1291
      %1301 = vrot.lane.b32.xlu0 %v1178, 16
      %v1302 = vpop.permute.xlu0 %1301
      %1303 = vrot.lane.b32.xlu0 %v1180, 16
      %v1304 = vpop.permute.xlu0 %1303
      %1305 = vrot.lane.b32.xlu0 %v1182, 16
      %v1306 = vpop.permute.xlu0 %1305
      %1307 = vrot.lane.b32.xlu0 %v1184, 16
      %v1308 = vpop.permute.xlu0 %1307
      %1309 = vrot.lane.b32.xlu0 %v1179, 16
      %v1310 = vpop.permute.xlu0 %1309
      %1311 = vrot.lane.b32.xlu0 %v1181, 16
      %v1312 = vpop.permute.xlu0 %1311
      %1313 = vrot.lane.b32.xlu0 %v1183, 16
      %v1314 = vpop.permute.xlu0 %1313
      %1315 = vrot.lane.b32.xlu0 %v1185, 16
      %v1316 = vpop.permute.xlu0 %1315
      %v1317 = vsel %vm326, %v1302, %v1310
      %v1318 = vsel %vm326, %v1304, %v1312
      %v1319 = vsel %vm326, %v1306, %v1314
      %v1320 = vsel %vm326, %v1308, %v1316
      %v1321 = vsel %vm326, %v1310, %v1302
      %v1322 = vsel %vm326, %v1312, %v1304
      %v1323 = vsel %vm326, %v1314, %v1306
      %v1324 = vsel %vm326, %v1316, %v1308
      %v1325 = vmul.f32 %v1321, %v331
      %v1326 = vmul.f32 %v1317, %v332
      %v1327 = vmul.f32 %v1322, %v331
      %v1328 = vmul.f32 %v1318, %v332
      %v1329 = vmul.f32 %v1323, %v331
      %v1330 = vmul.f32 %v1319, %v332
      %v1331 = vmul.f32 %v1324, %v331
      %v1332 = vmul.f32 %v1320, %v332
      %s1333 = scalar_lea.vmem %s4, 32
      %v1334 = vld [vmem:[%s1333] sm:$0xff]
      %v1335 = vld [vmem:[%s1333 + $0x8] sm:$0xff]
      %v1336 = vld [vmem:[%s1333 + $0x10] sm:$0xff]
      %v1337 = vld [vmem:[%s1333 + $0x18] sm:$0xff]
      %v1339 = vsel %vm1222, %v1334, 0
      %v1342 = vsel %vm1222, %v1335, 0
      %v1345 = vsel %vm1222, %v1336, 0
      %v1348 = vsel %vm1222, %v1337, 0
      %1350 = vmatpush.msra.mxu0 0.0
      %1351 = vmatpush.msra.mxu0 0.0
      %1352 = vmatpush.msra.mxu0 0.0
      %1353 = vmatpush.msra.mxu0 0.0
      %1354 = vmatpush.msra.mxu0 0.0
      %1355 = vmatpush.msra.mxu0 0.0
      %1356 = vmatpush.msra.mxu0 0.0
      %1357 = vmatpush.msra.mxu0 0.0
      %1358 = vmatpush.msra.mxu0 0.0
      %1359 = vmatpush.msra.mxu0 0.0
      %1360 = vmatpush.msra.mxu0 0.0
      %1361 = vmatpush.msra.mxu0 0.0
      %1362 = vmatpush.msra.mxu0 %v1331
      %1363 = vmatpush.msra.mxu0 %v1329
      %1364 = vmatpush.msra.mxu0 %v1327
      %1365 = vmatpush.msra.mxu0 %v1325
      %1366 = vmatmul.f32.gmra.mxu0 %v1339
      %v1367 = vpop.f32.mrf.mxu0
      %v1368 = vadd.f32 0.0, %v1367
      %1369 = vmatmul.f32.gmra.mxu0 %v1342
      %v1370 = vpop.f32.mrf.mxu0
      %v1371 = vadd.f32 0.0, %v1370
      %1372 = vmatmul.f32.gmra.mxu0 %v1345
      %v1373 = vpop.f32.mrf.mxu0
      %v1374 = vadd.f32 0.0, %v1373
      %1375 = vmatmul.f32.gmra.mxu0 %v1348
      %v1376 = vpop.f32.mrf.mxu0
      %v1377 = vadd.f32 0.0, %v1376
      %1378 = vdwg.mxu0
      %1379 = vmatpush.msra.mxu0 0.0
      %1380 = vmatpush.msra.mxu0 0.0
      %1381 = vmatpush.msra.mxu0 0.0
      %1382 = vmatpush.msra.mxu0 0.0
      %1383 = vmatpush.msra.mxu0 0.0
      %1384 = vmatpush.msra.mxu0 0.0
      %1385 = vmatpush.msra.mxu0 0.0
      %1386 = vmatpush.msra.mxu0 0.0
      %1387 = vmatpush.msra.mxu0 0.0
      %1388 = vmatpush.msra.mxu0 0.0
      %1389 = vmatpush.msra.mxu0 0.0
      %1390 = vmatpush.msra.mxu0 0.0
      %1391 = vmatpush.msra.mxu0 %v1332
      %1392 = vmatpush.msra.mxu0 %v1330
      %1393 = vmatpush.msra.mxu0 %v1328
      %1394 = vmatpush.msra.mxu0 %v1326
      %1395 = vmatmul.f32.gmra.mxu0 %v1339
      %v1396 = vpop.f32.mrf.mxu0
      %v1397 = vadd.f32 0.0, %v1396
      %1398 = vmatmul.f32.gmra.mxu0 %v1342
      %v1399 = vpop.f32.mrf.mxu0
      %v1400 = vadd.f32 0.0, %v1399
      %1401 = vmatmul.f32.gmra.mxu0 %v1345
      %v1402 = vpop.f32.mrf.mxu0
      %v1403 = vadd.f32 0.0, %v1402
      %1404 = vmatmul.f32.gmra.mxu0 %v1348
      %v1405 = vpop.f32.mrf.mxu0
      %v1406 = vadd.f32 0.0, %v1405
      %1407 = vdwg.mxu0
      %v1408 = vadd.f32 %v1293, %v1368
      %v1409 = vadd.f32 %v1294, %v1397
      %v1410 = vadd.f32 %v1295, %v1371
      %v1411 = vadd.f32 %v1296, %v1400
      %v1412 = vadd.f32 %v1297, %v1374
      %v1413 = vadd.f32 %v1298, %v1403
      %v1414 = vadd.f32 %v1299, %v1377
      %v1415 = vadd.f32 %v1300, %v1406
      %1416 = vrot.lane.b32.xlu0 %v1178, 15
      %v1417 = vpop.permute.xlu0 %1416
      %1418 = vrot.lane.b32.xlu0 %v1180, 15
      %v1419 = vpop.permute.xlu0 %1418
      %1420 = vrot.lane.b32.xlu0 %v1182, 15
      %v1421 = vpop.permute.xlu0 %1420
      %1422 = vrot.lane.b32.xlu0 %v1184, 15
      %v1423 = vpop.permute.xlu0 %1422
      %1424 = vrot.lane.b32.xlu0 %v1179, 15
      %v1425 = vpop.permute.xlu0 %1424
      %1426 = vrot.lane.b32.xlu0 %v1181, 15
      %v1427 = vpop.permute.xlu0 %1426
      %1428 = vrot.lane.b32.xlu0 %v1183, 15
      %v1429 = vpop.permute.xlu0 %1428
      %1430 = vrot.lane.b32.xlu0 %v1185, 15
      %v1431 = vpop.permute.xlu0 %1430
      %v1432 = vsel %vm491, %v1417, %v1425
      %v1433 = vsel %vm491, %v1419, %v1427
      %v1434 = vsel %vm491, %v1421, %v1429
      %v1435 = vsel %vm491, %v1423, %v1431
      %v1436 = vsel %vm491, %v1425, %v1417
      %v1437 = vsel %vm491, %v1427, %v1419
      %v1438 = vsel %vm491, %v1429, %v1421
      %v1439 = vsel %vm491, %v1431, %v1423
      %v1440 = vmul.f32 %v1436, %v496
      %v1441 = vmul.f32 %v1432, %v497
      %v1442 = vmul.f32 %v1437, %v496
      %v1443 = vmul.f32 %v1433, %v497
      %v1444 = vmul.f32 %v1438, %v496
      %v1445 = vmul.f32 %v1434, %v497
      %v1446 = vmul.f32 %v1439, %v496
      %v1447 = vmul.f32 %v1435, %v497
      %s1448 = scalar_lea.vmem %s4, 64
      %v1449 = vld [vmem:[%s1448] sm:$0xff]
      %v1450 = vld [vmem:[%s1448 + $0x8] sm:$0xff]
      %v1451 = vld [vmem:[%s1448 + $0x10] sm:$0xff]
      %v1452 = vld [vmem:[%s1448 + $0x18] sm:$0xff]
      %v1454 = vsel %vm1222, %v1449, 0
      %v1457 = vsel %vm1222, %v1450, 0
      %v1460 = vsel %vm1222, %v1451, 0
      %v1463 = vsel %vm1222, %v1452, 0
      %1465 = vmatpush.msra.mxu0 0.0
      %1466 = vmatpush.msra.mxu0 0.0
      %1467 = vmatpush.msra.mxu0 0.0
      %1468 = vmatpush.msra.mxu0 0.0
      %1469 = vmatpush.msra.mxu0 0.0
      %1470 = vmatpush.msra.mxu0 0.0
      %1471 = vmatpush.msra.mxu0 0.0
      %1472 = vmatpush.msra.mxu0 0.0
      %1473 = vmatpush.msra.mxu0 0.0
      %1474 = vmatpush.msra.mxu0 0.0
      %1475 = vmatpush.msra.mxu0 0.0
      %1476 = vmatpush.msra.mxu0 0.0
      %1477 = vmatpush.msra.mxu0 %v1446
      %1478 = vmatpush.msra.mxu0 %v1444
      %1479 = vmatpush.msra.mxu0 %v1442
      %1480 = vmatpush.msra.mxu0 %v1440
      %1481 = vmatmul.f32.gmra.mxu0 %v1454
      %v1482 = vpop.f32.mrf.mxu0
      %v1483 = vadd.f32 0.0, %v1482
      %1484 = vmatmul.f32.gmra.mxu0 %v1457
      %v1485 = vpop.f32.mrf.mxu0
      %v1486 = vadd.f32 0.0, %v1485
      %1487 = vmatmul.f32.gmra.mxu0 %v1460
      %v1488 = vpop.f32.mrf.mxu0
      %v1489 = vadd.f32 0.0, %v1488
      %1490 = vmatmul.f32.gmra.mxu0 %v1463
      %v1491 = vpop.f32.mrf.mxu0
      %v1492 = vadd.f32 0.0, %v1491
      %1493 = vdwg.mxu0
      %1494 = vmatpush.msra.mxu0 0.0
      %1495 = vmatpush.msra.mxu0 0.0
      %1496 = vmatpush.msra.mxu0 0.0
      %1497 = vmatpush.msra.mxu0 0.0
      %1498 = vmatpush.msra.mxu0 0.0
      %1499 = vmatpush.msra.mxu0 0.0
      %1500 = vmatpush.msra.mxu0 0.0
      %1501 = vmatpush.msra.mxu0 0.0
      %1502 = vmatpush.msra.mxu0 0.0
      %1503 = vmatpush.msra.mxu0 0.0
      %1504 = vmatpush.msra.mxu0 0.0
      %1505 = vmatpush.msra.mxu0 0.0
      %1506 = vmatpush.msra.mxu0 %v1447
      %1507 = vmatpush.msra.mxu0 %v1445
      %1508 = vmatpush.msra.mxu0 %v1443
      %1509 = vmatpush.msra.mxu0 %v1441
      %1510 = vmatmul.f32.gmra.mxu0 %v1454
      %v1511 = vpop.f32.mrf.mxu0
      %v1512 = vadd.f32 0.0, %v1511
      %1513 = vmatmul.f32.gmra.mxu0 %v1457
      %v1514 = vpop.f32.mrf.mxu0
      %v1515 = vadd.f32 0.0, %v1514
      %1516 = vmatmul.f32.gmra.mxu0 %v1460
      %v1517 = vpop.f32.mrf.mxu0
      %v1518 = vadd.f32 0.0, %v1517
      %1519 = vmatmul.f32.gmra.mxu0 %v1463
      %v1520 = vpop.f32.mrf.mxu0
      %v1521 = vadd.f32 0.0, %v1520
      %1522 = vdwg.mxu0
      %v1523 = vadd.f32 %v1408, %v1483
      %v1524 = vadd.f32 %v1409, %v1512
      %v1525 = vadd.f32 %v1410, %v1486
      %v1526 = vadd.f32 %v1411, %v1515
      %v1527 = vadd.f32 %v1412, %v1489
      %v1528 = vadd.f32 %v1413, %v1518
      %v1529 = vadd.f32 %v1414, %v1492
      %v1530 = vadd.f32 %v1415, %v1521
      %1531 = vrot.lane.b32.xlu0 %v1178, 1
      %v1532 = vpop.permute.xlu0 %1531
      %1533 = vrot.lane.b32.xlu0 %v1180, 1
      %v1534 = vpop.permute.xlu0 %1533
      %1535 = vrot.lane.b32.xlu0 %v1182, 1
      %v1536 = vpop.permute.xlu0 %1535
      %1537 = vrot.lane.b32.xlu0 %v1184, 1
      %v1538 = vpop.permute.xlu0 %1537
      %1539 = vrot.lane.b32.xlu0 %v1179, 1
      %v1540 = vpop.permute.xlu0 %1539
      %1541 = vrot.lane.b32.xlu0 %v1181, 1
      %v1542 = vpop.permute.xlu0 %1541
      %1543 = vrot.lane.b32.xlu0 %v1183, 1
      %v1544 = vpop.permute.xlu0 %1543
      %1545 = vrot.lane.b32.xlu0 %v1185, 1
      %v1546 = vpop.permute.xlu0 %1545
      %v1547 = vsel %vm593, %v1532, %v1540
      %v1548 = vsel %vm593, %v1534, %v1542
      %v1549 = vsel %vm593, %v1536, %v1544
      %v1550 = vsel %vm593, %v1538, %v1546
      %v1551 = vsel %vm593, %v1540, %v1532
      %v1552 = vsel %vm593, %v1542, %v1534
      %v1553 = vsel %vm593, %v1544, %v1536
      %v1554 = vsel %vm593, %v1546, %v1538
      %v1555 = vmul.f32 %v1551, %v598
      %v1556 = vmul.f32 %v1547, %v599
      %v1557 = vmul.f32 %v1552, %v598
      %v1558 = vmul.f32 %v1548, %v599
      %v1559 = vmul.f32 %v1553, %v598
      %v1560 = vmul.f32 %v1549, %v599
      %v1561 = vmul.f32 %v1554, %v598
      %v1562 = vmul.f32 %v1550, %v599
      %s1563 = scalar_lea.vmem %s4, 96
      %v1564 = vld [vmem:[%s1563] sm:$0xff]
      %v1565 = vld [vmem:[%s1563 + $0x8] sm:$0xff]
      %v1566 = vld [vmem:[%s1563 + $0x10] sm:$0xff]
      %v1567 = vld [vmem:[%s1563 + $0x18] sm:$0xff]
      %v1569 = vsel %vm1222, %v1564, 0
      %v1572 = vsel %vm1222, %v1565, 0
      %v1575 = vsel %vm1222, %v1566, 0
      %v1578 = vsel %vm1222, %v1567, 0
      %1580 = vmatpush.msra.mxu0 0.0
      %1581 = vmatpush.msra.mxu0 0.0
      %1582 = vmatpush.msra.mxu0 0.0
      %1583 = vmatpush.msra.mxu0 0.0
      %1584 = vmatpush.msra.mxu0 0.0
      %1585 = vmatpush.msra.mxu0 0.0
      %1586 = vmatpush.msra.mxu0 0.0
      %1587 = vmatpush.msra.mxu0 0.0
      %1588 = vmatpush.msra.mxu0 0.0
      %1589 = vmatpush.msra.mxu0 0.0
      %1590 = vmatpush.msra.mxu0 0.0
      %1591 = vmatpush.msra.mxu0 0.0
      %1592 = vmatpush.msra.mxu0 %v1561
      %1593 = vmatpush.msra.mxu0 %v1559
      %1594 = vmatpush.msra.mxu0 %v1557
      %1595 = vmatpush.msra.mxu0 %v1555
      %1596 = vmatmul.f32.gmra.mxu0 %v1569
      %v1597 = vpop.f32.mrf.mxu0
      %v1598 = vadd.f32 0.0, %v1597
      %1599 = vmatmul.f32.gmra.mxu0 %v1572
      %v1600 = vpop.f32.mrf.mxu0
      %v1601 = vadd.f32 0.0, %v1600
      %1602 = vmatmul.f32.gmra.mxu0 %v1575
      %v1603 = vpop.f32.mrf.mxu0
      %v1604 = vadd.f32 0.0, %v1603
      %1605 = vmatmul.f32.gmra.mxu0 %v1578
      %v1606 = vpop.f32.mrf.mxu0
      %v1607 = vadd.f32 0.0, %v1606
      %1608 = vdwg.mxu0
      %1609 = vmatpush.msra.mxu0 0.0
      %1610 = vmatpush.msra.mxu0 0.0
      %1611 = vmatpush.msra.mxu0 0.0
      %1612 = vmatpush.msra.mxu0 0.0
      %1613 = vmatpush.msra.mxu0 0.0
      %1614 = vmatpush.msra.mxu0 0.0
      %1615 = vmatpush.msra.mxu0 0.0
      %1616 = vmatpush.msra.mxu0 0.0
      %1617 = vmatpush.msra.mxu0 0.0
      %1618 = vmatpush.msra.mxu0 0.0
      %1619 = vmatpush.msra.mxu0 0.0
      %1620 = vmatpush.msra.mxu0 0.0
      %1621 = vmatpush.msra.mxu0 %v1562
      %1622 = vmatpush.msra.mxu0 %v1560
      %1623 = vmatpush.msra.mxu0 %v1558
      %1624 = vmatpush.msra.mxu0 %v1556
      %1625 = vmatmul.f32.gmra.mxu0 %v1569
      %v1626 = vpop.f32.mrf.mxu0
      %v1627 = vadd.f32 0.0, %v1626
      %1628 = vmatmul.f32.gmra.mxu0 %v1572
      %v1629 = vpop.f32.mrf.mxu0
      %v1630 = vadd.f32 0.0, %v1629
      %1631 = vmatmul.f32.gmra.mxu0 %v1575
      %v1632 = vpop.f32.mrf.mxu0
      %v1633 = vadd.f32 0.0, %v1632
      %1634 = vmatmul.f32.gmra.mxu0 %v1578
      %v1635 = vpop.f32.mrf.mxu0
      %v1636 = vadd.f32 0.0, %v1635
      %1637 = vdwg.mxu0
      %v1638 = vadd.f32 %v1523, %v1598
      %v1639 = vadd.f32 %v1524, %v1627
      %v1640 = vadd.f32 %v1525, %v1601
      %v1641 = vadd.f32 %v1526, %v1630
      %v1642 = vadd.f32 %v1527, %v1604
      %v1643 = vadd.f32 %v1528, %v1633
      %v1644 = vadd.f32 %v1529, %v1607
      %v1645 = vadd.f32 %v1530, %v1636
      %s1646 = scalar_lea.vmem %s4, 128
      %v1647 = vld [vmem:[%s1646] sm:$0xff]
      %v1648 = vld [vmem:[%s1646 + $0x8] sm:$0xff]
      %v1649 = vld [vmem:[%s1646 + $0x10] sm:$0xff]
      %v1650 = vld [vmem:[%s1646 + $0x18] sm:$0xff]
      %v1652 = vsel %vm1222, %v1647, 0
      %v1655 = vsel %vm1222, %v1648, 0
      %v1658 = vsel %vm1222, %v1649, 0
      %v1661 = vsel %vm1222, %v1650, 0
      %1663 = vmatpush.msra.mxu0 0.0
      %1664 = vmatpush.msra.mxu0 0.0
      %1665 = vmatpush.msra.mxu0 0.0
      %1666 = vmatpush.msra.mxu0 0.0
      %1667 = vmatpush.msra.mxu0 0.0
      %1668 = vmatpush.msra.mxu0 0.0
      %1669 = vmatpush.msra.mxu0 0.0
      %1670 = vmatpush.msra.mxu0 0.0
      %1671 = vmatpush.msra.mxu0 0.0
      %1672 = vmatpush.msra.mxu0 0.0
      %1673 = vmatpush.msra.mxu0 0.0
      %1674 = vmatpush.msra.mxu0 0.0
      %1675 = vmatpush.msra.mxu0 %v1184
      %1676 = vmatpush.msra.mxu0 %v1182
      %1677 = vmatpush.msra.mxu0 %v1180
      %1678 = vmatpush.msra.mxu0 %v1178
      %1679 = vmatmul.f32.gmra.mxu0 %v1652
      %v1680 = vpop.f32.mrf.mxu0
      %v1681 = vadd.f32 0.0, %v1680
      %1682 = vmatmul.f32.gmra.mxu0 %v1655
      %v1683 = vpop.f32.mrf.mxu0
      %v1684 = vadd.f32 0.0, %v1683
      %1685 = vmatmul.f32.gmra.mxu0 %v1658
      %v1686 = vpop.f32.mrf.mxu0
      %v1687 = vadd.f32 0.0, %v1686
      %1688 = vmatmul.f32.gmra.mxu0 %v1661
      %v1689 = vpop.f32.mrf.mxu0
      %v1690 = vadd.f32 0.0, %v1689
      %1691 = vdwg.mxu0
      %1692 = vmatpush.msra.mxu0 0.0
      %1693 = vmatpush.msra.mxu0 0.0
      %1694 = vmatpush.msra.mxu0 0.0
      %1695 = vmatpush.msra.mxu0 0.0
      %1696 = vmatpush.msra.mxu0 0.0
      %1697 = vmatpush.msra.mxu0 0.0
      %1698 = vmatpush.msra.mxu0 0.0
      %1699 = vmatpush.msra.mxu0 0.0
      %1700 = vmatpush.msra.mxu0 0.0
      %1701 = vmatpush.msra.mxu0 0.0
      %1702 = vmatpush.msra.mxu0 0.0
      %1703 = vmatpush.msra.mxu0 0.0
      %1704 = vmatpush.msra.mxu0 %v1185
      %1705 = vmatpush.msra.mxu0 %v1183
      %1706 = vmatpush.msra.mxu0 %v1181
      %1707 = vmatpush.msra.mxu0 %v1179
      %1708 = vmatmul.f32.gmra.mxu0 %v1652
      %v1709 = vpop.f32.mrf.mxu0
      %v1710 = vadd.f32 0.0, %v1709
      %1711 = vmatmul.f32.gmra.mxu0 %v1655
      %v1712 = vpop.f32.mrf.mxu0
      %v1713 = vadd.f32 0.0, %v1712
      %1714 = vmatmul.f32.gmra.mxu0 %v1658
      %v1715 = vpop.f32.mrf.mxu0
      %v1716 = vadd.f32 0.0, %v1715
      %1717 = vmatmul.f32.gmra.mxu0 %v1661
      %v1718 = vpop.f32.mrf.mxu0
      %v1719 = vadd.f32 0.0, %v1718
      %1720 = vdwg.mxu0
      %v1721 = vadd.f32 %v1638, %v1681
      %v1722 = vadd.f32 %v1639, %v1710
      %v1723 = vadd.f32 %v1640, %v1684
      %v1724 = vadd.f32 %v1641, %v1713
      %v1725 = vadd.f32 %v1642, %v1687
      %v1726 = vadd.f32 %v1643, %v1716
      %v1727 = vadd.f32 %v1644, %v1690
      %v1728 = vadd.f32 %v1645, %v1719
      %1729 = vrot.lane.b32.xlu0 %v1178, 127
      %v1730 = vpop.permute.xlu0 %1729
      %1731 = vrot.lane.b32.xlu0 %v1180, 127
      %v1732 = vpop.permute.xlu0 %1731
      %1733 = vrot.lane.b32.xlu0 %v1182, 127
      %v1734 = vpop.permute.xlu0 %1733
      %1735 = vrot.lane.b32.xlu0 %v1184, 127
      %v1736 = vpop.permute.xlu0 %1735
      %1737 = vrot.lane.b32.xlu0 %v1179, 127
      %v1738 = vpop.permute.xlu0 %1737
      %1739 = vrot.lane.b32.xlu0 %v1181, 127
      %v1740 = vpop.permute.xlu0 %1739
      %1741 = vrot.lane.b32.xlu0 %v1183, 127
      %v1742 = vpop.permute.xlu0 %1741
      %1743 = vrot.lane.b32.xlu0 %v1185, 127
      %v1744 = vpop.permute.xlu0 %1743
      %v1745 = vsel %vm778, %v1730, %v1738
      %v1746 = vsel %vm778, %v1732, %v1740
      %v1747 = vsel %vm778, %v1734, %v1742
      %v1748 = vsel %vm778, %v1736, %v1744
      %v1749 = vsel %vm778, %v1738, %v1730
      %v1750 = vsel %vm778, %v1740, %v1732
      %v1751 = vsel %vm778, %v1742, %v1734
      %v1752 = vsel %vm778, %v1744, %v1736
      %v1753 = vmul.f32 %v1745, %v783
      %v1754 = vmul.f32 %v1749, %v784
      %v1755 = vmul.f32 %v1746, %v783
      %v1756 = vmul.f32 %v1750, %v784
      %v1757 = vmul.f32 %v1747, %v783
      %v1758 = vmul.f32 %v1751, %v784
      %v1759 = vmul.f32 %v1748, %v783
      %v1760 = vmul.f32 %v1752, %v784
      %s1761 = scalar_lea.vmem %s4, 160
      %v1762 = vld [vmem:[%s1761] sm:$0xff]
      %v1763 = vld [vmem:[%s1761 + $0x8] sm:$0xff]
      %v1764 = vld [vmem:[%s1761 + $0x10] sm:$0xff]
      %v1765 = vld [vmem:[%s1761 + $0x18] sm:$0xff]
      %v1767 = vsel %vm1222, %v1762, 0
      %v1770 = vsel %vm1222, %v1763, 0
      %v1773 = vsel %vm1222, %v1764, 0
      %v1776 = vsel %vm1222, %v1765, 0
      %1778 = vmatpush.msra.mxu0 0.0
      %1779 = vmatpush.msra.mxu0 0.0
      %1780 = vmatpush.msra.mxu0 0.0
      %1781 = vmatpush.msra.mxu0 0.0
      %1782 = vmatpush.msra.mxu0 0.0
      %1783 = vmatpush.msra.mxu0 0.0
      %1784 = vmatpush.msra.mxu0 0.0
      %1785 = vmatpush.msra.mxu0 0.0
      %1786 = vmatpush.msra.mxu0 0.0
      %1787 = vmatpush.msra.mxu0 0.0
      %1788 = vmatpush.msra.mxu0 0.0
      %1789 = vmatpush.msra.mxu0 0.0
      %1790 = vmatpush.msra.mxu0 %v1759
      %1791 = vmatpush.msra.mxu0 %v1757
      %1792 = vmatpush.msra.mxu0 %v1755
      %1793 = vmatpush.msra.mxu0 %v1753
      %1794 = vmatmul.f32.gmra.mxu0 %v1767
      %v1795 = vpop.f32.mrf.mxu0
      %v1796 = vadd.f32 0.0, %v1795
      %1797 = vmatmul.f32.gmra.mxu0 %v1770
      %v1798 = vpop.f32.mrf.mxu0
      %v1799 = vadd.f32 0.0, %v1798
      %1800 = vmatmul.f32.gmra.mxu0 %v1773
      %v1801 = vpop.f32.mrf.mxu0
      %v1802 = vadd.f32 0.0, %v1801
      %1803 = vmatmul.f32.gmra.mxu0 %v1776
      %v1804 = vpop.f32.mrf.mxu0
      %v1805 = vadd.f32 0.0, %v1804
      %1806 = vdwg.mxu0
      %1807 = vmatpush.msra.mxu0 0.0
      %1808 = vmatpush.msra.mxu0 0.0
      %1809 = vmatpush.msra.mxu0 0.0
      %1810 = vmatpush.msra.mxu0 0.0
      %1811 = vmatpush.msra.mxu0 0.0
      %1812 = vmatpush.msra.mxu0 0.0
      %1813 = vmatpush.msra.mxu0 0.0
      %1814 = vmatpush.msra.mxu0 0.0
      %1815 = vmatpush.msra.mxu0 0.0
      %1816 = vmatpush.msra.mxu0 0.0
      %1817 = vmatpush.msra.mxu0 0.0
      %1818 = vmatpush.msra.mxu0 0.0
      %1819 = vmatpush.msra.mxu0 %v1760
      %1820 = vmatpush.msra.mxu0 %v1758
      %1821 = vmatpush.msra.mxu0 %v1756
      %1822 = vmatpush.msra.mxu0 %v1754
      %1823 = vmatmul.f32.gmra.mxu0 %v1767
      %v1824 = vpop.f32.mrf.mxu0
      %v1825 = vadd.f32 0.0, %v1824
      %1826 = vmatmul.f32.gmra.mxu0 %v1770
      %v1827 = vpop.f32.mrf.mxu0
      %v1828 = vadd.f32 0.0, %v1827
      %1829 = vmatmul.f32.gmra.mxu0 %v1773
      %v1830 = vpop.f32.mrf.mxu0
      %v1831 = vadd.f32 0.0, %v1830
      %1832 = vmatmul.f32.gmra.mxu0 %v1776
      %v1833 = vpop.f32.mrf.mxu0
      %v1834 = vadd.f32 0.0, %v1833
      %1835 = vdwg.mxu0
      %v1836 = vadd.f32 %v1721, %v1796
      %v1837 = vadd.f32 %v1722, %v1825
      %v1838 = vadd.f32 %v1723, %v1799
      %v1839 = vadd.f32 %v1724, %v1828
      %v1840 = vadd.f32 %v1725, %v1802
      %v1841 = vadd.f32 %v1726, %v1831
      %v1842 = vadd.f32 %v1727, %v1805
      %v1843 = vadd.f32 %v1728, %v1834
      %1844 = vrot.lane.b32.xlu0 %v1178, 113
      %v1845 = vpop.permute.xlu0 %1844
      %1846 = vrot.lane.b32.xlu0 %v1180, 113
      %v1847 = vpop.permute.xlu0 %1846
      %1848 = vrot.lane.b32.xlu0 %v1182, 113
      %v1849 = vpop.permute.xlu0 %1848
      %1850 = vrot.lane.b32.xlu0 %v1184, 113
      %v1851 = vpop.permute.xlu0 %1850
      %1852 = vrot.lane.b32.xlu0 %v1179, 113
      %v1853 = vpop.permute.xlu0 %1852
      %1854 = vrot.lane.b32.xlu0 %v1181, 113
      %v1855 = vpop.permute.xlu0 %1854
      %1856 = vrot.lane.b32.xlu0 %v1183, 113
      %v1857 = vpop.permute.xlu0 %1856
      %1858 = vrot.lane.b32.xlu0 %v1185, 113
      %v1859 = vpop.permute.xlu0 %1858
      %v1860 = vsel %vm880, %v1845, %v1853
      %v1861 = vsel %vm880, %v1847, %v1855
      %v1862 = vsel %vm880, %v1849, %v1857
      %v1863 = vsel %vm880, %v1851, %v1859
      %v1864 = vsel %vm880, %v1853, %v1845
      %v1865 = vsel %vm880, %v1855, %v1847
      %v1866 = vsel %vm880, %v1857, %v1849
      %v1867 = vsel %vm880, %v1859, %v1851
      %v1868 = vmul.f32 %v1860, %v885
      %v1869 = vmul.f32 %v1864, %v886
      %v1870 = vmul.f32 %v1861, %v885
      %v1871 = vmul.f32 %v1865, %v886
      %v1872 = vmul.f32 %v1862, %v885
      %v1873 = vmul.f32 %v1866, %v886
      %v1874 = vmul.f32 %v1863, %v885
      %v1875 = vmul.f32 %v1867, %v886
      %s1876 = scalar_lea.vmem %s4, 192
      %v1877 = vld [vmem:[%s1876] sm:$0xff]
      %v1878 = vld [vmem:[%s1876 + $0x8] sm:$0xff]
      %v1879 = vld [vmem:[%s1876 + $0x10] sm:$0xff]
      %v1880 = vld [vmem:[%s1876 + $0x18] sm:$0xff]
      %v1882 = vsel %vm1222, %v1877, 0
      %v1885 = vsel %vm1222, %v1878, 0
      %v1888 = vsel %vm1222, %v1879, 0
      %v1891 = vsel %vm1222, %v1880, 0
      %1893 = vmatpush.msra.mxu0 0.0
      %1894 = vmatpush.msra.mxu0 0.0
      %1895 = vmatpush.msra.mxu0 0.0
      %1896 = vmatpush.msra.mxu0 0.0
      %1897 = vmatpush.msra.mxu0 0.0
      %1898 = vmatpush.msra.mxu0 0.0
      %1899 = vmatpush.msra.mxu0 0.0
      %1900 = vmatpush.msra.mxu0 0.0
      %1901 = vmatpush.msra.mxu0 0.0
      %1902 = vmatpush.msra.mxu0 0.0
      %1903 = vmatpush.msra.mxu0 0.0
      %1904 = vmatpush.msra.mxu0 0.0
      %1905 = vmatpush.msra.mxu0 %v1874
      %1906 = vmatpush.msra.mxu0 %v1872
      %1907 = vmatpush.msra.mxu0 %v1870
      %1908 = vmatpush.msra.mxu0 %v1868
      %1909 = vmatmul.f32.gmra.mxu0 %v1882
      %v1910 = vpop.f32.mrf.mxu0
      %v1911 = vadd.f32 0.0, %v1910
      %1912 = vmatmul.f32.gmra.mxu0 %v1885
      %v1913 = vpop.f32.mrf.mxu0
      %v1914 = vadd.f32 0.0, %v1913
      %1915 = vmatmul.f32.gmra.mxu0 %v1888
      %v1916 = vpop.f32.mrf.mxu0
      %v1917 = vadd.f32 0.0, %v1916
      %1918 = vmatmul.f32.gmra.mxu0 %v1891
      %v1919 = vpop.f32.mrf.mxu0
      %v1920 = vadd.f32 0.0, %v1919
      %1921 = vdwg.mxu0
      %1922 = vmatpush.msra.mxu0 0.0
      %1923 = vmatpush.msra.mxu0 0.0
      %1924 = vmatpush.msra.mxu0 0.0
      %1925 = vmatpush.msra.mxu0 0.0
      %1926 = vmatpush.msra.mxu0 0.0
      %1927 = vmatpush.msra.mxu0 0.0
      %1928 = vmatpush.msra.mxu0 0.0
      %1929 = vmatpush.msra.mxu0 0.0
      %1930 = vmatpush.msra.mxu0 0.0
      %1931 = vmatpush.msra.mxu0 0.0
      %1932 = vmatpush.msra.mxu0 0.0
      %1933 = vmatpush.msra.mxu0 0.0
      %1934 = vmatpush.msra.mxu0 %v1875
      %1935 = vmatpush.msra.mxu0 %v1873
      %1936 = vmatpush.msra.mxu0 %v1871
      %1937 = vmatpush.msra.mxu0 %v1869
      %1938 = vmatmul.f32.gmra.mxu0 %v1882
      %v1939 = vpop.f32.mrf.mxu0
      %v1940 = vadd.f32 0.0, %v1939
      %1941 = vmatmul.f32.gmra.mxu0 %v1885
      %v1942 = vpop.f32.mrf.mxu0
      %v1943 = vadd.f32 0.0, %v1942
      %1944 = vmatmul.f32.gmra.mxu0 %v1888
      %v1945 = vpop.f32.mrf.mxu0
      %v1946 = vadd.f32 0.0, %v1945
      %1947 = vmatmul.f32.gmra.mxu0 %v1891
      %v1948 = vpop.f32.mrf.mxu0
      %v1949 = vadd.f32 0.0, %v1948
      %1950 = vdwg.mxu0
      %v1951 = vadd.f32 %v1836, %v1911
      %v1952 = vadd.f32 %v1837, %v1940
      %v1953 = vadd.f32 %v1838, %v1914
      %v1954 = vadd.f32 %v1839, %v1943
      %v1955 = vadd.f32 %v1840, %v1917
      %v1956 = vadd.f32 %v1841, %v1946
      %v1957 = vadd.f32 %v1842, %v1920
      %v1958 = vadd.f32 %v1843, %v1949
      %1959 = vrot.lane.b32.xlu0 %v1178, 112
      %v1960 = vpop.permute.xlu0 %1959
      %1961 = vrot.lane.b32.xlu0 %v1180, 112
      %v1962 = vpop.permute.xlu0 %1961
      %1963 = vrot.lane.b32.xlu0 %v1182, 112
      %v1964 = vpop.permute.xlu0 %1963
      %1965 = vrot.lane.b32.xlu0 %v1184, 112
      %v1966 = vpop.permute.xlu0 %1965
      %1967 = vrot.lane.b32.xlu0 %v1179, 112
      %v1968 = vpop.permute.xlu0 %1967
      %1969 = vrot.lane.b32.xlu0 %v1181, 112
      %v1970 = vpop.permute.xlu0 %1969
      %1971 = vrot.lane.b32.xlu0 %v1183, 112
      %v1972 = vpop.permute.xlu0 %1971
      %1973 = vrot.lane.b32.xlu0 %v1185, 112
      %v1974 = vpop.permute.xlu0 %1973
      %v1975 = vsel %vm982, %v1960, %v1968
      %v1976 = vsel %vm982, %v1962, %v1970
      %v1977 = vsel %vm982, %v1964, %v1972
      %v1978 = vsel %vm982, %v1966, %v1974
      %v1979 = vsel %vm982, %v1968, %v1960
      %v1980 = vsel %vm982, %v1970, %v1962
      %v1981 = vsel %vm982, %v1972, %v1964
      %v1982 = vsel %vm982, %v1974, %v1966
      %v1983 = vmul.f32 %v1975, %v987
      %v1984 = vmul.f32 %v1979, %v988
      %v1985 = vmul.f32 %v1976, %v987
      %v1986 = vmul.f32 %v1980, %v988
      %v1987 = vmul.f32 %v1977, %v987
      %v1988 = vmul.f32 %v1981, %v988
      %v1989 = vmul.f32 %v1978, %v987
      %v1990 = vmul.f32 %v1982, %v988
      %s1991 = scalar_lea.vmem %s4, 224
      %v1992 = vld [vmem:[%s1991] sm:$0xff]
      %v1993 = vld [vmem:[%s1991 + $0x8] sm:$0xff]
      %v1994 = vld [vmem:[%s1991 + $0x10] sm:$0xff]
      %v1995 = vld [vmem:[%s1991 + $0x18] sm:$0xff]
      %v1997 = vsel %vm1222, %v1992, 0
      %v2000 = vsel %vm1222, %v1993, 0
      %v2003 = vsel %vm1222, %v1994, 0
      %v2006 = vsel %vm1222, %v1995, 0
      %2008 = vmatpush.msra.mxu0 0.0
      %2009 = vmatpush.msra.mxu0 0.0
      %2010 = vmatpush.msra.mxu0 0.0
      %2011 = vmatpush.msra.mxu0 0.0
      %2012 = vmatpush.msra.mxu0 0.0
      %2013 = vmatpush.msra.mxu0 0.0
      %2014 = vmatpush.msra.mxu0 0.0
      %2015 = vmatpush.msra.mxu0 0.0
      %2016 = vmatpush.msra.mxu0 0.0
      %2017 = vmatpush.msra.mxu0 0.0
      %2018 = vmatpush.msra.mxu0 0.0
      %2019 = vmatpush.msra.mxu0 0.0
      %2020 = vmatpush.msra.mxu0 %v1989
      %2021 = vmatpush.msra.mxu0 %v1987
      %2022 = vmatpush.msra.mxu0 %v1985
      %2023 = vmatpush.msra.mxu0 %v1983
      %2024 = vmatmul.f32.gmra.mxu0 %v1997
      %v2025 = vpop.f32.mrf.mxu0
      %v2026 = vadd.f32 0.0, %v2025
      %2027 = vmatmul.f32.gmra.mxu0 %v2000
      %v2028 = vpop.f32.mrf.mxu0
      %v2029 = vadd.f32 0.0, %v2028
      %2030 = vmatmul.f32.gmra.mxu0 %v2003
      %v2031 = vpop.f32.mrf.mxu0
      %v2032 = vadd.f32 0.0, %v2031
      %2033 = vmatmul.f32.gmra.mxu0 %v2006
      %v2034 = vpop.f32.mrf.mxu0
      %v2035 = vadd.f32 0.0, %v2034
      %2036 = vdwg.mxu0
      %2037 = vmatpush.msra.mxu0 0.0
      %2038 = vmatpush.msra.mxu0 0.0
      %2039 = vmatpush.msra.mxu0 0.0
      %2040 = vmatpush.msra.mxu0 0.0
      %2041 = vmatpush.msra.mxu0 0.0
      %2042 = vmatpush.msra.mxu0 0.0
      %2043 = vmatpush.msra.mxu0 0.0
      %2044 = vmatpush.msra.mxu0 0.0
      %2045 = vmatpush.msra.mxu0 0.0
      %2046 = vmatpush.msra.mxu0 0.0
      %2047 = vmatpush.msra.mxu0 0.0
      %2048 = vmatpush.msra.mxu0 0.0
      %2049 = vmatpush.msra.mxu0 %v1990
      %2050 = vmatpush.msra.mxu0 %v1988
      %2051 = vmatpush.msra.mxu0 %v1986
      %2052 = vmatpush.msra.mxu0 %v1984
      %2053 = vmatmul.f32.gmra.mxu0 %v1997
      %v2054 = vpop.f32.mrf.mxu0
      %v2055 = vadd.f32 0.0, %v2054
      %2056 = vmatmul.f32.gmra.mxu0 %v2000
      %v2057 = vpop.f32.mrf.mxu0
      %v2058 = vadd.f32 0.0, %v2057
      %2059 = vmatmul.f32.gmra.mxu0 %v2003
      %v2060 = vpop.f32.mrf.mxu0
      %v2061 = vadd.f32 0.0, %v2060
      %2062 = vmatmul.f32.gmra.mxu0 %v2006
      %v2063 = vpop.f32.mrf.mxu0
      %v2064 = vadd.f32 0.0, %v2063
      %2065 = vdwg.mxu0
      %v2066 = vadd.f32 %v1951, %v2026
      %v2067 = vadd.f32 %v1952, %v2055
      %v2068 = vadd.f32 %v1953, %v2029
      %v2069 = vadd.f32 %v1954, %v2058
      %v2070 = vadd.f32 %v1955, %v2032
      %v2071 = vadd.f32 %v1956, %v2061
      %v2072 = vadd.f32 %v1957, %v2035
      %v2073 = vadd.f32 %v1958, %v2064
      %2074 = vrot.lane.b32.xlu0 %v1178, 111
      %v2075 = vpop.permute.xlu0 %2074
      %2076 = vrot.lane.b32.xlu0 %v1180, 111
      %v2077 = vpop.permute.xlu0 %2076
      %2078 = vrot.lane.b32.xlu0 %v1182, 111
      %v2079 = vpop.permute.xlu0 %2078
      %2080 = vrot.lane.b32.xlu0 %v1184, 111
      %v2081 = vpop.permute.xlu0 %2080
      %2082 = vrot.lane.b32.xlu0 %v1179, 111
      %v2083 = vpop.permute.xlu0 %2082
      %2084 = vrot.lane.b32.xlu0 %v1181, 111
      %v2085 = vpop.permute.xlu0 %2084
      %2086 = vrot.lane.b32.xlu0 %v1183, 111
      %v2087 = vpop.permute.xlu0 %2086
      %2088 = vrot.lane.b32.xlu0 %v1185, 111
      %v2089 = vpop.permute.xlu0 %2088
      %v2090 = vsel %vm1084, %v2075, %v2083
      %v2091 = vsel %vm1084, %v2077, %v2085
      %v2092 = vsel %vm1084, %v2079, %v2087
      %v2093 = vsel %vm1084, %v2081, %v2089
      %v2094 = vsel %vm1084, %v2083, %v2075
      %v2095 = vsel %vm1084, %v2085, %v2077
      %v2096 = vsel %vm1084, %v2087, %v2079
      %v2097 = vsel %vm1084, %v2089, %v2081
      %v2098 = vmul.f32 %v2090, %v1089
      %v2099 = vmul.f32 %v2094, %v1090
      %v2100 = vmul.f32 %v2091, %v1089
      %v2101 = vmul.f32 %v2095, %v1090
      %v2102 = vmul.f32 %v2092, %v1089
      %v2103 = vmul.f32 %v2096, %v1090
      %v2104 = vmul.f32 %v2093, %v1089
      %v2105 = vmul.f32 %v2097, %v1090
      %s2106 = scalar_lea.vmem %s4, 256
      %v2107 = vld [vmem:[%s2106] sm:$0xff]
      %v2108 = vld [vmem:[%s2106 + $0x8] sm:$0xff]
      %v2109 = vld [vmem:[%s2106 + $0x10] sm:$0xff]
      %v2110 = vld [vmem:[%s2106 + $0x18] sm:$0xff]
      %v2112 = vsel %vm1222, %v2107, 0
      %v2115 = vsel %vm1222, %v2108, 0
      %v2118 = vsel %vm1222, %v2109, 0
      %v2121 = vsel %vm1222, %v2110, 0
      %2123 = vmatpush.msra.mxu0 0.0
      %2124 = vmatpush.msra.mxu0 0.0
      %2125 = vmatpush.msra.mxu0 0.0
      %2126 = vmatpush.msra.mxu0 0.0
      %2127 = vmatpush.msra.mxu0 0.0
      %2128 = vmatpush.msra.mxu0 0.0
      %2129 = vmatpush.msra.mxu0 0.0
      %2130 = vmatpush.msra.mxu0 0.0
      %2131 = vmatpush.msra.mxu0 0.0
      %2132 = vmatpush.msra.mxu0 0.0
      %2133 = vmatpush.msra.mxu0 0.0
      %2134 = vmatpush.msra.mxu0 0.0
      %2135 = vmatpush.msra.mxu0 %v2104
      %2136 = vmatpush.msra.mxu0 %v2102
      %2137 = vmatpush.msra.mxu0 %v2100
      %2138 = vmatpush.msra.mxu0 %v2098
      %2139 = vmatmul.f32.gmra.mxu0 %v2112
      %v2140 = vpop.f32.mrf.mxu0
      %v2141 = vadd.f32 0.0, %v2140
      %2142 = vmatmul.f32.gmra.mxu0 %v2115
      %v2143 = vpop.f32.mrf.mxu0
      %v2144 = vadd.f32 0.0, %v2143
      %2145 = vmatmul.f32.gmra.mxu0 %v2118
      %v2146 = vpop.f32.mrf.mxu0
      %v2147 = vadd.f32 0.0, %v2146
      %2148 = vmatmul.f32.gmra.mxu0 %v2121
      %v2149 = vpop.f32.mrf.mxu0
      %v2150 = vadd.f32 0.0, %v2149
      %2151 = vdwg.mxu0
      %2152 = vmatpush.msra.mxu0 0.0
      %2153 = vmatpush.msra.mxu0 0.0
      %2154 = vmatpush.msra.mxu0 0.0
      %2155 = vmatpush.msra.mxu0 0.0
      %2156 = vmatpush.msra.mxu0 0.0
      %2157 = vmatpush.msra.mxu0 0.0
      %2158 = vmatpush.msra.mxu0 0.0
      %2159 = vmatpush.msra.mxu0 0.0
      %2160 = vmatpush.msra.mxu0 0.0
      %2161 = vmatpush.msra.mxu0 0.0
      %2162 = vmatpush.msra.mxu0 0.0
      %2163 = vmatpush.msra.mxu0 0.0
      %2164 = vmatpush.msra.mxu0 %v2105
      %2165 = vmatpush.msra.mxu0 %v2103
      %2166 = vmatpush.msra.mxu0 %v2101
      %2167 = vmatpush.msra.mxu0 %v2099
      %2168 = vmatmul.f32.gmra.mxu0 %v2112
      %v2169 = vpop.f32.mrf.mxu0
      %v2170 = vadd.f32 0.0, %v2169
      %2171 = vmatmul.f32.gmra.mxu0 %v2115
      %v2172 = vpop.f32.mrf.mxu0
      %v2173 = vadd.f32 0.0, %v2172
      %2174 = vmatmul.f32.gmra.mxu0 %v2118
      %v2175 = vpop.f32.mrf.mxu0
      %v2176 = vadd.f32 0.0, %v2175
      %2177 = vmatmul.f32.gmra.mxu0 %v2121
      %v2178 = vpop.f32.mrf.mxu0
      %v2179 = vadd.f32 0.0, %v2178
      %2180 = vdwg.mxu0
      %v2181 = vadd.f32 %v2066, %v2141
      %v2182 = vadd.f32 %v2067, %v2170
      %v2183 = vadd.f32 %v2068, %v2144
      %v2184 = vadd.f32 %v2069, %v2173
      %v2185 = vadd.f32 %v2070, %v2147
      %v2186 = vadd.f32 %v2071, %v2176
      %v2187 = vadd.f32 %v2072, %v2150
      %v2188 = vadd.f32 %v2073, %v2179
      %2189 = vst [vmem:[%s279] sm:$0xff] %v2181
      %2190 = vst [vmem:[%s279 + $0x8] sm:$0xff] %v2182
      %2191 = vst [vmem:[%s279 + $0x10] sm:$0xff] %v2183
      %2192 = vst [vmem:[%s279 + $0x18] sm:$0xff] %v2184
      %2193 = vst [vmem:[%s279 + $0x20] sm:$0xff] %v2185
      %2194 = vst [vmem:[%s279 + $0x28] sm:$0xff] %v2186
      %2195 = vst [vmem:[%s279 + $0x30] sm:$0xff] %v2187
      %2196 = vst [vmem:[%s279 + $0x38] sm:$0xff] %v2188
      %v2197 = vadd.f32 %v2181, %v2182
      %2198 = vadd.xlane.f32.xlu0 %v2197
      %v2199 = vpop.xlane.xlu0 %2198
      %v2200 = vadd.f32 %v2183, %v2184
      %2201 = vadd.xlane.f32.xlu0 %v2200
      %v2202 = vpop.xlane.xlu0 %2201
      %v2203 = vadd.f32 %v2185, %v2186
      %2204 = vadd.xlane.f32.xlu0 %v2203
      %v2205 = vpop.xlane.xlu0 %2204
      %v2206 = vadd.f32 %v2187, %v2188
      %2207 = vadd.xlane.f32.xlu0 %v2206
      %v2208 = vpop.xlane.xlu0 %2207
      %v2209 = vmul.f32 %v2181, %v2181
      %v2210 = vmul.f32 %v2182, %v2182
      %v2211 = vmul.f32 %v2183, %v2183
      %v2212 = vmul.f32 %v2184, %v2184
      %v2213 = vmul.f32 %v2185, %v2185
      %v2214 = vmul.f32 %v2186, %v2186
      %v2215 = vmul.f32 %v2187, %v2187
      %v2216 = vmul.f32 %v2188, %v2188
      %v2217 = vadd.f32 %v2209, %v2210
      %2218 = vadd.xlane.f32.xlu0 %v2217
      %v2219 = vpop.xlane.xlu0 %2218
      %v2220 = vadd.f32 %v2211, %v2212
      %2221 = vadd.xlane.f32.xlu0 %v2220
      %v2222 = vpop.xlane.xlu0 %2221
      %v2223 = vadd.f32 %v2213, %v2214
      %2224 = vadd.xlane.f32.xlu0 %v2223
      %v2225 = vpop.xlane.xlu0 %2224
      %v2226 = vadd.f32 %v2215, %v2216
      %2227 = vadd.xlane.f32.xlu0 %v2226
      %v2228 = vpop.xlane.xlu0 %2227
      %vm2229 = vcmp.eq.s32.totalorder %v302, 0
      %vm2230 = vcmp.eq.s32.totalorder %v302, 1
      %v2231 = vsel %vm2230, %v2219, 0.0
      %v2232 = vsel %vm2230, %v2222, 0.0
      %v2233 = vsel %vm2230, %v2225, 0.0
      %v2234 = vsel %vm2230, %v2228, 0.0
      %v2235 = vsel %vm2229, %v2199, %v2231
      %v2236 = vsel %vm2229, %v2202, %v2232
      %v2237 = vsel %vm2229, %v2205, %v2233
      %v2238 = vsel %vm2229, %v2208, %v2234
      %2239 = vst [vmem:[%s284] sm:$0xff] %v2235
      %2240 = vst [vmem:[%s284 + $0x8] sm:$0xff] %v2236
      %2241 = vst [vmem:[%s284 + $0x10] sm:$0xff] %v2237
      %2242 = vst [vmem:[%s284 + $0x18] sm:$0xff] %v2238
      %p2243 = scmp.lt.s32.totalorder %s18, 1
      %s2244 = scalar_select %p2243, %s18, 1
      %s2245 = smul.addr %s2244, 8
      %s2246 = smul.addr %s2245, 8
      %s2247 = scalar_lea.vmem %s5, %s2246
      %p2248 = scmp.lt.s32.totalorder %s18, 1
      %s2249 = scalar_select %p2248, %s18, 1
      %s2250 = smul.addr %s2249, 4
      %s2251 = smul.addr %s2250, 8
      %s2252 = scalar_lea.vmem %s6, %s2251
      // Predicated region
      $region41: #{frru_forward.4} parent=39 // pred_check
        %p2253 = pneg %p151
      $region42: #{frru_forward.4} parent=39 // pred_check_branch
        %2255 = sbr.rel (%p2253) target = $region44
      $region43: #{frru_forward.4} parent=39 // pred_region
        _
      $region44: #{frru_forward.4} parent=39 // pred_fallthru
        _
      // Predicated region
      $region45: #{frru_forward.4} parent=39 // pred_check
        %p2256 = pneg %p177
      $region46: #{frru_forward.4} parent=39 // pred_check_branch
        %2258 = sbr.rel (%p2256) target = $region48
      $region47: #{frru_forward.4} parent=39 // pred_region
        _
      $region48: #{frru_forward.4} parent=39 // pred_fallthru
        _
    $region40: #{frru_forward.4} parent=5 // pred_fallthru
      _
    %p2259 = scmp.le.s32.totalorder 2, %s13
    // Predicated region
    $region49: #{frru_forward.4} parent=5 // pred_check
      %p2260 = pneg %p2259
    $region50: #{frru_forward.4} parent=5 // pred_check_branch
      %2262 = sbr.rel (%p2260) target = $region52
    $region51: #{frru_forward.4} parent=5 // pred_region
      %s2263 = ssub.s32 %s13, 2
      // Predicated region
      $region53: #{frru_forward.4} parent=51 // pred_check
        %p2264 = pneg %p157
      $region54: #{frru_forward.4} parent=51 // pred_check_branch
        %2266 = sbr.rel (%p2264) target = $region56
      $region55: #{frru_forward.4} parent=51 // pred_region
        %p2267 = scmp.lt.s32.totalorder %s19, 1
        %s2268 = scalar_select %p2267, %s19, 1
        %s2269 = smul.addr %s2268, 8
        %s2270 = smul.addr %s2269, 8
        %s2271 = scalar_lea.vmem %s5, %s2270
      $region56: #{frru_forward.4} parent=51 // pred_fallthru
        _
      // Predicated region
      $region57: #{frru_forward.4} parent=51 // pred_check
        %p2272 = pneg %p183
      $region58: #{frru_forward.4} parent=51 // pred_check_branch
        %2274 = sbr.rel (%p2272) target = $region60
      $region59: #{frru_forward.4} parent=51 // pred_region
        %p2275 = scmp.lt.s32.totalorder %s19, 1
        %s2276 = scalar_select %p2275, %s19, 1
        %s2277 = smul.addr %s2276, 4
        %s2278 = smul.addr %s2277, 8
        %s2279 = scalar_lea.vmem %s6, %s2278
      $region60: #{frru_forward.4} parent=51 // pred_fallthru
        _
    $region52: #{frru_forward.4} parent=5 // pred_fallthru
      _
  $region6: #{frru_forward.4} parent=0 // loop_footer
    %s17 = sadd.s32 1, %s13
  $region7: #{frru_forward.4} parent=0 // loop_footer_branch
    %12 = sbr.rel target = $region3
  $region8: #{frru_forward.4} parent=0 // loop_exit
    _

// kernel: frru_forward.6
$region0: #{frru_forward.6}
  #allocation0 [shape = 'u32[]', space=smem, size = 0x4, offset = 0x4, fixed_abs, tag = 'smem constant byte address 0x4 - core index']
  #allocation1 [shape = 'u32[72,128]{1,0:T(1,128)}', space=vmem, size = 0x9000, scoped, tag = 'internal scratch']
  %s0 = inlined_call_operand.vmem [shape: f32[2,32,256], index: 0, kind: input, shape index: {}]
  %s1 = inlined_call_operand.vmem [shape: f32[32,1], index: 1, kind: input, shape index: {}]
  %s2 = inlined_call_operand.vmem [shape: f32[32,1], index: 2, kind: input, shape index: {}]
  %s3 = inlined_call_operand.vmem [shape: f32[32,32], index: 3, kind: input, shape index: {}]
  %s4 = inlined_call_operand.vmem [shape: f32[32,1], index: 4, kind: input, shape index: {}]
  %s5 = inlined_call_operand.vmem [shape: f32[2,32,256], index: 5, kind: output, shape index: {0}]
  %s6 = inlined_call_operand.vmem [shape: f32[2,32,256], index: 6, kind: output, shape index: {1}]
  %7 = xla_tuple %s5, %s6
  %s8 = sld [smem:[#allocation0]]
  $region61: #{frru_forward.6} parent=0
    _
  %s10 = ssub.s32 1, %s8
  %s11 = scalar_select 0, %s10, %s8
  loop: start=0, step=1, limit=4
  $region2: #{frru_forward.6} parent=0 // loop_pre_header
    _
  $region3: #{frru_forward.6} parent=0 // loop_header
    %s13 = sphi 0, %s17
    %p14 = scmp.ge.s32.totalorder %s13, 4
    %s23 = sphi 0, %s25
    %s26 = sphi 0, %s23
    %s27 = sphi 0, %s26
    %s43 = sphi 0, %s27
    %s47 = sphi 0, %s47
    %s49 = sphi 0, %s47
    %s50 = sphi 0, %s49
    %s64 = sphi 0, %s50
    %s68 = sphi 0, %s68
    %s70 = sphi 0, %s68
    %s71 = sphi 0, %s70
    %s85 = sphi 0, %s71
    %s89 = sphi 0, %s89
    %s91 = sphi 0, %s89
    %s92 = sphi 0, %s91
    %s106 = sphi 0, %s92
    %s110 = sphi 0, %s110
    %s112 = sphi 0, %s110
    %s113 = sphi 0, %s112
    %s127 = sphi 0, %s113
    %s133 = sphi 0, %s135
    %s136 = sphi 0, %s133
    %s137 = sphi 0, %s136
    %s153 = sphi 0, %s137
    %s159 = sphi 0, %s161
    %s162 = sphi 0, %s159
    %s163 = sphi 0, %s162
    %s179 = sphi 0, %s163
  $region4: #{frru_forward.6} parent=0 // loop_header_branch
    %16 = sbr.rel (%p14) target = $region8
  $region5: #{frru_forward.6} parent=0 // loop_body
    %s18 = ssub.s32 %s13, 1
    %s19 = ssub.s32 %s13, 2
    %s20 = sadd.s32 %s13, 1
    %s21 = ssub.s32 %s13, %s20
    %p22 = scmp.eq.s32.totalorder %s21, 0
    %s24 = sadd.s32 %s23, 1
    %s25 = scalar_select %p22, %s23, %s24
    %p28 = pneg %p22
    %p29 = scmp.eq.s32.totalorder %s13, 1
    %p30 = por %p28, %p29
    %p31 = scmp.ne.s32.totalorder %s23, %s26
    %p32 = scmp.eq.s32.totalorder %s13, 0
    %p33 = por %p31, %p32
    %p34 = scmp.ne.s32.totalorder %s23, %s26
    %p35 = scmp.eq.s32.totalorder %s18, 1
    %p36 = por %p34, %p35
    %p37 = scmp.ne.s32.totalorder %s26, %s27
    %p38 = scmp.eq.s32.totalorder %s18, 0
    %p39 = por %p37, %p38
    %p40 = scmp.ne.s32.totalorder %s26, %s27
    %p41 = scmp.eq.s32.totalorder %s19, 1
    %p42 = por %p40, %p41
    %p44 = scmp.ne.s32.totalorder %s27, %s43
    %p45 = scmp.eq.s32.totalorder %s19, 0
    %p46 = por %p44, %p45
    %s48 = sadd.s32 %s47, 1
    %p51 = scmp.eq.s32.totalorder %s13, 1
    %p52 = scmp.ne.s32.totalorder %s47, %s49
    %p53 = scmp.eq.s32.totalorder %s13, 0
    %p54 = por %p52, %p53
    %p55 = scmp.ne.s32.totalorder %s47, %s49
    %p56 = scmp.eq.s32.totalorder %s18, 1
    %p57 = por %p55, %p56
    %p58 = scmp.ne.s32.totalorder %s49, %s50
    %p59 = scmp.eq.s32.totalorder %s18, 0
    %p60 = por %p58, %p59
    %p61 = scmp.ne.s32.totalorder %s49, %s50
    %p62 = scmp.eq.s32.totalorder %s19, 1
    %p63 = por %p61, %p62
    %p65 = scmp.ne.s32.totalorder %s50, %s64
    %p66 = scmp.eq.s32.totalorder %s19, 0
    %p67 = por %p65, %p66
    %s69 = sadd.s32 %s68, 1
    %p72 = scmp.eq.s32.totalorder %s13, 1
    %p73 = scmp.ne.s32.totalorder %s68, %s70
    %p74 = scmp.eq.s32.totalorder %s13, 0
    %p75 = por %p73, %p74
    %p76 = scmp.ne.s32.totalorder %s68, %s70
    %p77 = scmp.eq.s32.totalorder %s18, 1
    %p78 = por %p76, %p77
    %p79 = scmp.ne.s32.totalorder %s70, %s71
    %p80 = scmp.eq.s32.totalorder %s18, 0
    %p81 = por %p79, %p80
    %p82 = scmp.ne.s32.totalorder %s70, %s71
    %p83 = scmp.eq.s32.totalorder %s19, 1
    %p84 = por %p82, %p83
    %p86 = scmp.ne.s32.totalorder %s71, %s85
    %p87 = scmp.eq.s32.totalorder %s19, 0
    %p88 = por %p86, %p87
    %s90 = sadd.s32 %s89, 1
    %p93 = scmp.eq.s32.totalorder %s13, 1
    %p94 = scmp.ne.s32.totalorder %s89, %s91
    %p95 = scmp.eq.s32.totalorder %s13, 0
    %p96 = por %p94, %p95
    %p97 = scmp.ne.s32.totalorder %s89, %s91
    %p98 = scmp.eq.s32.totalorder %s18, 1
    %p99 = por %p97, %p98
    %p100 = scmp.ne.s32.totalorder %s91, %s92
    %p101 = scmp.eq.s32.totalorder %s18, 0
    %p102 = por %p100, %p101
    %p103 = scmp.ne.s32.totalorder %s91, %s92
    %p104 = scmp.eq.s32.totalorder %s19, 1
    %p105 = por %p103, %p104
    %p107 = scmp.ne.s32.totalorder %s92, %s106
    %p108 = scmp.eq.s32.totalorder %s19, 0
    %p109 = por %p107, %p108
    %s111 = sadd.s32 %s110, 1
    %p114 = scmp.eq.s32.totalorder %s13, 1
    %p115 = scmp.ne.s32.totalorder %s110, %s112
    %p116 = scmp.eq.s32.totalorder %s13, 0
    %p117 = por %p115, %p116
    %p118 = scmp.ne.s32.totalorder %s110, %s112
    %p119 = scmp.eq.s32.totalorder %s18, 1
    %p120 = por %p118, %p119
    %p121 = scmp.ne.s32.totalorder %s112, %s113
    %p122 = scmp.eq.s32.totalorder %s18, 0
    %p123 = por %p121, %p122
    %p124 = scmp.ne.s32.totalorder %s112, %s113
    %p125 = scmp.eq.s32.totalorder %s19, 1
    %p126 = por %p124, %p125
    %p128 = scmp.ne.s32.totalorder %s113, %s127
    %p129 = scmp.eq.s32.totalorder %s19, 0
    %p130 = por %p128, %p129
    %s131 = ssub.s32 %s13, %s20
    %p132 = scmp.eq.s32.totalorder %s131, 0
    %s134 = sadd.s32 %s133, 1
    %s135 = scalar_select %p132, %s133, %s134
    %p138 = pneg %p132
    %p139 = scmp.eq.s32.totalorder %s13, 1
    %p140 = por %p138, %p139
    %p141 = scmp.ne.s32.totalorder %s133, %s136
    %p142 = scmp.eq.s32.totalorder %s13, 0
    %p143 = por %p141, %p142
    %p144 = scmp.ne.s32.totalorder %s133, %s136
    %p145 = scmp.eq.s32.totalorder %s18, 1
    %p146 = por %p144, %p145
    %p147 = scmp.ne.s32.totalorder %s136, %s137
    %p148 = scmp.eq.s32.totalorder %s18, 0
    %p149 = por %p147, %p148
    %p150 = scmp.ne.s32.totalorder %s136, %s137
    %p151 = scmp.eq.s32.totalorder %s19, 1
    %p152 = por %p150, %p151
    %p154 = scmp.ne.s32.totalorder %s137, %s153
    %p155 = scmp.eq.s32.totalorder %s19, 0
    %p156 = por %p154, %p155
    %s157 = ssub.s32 %s13, %s20
    %p158 = scmp.eq.s32.totalorder %s157, 0
    %s160 = sadd.s32 %s159, 1
    %s161 = scalar_select %p158, %s159, %s160
    %p164 = pneg %p158
    %p165 = scmp.eq.s32.totalorder %s13, 1
    %p166 = por %p164, %p165
    %p167 = scmp.ne.s32.totalorder %s159, %s162
    %p168 = scmp.eq.s32.totalorder %s13, 0
    %p169 = por %p167, %p168
    %p170 = scmp.ne.s32.totalorder %s159, %s162
    %p171 = scmp.eq.s32.totalorder %s18, 1
    %p172 = por %p170, %p171
    %p173 = scmp.ne.s32.totalorder %s162, %s163
    %p174 = scmp.eq.s32.totalorder %s18, 0
    %p175 = por %p173, %p174
    %p176 = scmp.ne.s32.totalorder %s162, %s163
    %p177 = scmp.eq.s32.totalorder %s19, 1
    %p178 = por %p176, %p177
    %p180 = scmp.ne.s32.totalorder %s163, %s179
    %p181 = scmp.eq.s32.totalorder %s19, 0
    %p182 = por %p180, %p181
    %p183 = scmp.le.s32.totalorder 1, %s13
    %p184 = scmp.lt.s32.totalorder %s13, 3
    %p185 = pnand %p183, %p184
    %p186 = pneg %p185
    // Predicated region
    $region9: #{frru_forward.6} parent=5 // pred_check
      _
    $region10: #{frru_forward.6} parent=5 // pred_check_branch
      %188 = sbr.rel (%p185) target = $region12
    $region11: #{frru_forward.6} parent=5 // pred_region
      %s189 = ssub.s32 %s13, 1
      // Predicated region
      $region13: #{frru_forward.6} parent=11 // pred_check
        %p190 = pneg %p60
      $region14: #{frru_forward.6} parent=11 // pred_check_branch
        %192 = sbr.rel (%p190) target = $region16
      $region15: #{frru_forward.6} parent=11 // pred_region
        _
      $region16: #{frru_forward.6} parent=11 // pred_fallthru
        _
      // Predicated region
      $region17: #{frru_forward.6} parent=11 // pred_check
        %p193 = pneg %p81
      $region18: #{frru_forward.6} parent=11 // pred_check_branch
        %195 = sbr.rel (%p193) target = $region20
      $region19: #{frru_forward.6} parent=11 // pred_region
        _
      $region20: #{frru_forward.6} parent=11 // pred_fallthru
        _
      // Predicated region
      $region21: #{frru_forward.6} parent=11 // pred_check
        %p196 = pneg %p102
      $region22: #{frru_forward.6} parent=11 // pred_check_branch
        %198 = sbr.rel (%p196) target = $region24
      $region23: #{frru_forward.6} parent=11 // pred_region
        _
      $region24: #{frru_forward.6} parent=11 // pred_fallthru
        _
      // Predicated region
      $region25: #{frru_forward.6} parent=11 // pred_check
        %p199 = pneg %p123
      $region26: #{frru_forward.6} parent=11 // pred_check_branch
        %201 = sbr.rel (%p199) target = $region28
      $region27: #{frru_forward.6} parent=11 // pred_region
        _
      $region28: #{frru_forward.6} parent=11 // pred_fallthru
        _
    $region12: #{frru_forward.6} parent=5 // pred_fallthru
      _
    %p202 = scmp.lt.s32.totalorder %s13, 2
    // Predicated region
    $region29: #{frru_forward.6} parent=5 // pred_check
      %p203 = pneg %p202
    $region30: #{frru_forward.6} parent=5 // pred_check_branch
      %205 = sbr.rel (%p203) target = $region32
    $region31: #{frru_forward.6} parent=5 // pred_region
      // Predicated region
      $region33: #{frru_forward.6} parent=31 // pred_check
        %p206 = pneg %p33
      $region34: #{frru_forward.6} parent=31 // pred_check_branch
        %208 = sbr.rel (%p206) target = $region36
      $region35: #{frru_forward.6} parent=31 // pred_region
        %p209 = scmp.lt.s32.totalorder %s13, 1
        %s210 = scalar_select %p209, %s13, 1
        %s211 = smul.addr %s210, 8
        %s212 = smul.addr %s211, 8
        %s213 = scalar_lea.vmem %s0, %s212
      $region36: #{frru_forward.6} parent=31 // pred_fallthru
        _
    $region32: #{frru_forward.6} parent=5 // pred_fallthru
      _
    %p214 = scmp.le.s32.totalorder 1, %s13
    %p215 = scmp.lt.s32.totalorder %s13, 3
    %p216 = pnand %p214, %p215
    %p217 = pneg %p216
    // Predicated region
    $region37: #{frru_forward.6} parent=5 // pred_check
      _
    $region38: #{frru_forward.6} parent=5 // pred_check_branch
      %219 = sbr.rel (%p216) target = $region40
    $region39: #{frru_forward.6} parent=5 // pred_region
      %s220 = ssub.s32 %s13, 1
      %p221 = scmp.lt.s32.totalorder %s18, 1
      %s222 = scalar_select %p221, %s18, 1
      %s223 = smul.addr %s222, 8
      %s224 = smul.addr %s223, 8
      %s225 = scalar_lea.vmem %s0, %s224
      %p226 = pneg %p39
      %p227 = pneg %p36
      %p228 = pneg %p60
      %p229 = pneg %p57
      %p230 = pneg %p81
      %p231 = pneg %p78
      %p232 = pneg %p102
      %p233 = pneg %p99
      %p234 = pneg %p123
      %p235 = pneg %p120
      %p236 = pneg %p149
      %p237 = pneg %p146
      %p238 = scmp.lt.s32.totalorder %s18, 1
      %s239 = scalar_select %p238, %s18, 1
      %s240 = smul.addr %s239, 8
      %s241 = smul.addr %s240, 8
      %s242 = scalar_lea.vmem %s5, %s241
      %p243 = pneg %p175
      %p244 = pneg %p172
      %p245 = scmp.lt.s32.totalorder %s18, 1
      %s246 = scalar_select %p245, %s18, 1
      %s247 = smul.addr %s246, 8
      %s248 = smul.addr %s247, 8
      %s249 = scalar_lea.vmem %s6, %s248
      %p250 = scmp.lt.s32.totalorder %s18, 1
      %s251 = scalar_select %p250, %s18, 1
      %s252 = smul.addr %s251, 8
      %s253 = smul.addr %s252, 8
      %s254 = scalar_lea.vmem %s0, %s253
      %p255 = scmp.lt.s32.totalorder %s18, 1
      %s256 = scalar_select %p255, %s18, 1
      %s257 = smul.addr %s256, 8
      %s258 = smul.addr %s257, 8
      %s259 = scalar_lea.vmem %s5, %s258
      %p260 = scmp.lt.s32.totalorder %s18, 1
      %s261 = scalar_select %p260, %s18, 1
      %s262 = smul.addr %s261, 8
      %s263 = smul.addr %s262, 8
      %s264 = scalar_lea.vmem %s6, %s263
      %v265 = vld [vmem:[%s254] sm:$0xff]
      %v266 = vld [vmem:[%s254 + $0x8] sm:$0xff]
      %v267 = vld [vmem:[%s254 + $0x10] sm:$0xff]
      %v268 = vld [vmem:[%s254 + $0x18] sm:$0xff]
      %v269 = vld [vmem:[%s254 + $0x20] sm:$0xff]
      %v270 = vld [vmem:[%s254 + $0x28] sm:$0xff]
      %v271 = vld [vmem:[%s254 + $0x30] sm:$0xff]
      %v272 = vld [vmem:[%s254 + $0x38] sm:$0xff]
      %v273 = vld [vmem:[%s1] sm:$0xff]
      %v274 = vld [vmem:[%s1 + $0x8] sm:$0xff]
      %v275 = vld [vmem:[%s1 + $0x10] sm:$0xff]
      %v276 = vld [vmem:[%s1 + $0x18] sm:$0xff]
      %278 = vset.pattern.permute.xlu0 0
      %279 = vperm.xlu0 %278, %v273
      %v280 = vpop.permute.xlu0 %279
      %283 = vset.pattern.permute.xlu0 0
      %284 = vperm.xlu0 %283, %v274
      %v285 = vpop.permute.xlu0 %284
      %288 = vset.pattern.permute.xlu0 0
      %289 = vperm.xlu0 %288, %v275
      %v290 = vpop.permute.xlu0 %289
      %293 = vset.pattern.permute.xlu0 0
      %294 = vperm.xlu0 %293, %v276
      %v295 = vpop.permute.xlu0 %294
      %v297 = vmul.f32 %v265, %v280
      %v298 = vmul.f32 %v266, %v280
      %v299 = vmul.f32 %v267, %v285
      %v300 = vmul.f32 %v268, %v285
      %v301 = vmul.f32 %v269, %v290
      %v302 = vmul.f32 %v270, %v290
      %v303 = vmul.f32 %v271, %v295
      %v304 = vmul.f32 %v272, %v295
      %v305 = vld [vmem:[%s2] sm:$0xff]
      %v306 = vld [vmem:[%s2 + $0x8] sm:$0xff]
      %v307 = vld [vmem:[%s2 + $0x10] sm:$0xff]
      %v308 = vld [vmem:[%s2 + $0x18] sm:$0xff]
      %310 = vset.pattern.permute.xlu0 0
      %311 = vperm.xlu0 %310, %v305
      %v312 = vpop.permute.xlu0 %311
      %315 = vset.pattern.permute.xlu0 0
      %316 = vperm.xlu0 %315, %v306
      %v317 = vpop.permute.xlu0 %316
      %320 = vset.pattern.permute.xlu0 0
      %321 = vperm.xlu0 %320, %v307
      %v322 = vpop.permute.xlu0 %321
      %325 = vset.pattern.permute.xlu0 0
      %326 = vperm.xlu0 %325, %v308
      %v327 = vpop.permute.xlu0 %326
      %v329 = vadd.f32 %v297, %v312
      %v330 = vadd.f32 %v298, %v312
      %v331 = vadd.f32 %v299, %v317
      %v332 = vadd.f32 %v300, %v317
      %v333 = vadd.f32 %v301, %v322
      %v334 = vadd.f32 %v302, %v322
      %v335 = vadd.f32 %v303, %v327
      %v336 = vadd.f32 %v304, %v327
      %v337 = vmax.f32 %v329, 0.0
      %v338 = vmax.f32 %v330, 0.0
      %v339 = vmax.f32 %v331, 0.0
      %v340 = vmax.f32 %v332, 0.0
      %v341 = vmax.f32 %v333, 0.0
      %v342 = vmax.f32 %v334, 0.0
      %v343 = vmax.f32 %v335, 0.0
      %v344 = vmax.f32 %v336, 0.0
      %345 = vst [vmem:[%s259] sm:$0xff] %v337
      %346 = vst [vmem:[%s259 + $0x8] sm:$0xff] %v338
      %347 = vst [vmem:[%s259 + $0x10] sm:$0xff] %v339
      %348 = vst [vmem:[%s259 + $0x18] sm:$0xff] %v340
      %349 = vst [vmem:[%s259 + $0x20] sm:$0xff] %v341
      %350 = vst [vmem:[%s259 + $0x28] sm:$0xff] %v342
      %351 = vst [vmem:[%s259 + $0x30] sm:$0xff] %v343
      %352 = vst [vmem:[%s259 + $0x38] sm:$0xff] %v344
      %v353 = vld [vmem:[%s3] sm:$0xff]
      %v354 = vld [vmem:[%s3 + $0x8] sm:$0xff]
      %v355 = vld [vmem:[%s3 + $0x10] sm:$0xff]
      %v356 = vld [vmem:[%s3 + $0x18] sm:$0xff]
      %v357 = vld [vmem:[%s4] sm:$0xff]
      %v358 = vld [vmem:[%s4 + $0x8] sm:$0xff]
      %v359 = vld [vmem:[%s4 + $0x10] sm:$0xff]
      %v360 = vld [vmem:[%s4 + $0x18] sm:$0xff]
      %362 = vset.pattern.permute.xlu0 0
      %363 = vperm.xlu0 %362, %v357
      %v364 = vpop.permute.xlu0 %363
      %367 = vset.pattern.permute.xlu0 0
      %368 = vperm.xlu0 %367, %v358
      %v369 = vpop.permute.xlu0 %368
      %372 = vset.pattern.permute.xlu0 0
      %373 = vperm.xlu0 %372, %v359
      %v374 = vpop.permute.xlu0 %373
      %377 = vset.pattern.permute.xlu0 0
      %378 = vperm.xlu0 %377, %v360
      %v379 = vpop.permute.xlu0 %378
      %vm381 = vcmask 261120
      %v383 = vsel %vm381, %v353, 0
      %v386 = vsel %vm381, %v354, 0
      %v389 = vsel %vm381, %v355, 0
      %v392 = vsel %vm381, %v356, 0
      %394 = vmatpush.msra.mxu0 0.0
      %395 = vmatpush.msra.mxu0 0.0
      %396 = vmatpush.msra.mxu0 0.0
      %397 = vmatpush.msra.mxu0 0.0
      %398 = vmatpush.msra.mxu0 0.0
      %399 = vmatpush.msra.mxu0 0.0
      %400 = vmatpush.msra.mxu0 0.0
      %401 = vmatpush.msra.mxu0 0.0
      %402 = vmatpush.msra.mxu0 0.0
      %403 = vmatpush.msra.mxu0 0.0
      %404 = vmatpush.msra.mxu0 0.0
      %405 = vmatpush.msra.mxu0 0.0
      %406 = vmatpush.msra.mxu0 %v343
      %407 = vmatpush.msra.mxu0 %v341
      %408 = vmatpush.msra.mxu0 %v339
      %409 = vmatpush.msra.mxu0 %v337
      %410 = vmatmul.f32.gmra.mxu0 %v383
      %v411 = vpop.f32.mrf.mxu0
      %v412 = vadd.f32 %v364, %v411
      %413 = vmatmul.f32.gmra.mxu0 %v386
      %v414 = vpop.f32.mrf.mxu0
      %v415 = vadd.f32 %v369, %v414
      %416 = vmatmul.f32.gmra.mxu0 %v389
      %v417 = vpop.f32.mrf.mxu0
      %v418 = vadd.f32 %v374, %v417
      %419 = vmatmul.f32.gmra.mxu0 %v392
      %v420 = vpop.f32.mrf.mxu0
      %v421 = vadd.f32 %v379, %v420
      %422 = vdwg.mxu0
      %423 = vmatpush.msra.mxu0 0.0
      %424 = vmatpush.msra.mxu0 0.0
      %425 = vmatpush.msra.mxu0 0.0
      %426 = vmatpush.msra.mxu0 0.0
      %427 = vmatpush.msra.mxu0 0.0
      %428 = vmatpush.msra.mxu0 0.0
      %429 = vmatpush.msra.mxu0 0.0
      %430 = vmatpush.msra.mxu0 0.0
      %431 = vmatpush.msra.mxu0 0.0
      %432 = vmatpush.msra.mxu0 0.0
      %433 = vmatpush.msra.mxu0 0.0
      %434 = vmatpush.msra.mxu0 0.0
      %435 = vmatpush.msra.mxu0 %v344
      %436 = vmatpush.msra.mxu0 %v342
      %437 = vmatpush.msra.mxu0 %v340
      %438 = vmatpush.msra.mxu0 %v338
      %439 = vmatmul.f32.gmra.mxu0 %v383
      %v440 = vpop.f32.mrf.mxu0
      %v441 = vadd.f32 %v364, %v440
      %442 = vmatmul.f32.gmra.mxu0 %v386
      %v443 = vpop.f32.mrf.mxu0
      %v444 = vadd.f32 %v369, %v443
      %445 = vmatmul.f32.gmra.mxu0 %v389
      %v446 = vpop.f32.mrf.mxu0
      %v447 = vadd.f32 %v374, %v446
      %448 = vmatmul.f32.gmra.mxu0 %v392
      %v449 = vpop.f32.mrf.mxu0
      %v450 = vadd.f32 %v379, %v449
      %451 = vdwg.mxu0
      %452 = vst [vmem:[%s264] sm:$0xff] %v412
      %453 = vst [vmem:[%s264 + $0x8] sm:$0xff] %v441
      %454 = vst [vmem:[%s264 + $0x10] sm:$0xff] %v415
      %455 = vst [vmem:[%s264 + $0x18] sm:$0xff] %v444
      %456 = vst [vmem:[%s264 + $0x20] sm:$0xff] %v418
      %457 = vst [vmem:[%s264 + $0x28] sm:$0xff] %v447
      %458 = vst [vmem:[%s264 + $0x30] sm:$0xff] %v421
      %459 = vst [vmem:[%s264 + $0x38] sm:$0xff] %v450
      %p460 = scmp.lt.s32.totalorder %s18, 1
      %s461 = scalar_select %p460, %s18, 1
      %s462 = smul.addr %s461, 8
      %s463 = smul.addr %s462, 8
      %s464 = scalar_lea.vmem %s5, %s463
      %p465 = scmp.lt.s32.totalorder %s18, 1
      %s466 = scalar_select %p465, %s18, 1
      %s467 = smul.addr %s466, 8
      %s468 = smul.addr %s467, 8
      %s469 = scalar_lea.vmem %s6, %s468
      // Predicated region
      $region41: #{frru_forward.6} parent=39 // pred_check
        %p470 = pneg %p146
      $region42: #{frru_forward.6} parent=39 // pred_check_branch
        %472 = sbr.rel (%p470) target = $region44
      $region43: #{frru_forward.6} parent=39 // pred_region
        _
      $region44: #{frru_forward.6} parent=39 // pred_fallthru
        _
      // Predicated region
      $region45: #{frru_forward.6} parent=39 // pred_check
        %p473 = pneg %p172
      $region46: #{frru_forward.6} parent=39 // pred_check_branch
        %475 = sbr.rel (%p473) target = $region48
      $region47: #{frru_forward.6} parent=39 // pred_region
        _
      $region48: #{frru_forward.6} parent=39 // pred_fallthru
        _
    $region40: #{frru_forward.6} parent=5 // pred_fallthru
      _
    %p476 = scmp.le.s32.totalorder 2, %s13
    // Predicated region
    $region49: #{frru_forward.6} parent=5 // pred_check
      %p477 = pneg %p476
    $region50: #{frru_forward.6} parent=5 // pred_check_branch
      %479 = sbr.rel (%p477) target = $region52
    $region51: #{frru_forward.6} parent=5 // pred_region
      %s480 = ssub.s32 %s13, 2
      // Predicated region
      $region53: #{frru_forward.6} parent=51 // pred_check
        %p481 = pneg %p152
      $region54: #{frru_forward.6} parent=51 // pred_check_branch
        %483 = sbr.rel (%p481) target = $region56
      $region55: #{frru_forward.6} parent=51 // pred_region
        %p484 = scmp.lt.s32.totalorder %s19, 1
        %s485 = scalar_select %p484, %s19, 1
        %s486 = smul.addr %s485, 8
        %s487 = smul.addr %s486, 8
        %s488 = scalar_lea.vmem %s5, %s487
      $region56: #{frru_forward.6} parent=51 // pred_fallthru
        _
      // Predicated region
      $region57: #{frru_forward.6} parent=51 // pred_check
        %p489 = pneg %p178
      $region58: #{frru_forward.6} parent=51 // pred_check_branch
        %491 = sbr.rel (%p489) target = $region60
      $region59: #{frru_forward.6} parent=51 // pred_region
        %p492 = scmp.lt.s32.totalorder %s19, 1
        %s493 = scalar_select %p492, %s19, 1
        %s494 = smul.addr %s493, 8
        %s495 = smul.addr %s494, 8
        %s496 = scalar_lea.vmem %s6, %s495
      $region60: #{frru_forward.6} parent=51 // pred_fallthru
        _
    $region52: #{frru_forward.6} parent=5 // pred_fallthru
      _
  $region6: #{frru_forward.6} parent=0 // loop_footer
    %s17 = sadd.s32 1, %s13
  $region7: #{frru_forward.6} parent=0 // loop_footer_branch
    %12 = sbr.rel target = $region3
  $region8: #{frru_forward.6} parent=0 // loop_exit
    _

// kernel: frru_forward.7
$region0: #{frru_forward.7}
  #allocation0 [shape = 'u32[]', space=smem, size = 0x4, offset = 0x4, fixed_abs, tag = 'smem constant byte address 0x4 - core index']
  #allocation1 [shape = 'u32[72,128]{1,0:T(1,128)}', space=vmem, size = 0x9000, scoped, tag = 'internal scratch']
  %s0 = inlined_call_operand.vmem [shape: f32[2,512,16], index: 0, kind: input, shape index: {}]
  %s1 = inlined_call_operand.vmem [shape: f32[16,64], index: 1, kind: input, shape index: {}]
  %s2 = inlined_call_operand.vmem [shape: f32[2,512,64], index: 2, kind: input, shape index: {}]
  %s3 = inlined_call_operand.vmem [shape: f32[2,512,64], index: 3, kind: output, shape index: {}]
  %s4 = sld [smem:[#allocation0]]
  $region45: #{frru_forward.7} parent=0
    _
  %s6 = ssub.s32 1, %s4
  %s7 = scalar_select 0, %s6, %s4
  loop: start=0, step=1, limit=4
  $region2: #{frru_forward.7} parent=0 // loop_pre_header
    _
  $region3: #{frru_forward.7} parent=0 // loop_header
    %s9 = sphi 0, %s13
    %p10 = scmp.ge.s32.totalorder %s9, 4
    %s16 = sphi 0, %s28
    %s17 = sphi 0, %s24
    %s18 = sphi 0, %s16
    %s19 = sphi 0, %s17
    %s20 = sphi 0, %s18
    %s21 = sphi 0, %s19
    %s33 = sphi 0, %s35
    %s36 = sphi 0, %s33
    %s37 = sphi 0, %s36
    %s53 = sphi 0, %s37
    %s57 = sphi 0, %s57
    %s59 = sphi 0, %s57
    %s60 = sphi 0, %s59
    %s74 = sphi 0, %s60
    %s82 = sphi 0, %s84
    %s85 = sphi 0, %s82
    %s86 = sphi 0, %s85
    %s102 = sphi 0, %s86
    %s110 = sphi 0, %s112
    %s113 = sphi 0, %s110
    %s114 = sphi 0, %s113
    %s130 = sphi 0, %s114
  $region4: #{frru_forward.7} parent=0 // loop_header_branch
    %12 = sbr.rel (%p10) target = $region8
  $region5: #{frru_forward.7} parent=0 // loop_body
    %s14 = ssub.s32 %s9, 1
    %s15 = ssub.s32 %s9, 2
    %s22 = sadd.s32 1, %s17
    %p23 = scmp.ge.s32.totalorder %s22, 1
    %s24 = scalar_select %p23, 0, %s22
    %s25 = sadd.s32 1, %s16
    %s26 = scalar_select %p23, %s25, %s16
    %p27 = scmp.ge.s32.totalorder %s26, 2
    %s28 = scalar_select %p27, 0, %s26
    %s29 = ssub.s32 %s16, %s28
    %s30 = ssub.s32 %s17, %s24
    %s31 = sor.u32 %s29, %s30
    %p32 = scmp.eq.s32.totalorder %s31, 0
    %s34 = sadd.s32 %s33, 1
    %s35 = scalar_select %p32, %s33, %s34
    %p38 = pneg %p32
    %p39 = scmp.eq.s32.totalorder %s9, 1
    %p40 = por %p38, %p39
    %p41 = scmp.ne.s32.totalorder %s33, %s36
    %p42 = scmp.eq.s32.totalorder %s9, 0
    %p43 = por %p41, %p42
    %p44 = scmp.ne.s32.totalorder %s33, %s36
    %p45 = scmp.eq.s32.totalorder %s14, 1
    %p46 = por %p44, %p45
    %p47 = scmp.ne.s32.totalorder %s36, %s37
    %p48 = scmp.eq.s32.totalorder %s14, 0
    %p49 = por %p47, %p48
    %p50 = scmp.ne.s32.totalorder %s36, %s37
    %p51 = scmp.eq.s32.totalorder %s15, 1
    %p52 = por %p50, %p51
    %p54 = scmp.ne.s32.totalorder %s37, %s53
    %p55 = scmp.eq.s32.totalorder %s15, 0
    %p56 = por %p54, %p55
    %s58 = sadd.s32 %s57, 1
    %p61 = scmp.eq.s32.totalorder %s9, 1
    %p62 = scmp.ne.s32.totalorder %s57, %s59
    %p63 = scmp.eq.s32.totalorder %s9, 0
    %p64 = por %p62, %p63
    %p65 = scmp.ne.s32.totalorder %s57, %s59
    %p66 = scmp.eq.s32.totalorder %s14, 1
    %p67 = por %p65, %p66
    %p68 = scmp.ne.s32.totalorder %s59, %s60
    %p69 = scmp.eq.s32.totalorder %s14, 0
    %p70 = por %p68, %p69
    %p71 = scmp.ne.s32.totalorder %s59, %s60
    %p72 = scmp.eq.s32.totalorder %s15, 1
    %p73 = por %p71, %p72
    %p75 = scmp.ne.s32.totalorder %s60, %s74
    %p76 = scmp.eq.s32.totalorder %s15, 0
    %p77 = por %p75, %p76
    %s78 = ssub.s32 %s16, %s28
    %s79 = ssub.s32 %s17, %s24
    %s80 = sor.u32 %s78, %s79
    %p81 = scmp.eq.s32.totalorder %s80, 0
    %s83 = sadd.s32 %s82, 1
    %s84 = scalar_select %p81, %s82, %s83
    %p87 = pneg %p81
    %p88 = scmp.eq.s32.totalorder %s9, 1
    %p89 = por %p87, %p88
    %p90 = scmp.ne.s32.totalorder %s82, %s85
    %p91 = scmp.eq.s32.totalorder %s9, 0
    %p92 = por %p90, %p91
    %p93 = scmp.ne.s32.totalorder %s82, %s85
    %p94 = scmp.eq.s32.totalorder %s14, 1
    %p95 = por %p93, %p94
    %p96 = scmp.ne.s32.totalorder %s85, %s86
    %p97 = scmp.eq.s32.totalorder %s14, 0
    %p98 = por %p96, %p97
    %p99 = scmp.ne.s32.totalorder %s85, %s86
    %p100 = scmp.eq.s32.totalorder %s15, 1
    %p101 = por %p99, %p100
    %p103 = scmp.ne.s32.totalorder %s86, %s102
    %p104 = scmp.eq.s32.totalorder %s15, 0
    %p105 = por %p103, %p104
    %s106 = ssub.s32 %s16, %s28
    %s107 = ssub.s32 %s17, %s24
    %s108 = sor.u32 %s106, %s107
    %p109 = scmp.eq.s32.totalorder %s108, 0
    %s111 = sadd.s32 %s110, 1
    %s112 = scalar_select %p109, %s110, %s111
    %p115 = pneg %p109
    %p116 = scmp.eq.s32.totalorder %s9, 1
    %p117 = por %p115, %p116
    %p118 = scmp.ne.s32.totalorder %s110, %s113
    %p119 = scmp.eq.s32.totalorder %s9, 0
    %p120 = por %p118, %p119
    %p121 = scmp.ne.s32.totalorder %s110, %s113
    %p122 = scmp.eq.s32.totalorder %s14, 1
    %p123 = por %p121, %p122
    %p124 = scmp.ne.s32.totalorder %s113, %s114
    %p125 = scmp.eq.s32.totalorder %s14, 0
    %p126 = por %p124, %p125
    %p127 = scmp.ne.s32.totalorder %s113, %s114
    %p128 = scmp.eq.s32.totalorder %s15, 1
    %p129 = por %p127, %p128
    %p131 = scmp.ne.s32.totalorder %s114, %s130
    %p132 = scmp.eq.s32.totalorder %s15, 0
    %p133 = por %p131, %p132
    %p134 = scmp.le.s32.totalorder 1, %s9
    %p135 = scmp.lt.s32.totalorder %s9, 3
    %p136 = pnand %p134, %p135
    %p137 = pneg %p136
    // Predicated region
    $region9: #{frru_forward.7} parent=5 // pred_check
      _
    $region10: #{frru_forward.7} parent=5 // pred_check_branch
      %139 = sbr.rel (%p136) target = $region12
    $region11: #{frru_forward.7} parent=5 // pred_region
      %s140 = ssub.s32 %s9, 1
      // Predicated region
      $region13: #{frru_forward.7} parent=11 // pred_check
        %p141 = pneg %p70
      $region14: #{frru_forward.7} parent=11 // pred_check_branch
        %143 = sbr.rel (%p141) target = $region16
      $region15: #{frru_forward.7} parent=11 // pred_region
        _
      $region16: #{frru_forward.7} parent=11 // pred_fallthru
        _
    $region12: #{frru_forward.7} parent=5 // pred_fallthru
      _
    %p144 = scmp.lt.s32.totalorder %s9, 2
    // Predicated region
    $region17: #{frru_forward.7} parent=5 // pred_check
      %p145 = pneg %p144
    $region18: #{frru_forward.7} parent=5 // pred_check_branch
      %147 = sbr.rel (%p145) target = $region20
    $region19: #{frru_forward.7} parent=5 // pred_region
      // Predicated region
      $region21: #{frru_forward.7} parent=19 // pred_check
        %p148 = pneg %p43
      $region22: #{frru_forward.7} parent=19 // pred_check_branch
        %150 = sbr.rel (%p148) target = $region24
      $region23: #{frru_forward.7} parent=19 // pred_region
        %s151 = smul.u32 64, %s17
        %p152 = scmp.lt.s32.totalorder %s16, 1
        %s153 = scalar_select %p152, %s16, 1
        %p154 = scmp.lt.s32.totalorder %s151, 63
        %s155 = scalar_select %p154, %s151, 63
        %s156 = smul.addr %s153, 64
        %s157 = sadd.s32 %s155, %s156
        %s158 = smul.addr %s157, 8
        %s159 = scalar_lea.vmem %s0, %s158
        %s160 = smul.u32 64, %s17
      $region24: #{frru_forward.7} parent=19 // pred_fallthru
        _
      // Predicated region
      $region25: #{frru_forward.7} parent=19 // pred_check
        %p161 = pneg %p92
      $region26: #{frru_forward.7} parent=19 // pred_check_branch
        %163 = sbr.rel (%p161) target = $region28
      $region27: #{frru_forward.7} parent=19 // pred_region
        %s164 = smul.u32 64, %s17
        %p165 = scmp.lt.s32.totalorder %s16, 1
        %s166 = scalar_select %p165, %s16, 1
        %p167 = scmp.lt.s32.totalorder %s164, 63
        %s168 = scalar_select %p167, %s164, 63
        %s169 = smul.addr %s166, 64
        %s170 = sadd.s32 %s168, %s169
        %s171 = smul.addr %s170, 8
        %s172 = scalar_lea.vmem %s2, %s171
        %s173 = smul.u32 64, %s17
      $region28: #{frru_forward.7} parent=19 // pred_fallthru
        _
    $region20: #{frru_forward.7} parent=5 // pred_fallthru
      _
    %p174 = scmp.le.s32.totalorder 1, %s9
    %p175 = scmp.lt.s32.totalorder %s9, 3
    %p176 = pnand %p174, %p175
    %p177 = pneg %p176
    // Predicated region
    $region29: #{frru_forward.7} parent=5 // pred_check
      _
    $region30: #{frru_forward.7} parent=5 // pred_check_branch
      %179 = sbr.rel (%p176) target = $region32
    $region31: #{frru_forward.7} parent=5 // pred_region
      %s180 = ssub.s32 %s9, 1
      %s181 = smul.u32 64, %s19
      %p182 = scmp.lt.s32.totalorder %s18, 1
      %s183 = scalar_select %p182, %s18, 1
      %p184 = scmp.lt.s32.totalorder %s181, 63
      %s185 = scalar_select %p184, %s181, 63
      %s186 = smul.addr %s183, 64
      %s187 = sadd.s32 %s185, %s186
      %s188 = smul.addr %s187, 8
      %s189 = scalar_lea.vmem %s0, %s188
      %p190 = pneg %p49
      %p191 = pneg %p46
      %p192 = pneg %p70
      %p193 = pneg %p67
      %s194 = smul.u32 64, %s19
      %p195 = scmp.lt.s32.totalorder %s18, 1
      %s196 = scalar_select %p195, %s18, 1
      %p197 = scmp.lt.s32.totalorder %s194, 63
      %s198 = scalar_select %p197, %s194, 63
      %s199 = smul.addr %s196, 64
      %s200 = sadd.s32 %s198, %s199
      %s201 = smul.addr %s200, 8
      %s202 = scalar_lea.vmem %s2, %s201
      %p203 = pneg %p98
      %p204 = pneg %p95
      %p205 = pneg %p126
      %p206 = pneg %p123
      %s207 = smul.u32 64, %s19
      %p208 = scmp.lt.s32.totalorder %s18, 1
      %s209 = scalar_select %p208, %s18, 1
      %p210 = scmp.lt.s32.totalorder %s207, 63
      %s211 = scalar_select %p210, %s207, 63
      %s212 = smul.addr %s209, 64
      %s213 = sadd.s32 %s211, %s212
      %s214 = smul.addr %s213, 8
      %s215 = scalar_lea.vmem %s3, %s214
      %s216 = smul.u32 64, %s19
      %p217 = scmp.lt.s32.totalorder %s18, 1
      %s218 = scalar_select %p217, %s18, 1
      %p219 = scmp.lt.s32.totalorder %s216, 63
      %s220 = scalar_select %p219, %s216, 63
      %s221 = smul.addr %s218, 64
      %s222 = sadd.s32 %s220, %s221
      %s223 = smul.addr %s222, 8
      %s224 = scalar_lea.vmem %s0, %s223
      %s225 = smul.u32 64, %s19
      %s226 = smul.u32 64, %s19
      %p227 = scmp.lt.s32.totalorder %s18, 1
      %s228 = scalar_select %p227, %s18, 1
      %p229 = scmp.lt.s32.totalorder %s226, 63
      %s230 = scalar_select %p229, %s226, 63
      %s231 = smul.addr %s228, 64
      %s232 = sadd.s32 %s230, %s231
      %s233 = smul.addr %s232, 8
      %s234 = scalar_lea.vmem %s2, %s233
      %s235 = smul.u32 64, %s19
      %s236 = smul.u32 64, %s19
      %p237 = scmp.lt.s32.totalorder %s18, 1
      %s238 = scalar_select %p237, %s18, 1
      %p239 = scmp.lt.s32.totalorder %s236, 63
      %s240 = scalar_select %p239, %s236, 63
      %s241 = smul.addr %s238, 64
      %s242 = sadd.s32 %s240, %s241
      %s243 = smul.addr %s242, 8
      %s244 = scalar_lea.vmem %s3, %s243
      %s245 = smul.u32 64, %s19
      %v246 = vld [vmem:[%s234] sm:$0xff]
      %v247 = vld [vmem:[%s234 + $0x8] sm:$0xff]
      %v248 = vld [vmem:[%s234 + $0x10] sm:$0xff]
      %v249 = vld [vmem:[%s234 + $0x18] sm:$0xff]
      %v250 = vld [vmem:[%s234 + $0x20] sm:$0xff]
      %v251 = vld [vmem:[%s234 + $0x28] sm:$0xff]
      %v252 = vld [vmem:[%s234 + $0x30] sm:$0xff]
      %v253 = vld [vmem:[%s234 + $0x38] sm:$0xff]
      %v254 = vld [vmem:[%s234 + $0x40] sm:$0xff]
      %v255 = vld [vmem:[%s234 + $0x48] sm:$0xff]
      %v256 = vld [vmem:[%s234 + $0x50] sm:$0xff]
      %v257 = vld [vmem:[%s234 + $0x58] sm:$0xff]
      %v258 = vld [vmem:[%s234 + $0x60] sm:$0xff]
      %v259 = vld [vmem:[%s234 + $0x68] sm:$0xff]
      %v260 = vld [vmem:[%s234 + $0x70] sm:$0xff]
      %v261 = vld [vmem:[%s234 + $0x78] sm:$0xff]
      %v262 = vld [vmem:[%s234 + $0x80] sm:$0xff]
      %v263 = vld [vmem:[%s234 + $0x88] sm:$0xff]
      %v264 = vld [vmem:[%s234 + $0x90] sm:$0xff]
      %v265 = vld [vmem:[%s234 + $0x98] sm:$0xff]
      %v266 = vld [vmem:[%s234 + $0xa0] sm:$0xff]
      %v267 = vld [vmem:[%s234 + $0xa8] sm:$0xff]
      %v268 = vld [vmem:[%s234 + $0xb0] sm:$0xff]
      %v269 = vld [vmem:[%s234 + $0xb8] sm:$0xff]
      %v270 = vld [vmem:[%s234 + $0xc0] sm:$0xff]
      %v271 = vld [vmem:[%s234 + $0xc8] sm:$0xff]
      %v272 = vld [vmem:[%s234 + $0xd0] sm:$0xff]
      %v273 = vld [vmem:[%s234 + $0xd8] sm:$0xff]
      %v274 = vld [vmem:[%s234 + $0xe0] sm:$0xff]
      %v275 = vld [vmem:[%s234 + $0xe8] sm:$0xff]
      %v276 = vld [vmem:[%s234 + $0xf0] sm:$0xff]
      %v277 = vld [vmem:[%s234 + $0xf8] sm:$0xff]
      %v278 = vld [vmem:[%s234 + $0x100] sm:$0xff]
      %v279 = vld [vmem:[%s234 + $0x108] sm:$0xff]
      %v280 = vld [vmem:[%s234 + $0x110] sm:$0xff]
      %v281 = vld [vmem:[%s234 + $0x118] sm:$0xff]
      %v282 = vld [vmem:[%s234 + $0x120] sm:$0xff]
      %v283 = vld [vmem:[%s234 + $0x128] sm:$0xff]
      %v284 = vld [vmem:[%s234 + $0x130] sm:$0xff]
      %v285 = vld [vmem:[%s234 + $0x138] sm:$0xff]
      %v286 = vld [vmem:[%s234 + $0x140] sm:$0xff]
      %v287 = vld [vmem:[%s234 + $0x148] sm:$0xff]
      %v288 = vld [vmem:[%s234 + $0x150] sm:$0xff]
      %v289 = vld [vmem:[%s234 + $0x158] sm:$0xff]
      %v290 = vld [vmem:[%s234 + $0x160] sm:$0xff]
      %v291 = vld [vmem:[%s234 + $0x168] sm:$0xff]
      %v292 = vld [vmem:[%s234 + $0x170] sm:$0xff]
      %v293 = vld [vmem:[%s234 + $0x178] sm:$0xff]
      %v294 = vld [vmem:[%s234 + $0x180] sm:$0xff]
      %v295 = vld [vmem:[%s234 + $0x188] sm:$0xff]
      %v296 = vld [vmem:[%s234 + $0x190] sm:$0xff]
      %v297 = vld [vmem:[%s234 + $0x198] sm:$0xff]
      %v298 = vld [vmem:[%s234 + $0x1a0] sm:$0xff]
      %v299 = vld [vmem:[%s234 + $0x1a8] sm:$0xff]
      %v300 = vld [vmem:[%s234 + $0x1b0] sm:$0xff]
      %v301 = vld [vmem:[%s234 + $0x1b8] sm:$0xff]
      %v302 = vld [vmem:[%s234 + $0x1c0] sm:$0xff]
      %v303 = vld [vmem:[%s234 + $0x1c8] sm:$0xff]
      %v304 = vld [vmem:[%s234 + $0x1d0] sm:$0xff]
      %v305 = vld [vmem:[%s234 + $0x1d8] sm:$0xff]
      %v306 = vld [vmem:[%s234 + $0x1e0] sm:$0xff]
      %v307 = vld [vmem:[%s234 + $0x1e8] sm:$0xff]
      %v308 = vld [vmem:[%s234 + $0x1f0] sm:$0xff]
      %v309 = vld [vmem:[%s234 + $0x1f8] sm:$0xff]
      %v310 = vld [vmem:[%s224] sm:$0xff]
      %v311 = vld [vmem:[%s224 + $0x8] sm:$0xff]
      %v312 = vld [vmem:[%s224 + $0x10] sm:$0xff]
      %v313 = vld [vmem:[%s224 + $0x18] sm:$0xff]
      %v314 = vld [vmem:[%s224 + $0x20] sm:$0xff]
      %v315 = vld [vmem:[%s224 + $0x28] sm:$0xff]
      %v316 = vld [vmem:[%s224 + $0x30] sm:$0xff]
      %v317 = vld [vmem:[%s224 + $0x38] sm:$0xff]
      %v318 = vld [vmem:[%s224 + $0x40] sm:$0xff]
      %v319 = vld [vmem:[%s224 + $0x48] sm:$0xff]
      %v320 = vld [vmem:[%s224 + $0x50] sm:$0xff]
      %v321 = vld [vmem:[%s224 + $0x58] sm:$0xff]
      %v322 = vld [vmem:[%s224 + $0x60] sm:$0xff]
      %v323 = vld [vmem:[%s224 + $0x68] sm:$0xff]
      %v324 = vld [vmem:[%s224 + $0x70] sm:$0xff]
      %v325 = vld [vmem:[%s224 + $0x78] sm:$0xff]
      %v326 = vld [vmem:[%s224 + $0x80] sm:$0xff]
      %v327 = vld [vmem:[%s224 + $0x88] sm:$0xff]
      %v328 = vld [vmem:[%s224 + $0x90] sm:$0xff]
      %v329 = vld [vmem:[%s224 + $0x98] sm:$0xff]
      %v330 = vld [vmem:[%s224 + $0xa0] sm:$0xff]
      %v331 = vld [vmem:[%s224 + $0xa8] sm:$0xff]
      %v332 = vld [vmem:[%s224 + $0xb0] sm:$0xff]
      %v333 = vld [vmem:[%s224 + $0xb8] sm:$0xff]
      %v334 = vld [vmem:[%s224 + $0xc0] sm:$0xff]
      %v335 = vld [vmem:[%s224 + $0xc8] sm:$0xff]
      %v336 = vld [vmem:[%s224 + $0xd0] sm:$0xff]
      %v337 = vld [vmem:[%s224 + $0xd8] sm:$0xff]
      %v338 = vld [vmem:[%s224 + $0xe0] sm:$0xff]
      %v339 = vld [vmem:[%s224 + $0xe8] sm:$0xff]
      %v340 = vld [vmem:[%s224 + $0xf0] sm:$0xff]
      %v341 = vld [vmem:[%s224 + $0xf8] sm:$0xff]
      %v342 = vld [vmem:[%s224 + $0x100] sm:$0xff]
      %v343 = vld [vmem:[%s224 + $0x108] sm:$0xff]
      %v344 = vld [vmem:[%s224 + $0x110] sm:$0xff]
      %v345 = vld [vmem:[%s224 + $0x118] sm:$0xff]
      %v346 = vld [vmem:[%s224 + $0x120] sm:$0xff]
      %v347 = vld [vmem:[%s224 + $0x128] sm:$0xff]
      %v348 = vld [vmem:[%s224 + $0x130] sm:$0xff]
      %v349 = vld [vmem:[%s224 + $0x138] sm:$0xff]
      %v350 = vld [vmem:[%s224 + $0x140] sm:$0xff]
      %v351 = vld [vmem:[%s224 + $0x148] sm:$0xff]
      %v352 = vld [vmem:[%s224 + $0x150] sm:$0xff]
      %v353 = vld [vmem:[%s224 + $0x158] sm:$0xff]
      %v354 = vld [vmem:[%s224 + $0x160] sm:$0xff]
      %v355 = vld [vmem:[%s224 + $0x168] sm:$0xff]
      %v356 = vld [vmem:[%s224 + $0x170] sm:$0xff]
      %v357 = vld [vmem:[%s224 + $0x178] sm:$0xff]
      %v358 = vld [vmem:[%s224 + $0x180] sm:$0xff]
      %v359 = vld [vmem:[%s224 + $0x188] sm:$0xff]
      %v360 = vld [vmem:[%s224 + $0x190] sm:$0xff]
      %v361 = vld [vmem:[%s224 + $0x198] sm:$0xff]
      %v362 = vld [vmem:[%s224 + $0x1a0] sm:$0xff]
      %v363 = vld [vmem:[%s224 + $0x1a8] sm:$0xff]
      %v364 = vld [vmem:[%s224 + $0x1b0] sm:$0xff]
      %v365 = vld [vmem:[%s224 + $0x1b8] sm:$0xff]
      %v366 = vld [vmem:[%s224 + $0x1c0] sm:$0xff]
      %v367 = vld [vmem:[%s224 + $0x1c8] sm:$0xff]
      %v368 = vld [vmem:[%s224 + $0x1d0] sm:$0xff]
      %v369 = vld [vmem:[%s224 + $0x1d8] sm:$0xff]
      %v370 = vld [vmem:[%s224 + $0x1e0] sm:$0xff]
      %v371 = vld [vmem:[%s224 + $0x1e8] sm:$0xff]
      %v372 = vld [vmem:[%s224 + $0x1f0] sm:$0xff]
      %v373 = vld [vmem:[%s224 + $0x1f8] sm:$0xff]
      %v374 = vld [vmem:[%s1] sm:$0xff]
      %v375 = vld [vmem:[%s1 + $0x8] sm:$0xff]
      %vm376 = vcmask 130048
      %v378 = vsel %vm376, %v310, 0
      %v381 = vsel %vm376, %v311, 0
      %v384 = vsel %vm376, %v312, 0
      %v387 = vsel %vm376, %v313, 0
      %v390 = vsel %vm376, %v314, 0
      %v393 = vsel %vm376, %v315, 0
      %v396 = vsel %vm376, %v316, 0
      %v399 = vsel %vm376, %v317, 0
      %v402 = vsel %vm376, %v318, 0
      %v405 = vsel %vm376, %v319, 0
      %v408 = vsel %vm376, %v320, 0
      %v411 = vsel %vm376, %v321, 0
      %v414 = vsel %vm376, %v322, 0
      %v417 = vsel %vm376, %v323, 0
      %v420 = vsel %vm376, %v324, 0
      %v423 = vsel %vm376, %v325, 0
      %v426 = vsel %vm376, %v326, 0
      %v429 = vsel %vm376, %v327, 0
      %v432 = vsel %vm376, %v328, 0
      %v435 = vsel %vm376, %v329, 0
      %v438 = vsel %vm376, %v330, 0
      %v441 = vsel %vm376, %v331, 0
      %v444 = vsel %vm376, %v332, 0
      %v447 = vsel %vm376, %v333, 0
      %v450 = vsel %vm376, %v334, 0
      %v453 = vsel %vm376, %v335, 0
      %v456 = vsel %vm376, %v336, 0
      %v459 = vsel %vm376, %v337, 0
      %v462 = vsel %vm376, %v338, 0
      %v465 = vsel %vm376, %v339, 0
      %v468 = vsel %vm376, %v340, 0
      %v471 = vsel %vm376, %v341, 0
      %v474 = vsel %vm376, %v342, 0
      %v477 = vsel %vm376, %v343, 0
      %v480 = vsel %vm376, %v344, 0
      %v483 = vsel %vm376, %v345, 0
      %v486 = vsel %vm376, %v346, 0
      %v489 = vsel %vm376, %v347, 0
      %v492 = vsel %vm376, %v348, 0
      %v495 = vsel %vm376, %v349, 0
      %v498 = vsel %vm376, %v350, 0
      %v501 = vsel %vm376, %v351, 0
      %v504 = vsel %vm376, %v352, 0
      %v507 = vsel %vm376, %v353, 0
      %v510 = vsel %vm376, %v354, 0
      %v513 = vsel %vm376, %v355, 0
      %v516 = vsel %vm376, %v356, 0
      %v519 = vsel %vm376, %v357, 0
      %v522 = vsel %vm376, %v358, 0
      %v525 = vsel %vm376, %v359, 0
      %v528 = vsel %vm376, %v360, 0
      %v531 = vsel %vm376, %v361, 0
      %v534 = vsel %vm376, %v362, 0
      %v537 = vsel %vm376, %v363, 0
      %v540 = vsel %vm376, %v364, 0
      %v543 = vsel %vm376, %v365, 0
      %v546 = vsel %vm376, %v366, 0
      %v549 = vsel %vm376, %v367, 0
      %v552 = vsel %vm376, %v368, 0
      %v555 = vsel %vm376, %v369, 0
      %v558 = vsel %vm376, %v370, 0
      %v561 = vsel %vm376, %v371, 0
      %v564 = vsel %vm376, %v372, 0
      %v567 = vsel %vm376, %v373, 0
      %569 = vmatpush.msra.mxu0 0.0
      %570 = vmatpush.msra.mxu0 0.0
      %571 = vmatpush.msra.mxu0 0.0
      %572 = vmatpush.msra.mxu0 0.0
      %573 = vmatpush.msra.mxu0 0.0
      %574 = vmatpush.msra.mxu0 0.0
      %575 = vmatpush.msra.mxu0 0.0
      %576 = vmatpush.msra.mxu0 0.0
      %577 = vmatpush.msra.mxu0 0.0
      %578 = vmatpush.msra.mxu0 0.0
      %579 = vmatpush.msra.mxu0 0.0
      %580 = vmatpush.msra.mxu0 0.0
      %581 = vmatpush.msra.mxu0 0.0
      %582 = vmatpush.msra.mxu0 0.0
      %583 = vmatpush.msra.mxu0 %v375
      %584 = vmatpush.msra.mxu0 %v374
      %585 = vmatmul.f32.gmra.mxu0 %v378
      %v586 = vpop.f32.mrf.mxu0
      %v587 = vadd.f32 0.0, %v586
      %588 = vmatmul.f32.gmra.mxu0 %v381
      %v589 = vpop.f32.mrf.mxu0
      %v590 = vadd.f32 0.0, %v589
      %591 = vmatmul.f32.gmra.mxu0 %v384
      %v592 = vpop.f32.mrf.mxu0
      %v593 = vadd.f32 0.0, %v592
      %594 = vmatmul.f32.gmra.mxu0 %v387
      %v595 = vpop.f32.mrf.mxu0
      %v596 = vadd.f32 0.0, %v595
      %597 = vmatmul.f32.gmra.mxu0 %v390
      %v598 = vpop.f32.mrf.mxu0
      %v599 = vadd.f32 0.0, %v598
      %600 = vmatmul.f32.gmra.mxu0 %v393
      %v601 = vpop.f32.mrf.mxu0
      %v602 = vadd.f32 0.0, %v601
      %603 = vmatmul.f32.gmra.mxu0 %v396
      %v604 = vpop.f32.mrf.mxu0
      %v605 = vadd.f32 0.0, %v604
      %606 = vmatmul.f32.gmra.mxu0 %v399
      %v607 = vpop.f32.mrf.mxu0
      %v608 = vadd.f32 0.0, %v607
      %609 = vmatmul.f32.gmra.mxu0 %v402
      %v610 = vpop.f32.mrf.mxu0
      %v611 = vadd.f32 0.0, %v610
      %612 = vmatmul.f32.gmra.mxu0 %v405
      %v613 = vpop.f32.mrf.mxu0
      %v614 = vadd.f32 0.0, %v613
      %615 = vmatmul.f32.gmra.mxu0 %v408
      %v616 = vpop.f32.mrf.mxu0
      %v617 = vadd.f32 0.0, %v616
      %618 = vmatmul.f32.gmra.mxu0 %v411
      %v619 = vpop.f32.mrf.mxu0
      %v620 = vadd.f32 0.0, %v619
      %621 = vmatmul.f32.gmra.mxu0 %v414
      %v622 = vpop.f32.mrf.mxu0
      %v623 = vadd.f32 0.0, %v622
      %624 = vmatmul.f32.gmra.mxu0 %v417
      %v625 = vpop.f32.mrf.mxu0
      %v626 = vadd.f32 0.0, %v625
      %627 = vmatmul.f32.gmra.mxu0 %v420
      %v628 = vpop.f32.mrf.mxu0
      %v629 = vadd.f32 0.0, %v628
      %630 = vmatmul.f32.gmra.mxu0 %v423
      %v631 = vpop.f32.mrf.mxu0
      %v632 = vadd.f32 0.0, %v631
      %633 = vmatmul.f32.gmra.mxu0 %v426
      %v634 = vpop.f32.mrf.mxu0
      %v635 = vadd.f32 0.0, %v634
      %636 = vmatmul.f32.gmra.mxu0 %v429
      %v637 = vpop.f32.mrf.mxu0
      %v638 = vadd.f32 0.0, %v637
      %639 = vmatmul.f32.gmra.mxu0 %v432
      %v640 = vpop.f32.mrf.mxu0
      %v641 = vadd.f32 0.0, %v640
      %642 = vmatmul.f32.gmra.mxu0 %v435
      %v643 = vpop.f32.mrf.mxu0
      %v644 = vadd.f32 0.0, %v643
      %645 = vmatmul.f32.gmra.mxu0 %v438
      %v646 = vpop.f32.mrf.mxu0
      %v647 = vadd.f32 0.0, %v646
      %648 = vmatmul.f32.gmra.mxu0 %v441
      %v649 = vpop.f32.mrf.mxu0
      %v650 = vadd.f32 0.0, %v649
      %651 = vmatmul.f32.gmra.mxu0 %v444
      %v652 = vpop.f32.mrf.mxu0
      %v653 = vadd.f32 0.0, %v652
      %654 = vmatmul.f32.gmra.mxu0 %v447
      %v655 = vpop.f32.mrf.mxu0
      %v656 = vadd.f32 0.0, %v655
      %657 = vmatmul.f32.gmra.mxu0 %v450
      %v658 = vpop.f32.mrf.mxu0
      %v659 = vadd.f32 0.0, %v658
      %660 = vmatmul.f32.gmra.mxu0 %v453
      %v661 = vpop.f32.mrf.mxu0
      %v662 = vadd.f32 0.0, %v661
      %663 = vmatmul.f32.gmra.mxu0 %v456
      %v664 = vpop.f32.mrf.mxu0
      %v665 = vadd.f32 0.0, %v664
      %666 = vmatmul.f32.gmra.mxu0 %v459
      %v667 = vpop.f32.mrf.mxu0
      %v668 = vadd.f32 0.0, %v667
      %669 = vmatmul.f32.gmra.mxu0 %v462
      %v670 = vpop.f32.mrf.mxu0
      %v671 = vadd.f32 0.0, %v670
      %672 = vmatmul.f32.gmra.mxu0 %v465
      %v673 = vpop.f32.mrf.mxu0
      %v674 = vadd.f32 0.0, %v673
      %675 = vmatmul.f32.gmra.mxu0 %v468
      %v676 = vpop.f32.mrf.mxu0
      %v677 = vadd.f32 0.0, %v676
      %678 = vmatmul.f32.gmra.mxu0 %v471
      %v679 = vpop.f32.mrf.mxu0
      %v680 = vadd.f32 0.0, %v679
      %681 = vmatmul.f32.gmra.mxu0 %v474
      %v682 = vpop.f32.mrf.mxu0
      %v683 = vadd.f32 0.0, %v682
      %684 = vmatmul.f32.gmra.mxu0 %v477
      %v685 = vpop.f32.mrf.mxu0
      %v686 = vadd.f32 0.0, %v685
      %687 = vmatmul.f32.gmra.mxu0 %v480
      %v688 = vpop.f32.mrf.mxu0
      %v689 = vadd.f32 0.0, %v688
      %690 = vmatmul.f32.gmra.mxu0 %v483
      %v691 = vpop.f32.mrf.mxu0
      %v692 = vadd.f32 0.0, %v691
      %693 = vmatmul.f32.gmra.mxu0 %v486
      %v694 = vpop.f32.mrf.mxu0
      %v695 = vadd.f32 0.0, %v694
      %696 = vmatmul.f32.gmra.mxu0 %v489
      %v697 = vpop.f32.mrf.mxu0
      %v698 = vadd.f32 0.0, %v697
      %699 = vmatmul.f32.gmra.mxu0 %v492
      %v700 = vpop.f32.mrf.mxu0
      %v701 = vadd.f32 0.0, %v700
      %702 = vmatmul.f32.gmra.mxu0 %v495
      %v703 = vpop.f32.mrf.mxu0
      %v704 = vadd.f32 0.0, %v703
      %705 = vmatmul.f32.gmra.mxu0 %v498
      %v706 = vpop.f32.mrf.mxu0
      %v707 = vadd.f32 0.0, %v706
      %708 = vmatmul.f32.gmra.mxu0 %v501
      %v709 = vpop.f32.mrf.mxu0
      %v710 = vadd.f32 0.0, %v709
      %711 = vmatmul.f32.gmra.mxu0 %v504
      %v712 = vpop.f32.mrf.mxu0
      %v713 = vadd.f32 0.0, %v712
      %714 = vmatmul.f32.gmra.mxu0 %v507
      %v715 = vpop.f32.mrf.mxu0
      %v716 = vadd.f32 0.0, %v715
      %717 = vmatmul.f32.gmra.mxu0 %v510
      %v718 = vpop.f32.mrf.mxu0
      %v719 = vadd.f32 0.0, %v718
      %720 = vmatmul.f32.gmra.mxu0 %v513
      %v721 = vpop.f32.mrf.mxu0
      %v722 = vadd.f32 0.0, %v721
      %723 = vmatmul.f32.gmra.mxu0 %v516
      %v724 = vpop.f32.mrf.mxu0
      %v725 = vadd.f32 0.0, %v724
      %726 = vmatmul.f32.gmra.mxu0 %v519
      %v727 = vpop.f32.mrf.mxu0
      %v728 = vadd.f32 0.0, %v727
      %729 = vmatmul.f32.gmra.mxu0 %v522
      %v730 = vpop.f32.mrf.mxu0
      %v731 = vadd.f32 0.0, %v730
      %732 = vmatmul.f32.gmra.mxu0 %v525
      %v733 = vpop.f32.mrf.mxu0
      %v734 = vadd.f32 0.0, %v733
      %735 = vmatmul.f32.gmra.mxu0 %v528
      %v736 = vpop.f32.mrf.mxu0
      %v737 = vadd.f32 0.0, %v736
      %738 = vmatmul.f32.gmra.mxu0 %v531
      %v739 = vpop.f32.mrf.mxu0
      %v740 = vadd.f32 0.0, %v739
      %741 = vmatmul.f32.gmra.mxu0 %v534
      %v742 = vpop.f32.mrf.mxu0
      %v743 = vadd.f32 0.0, %v742
      %744 = vmatmul.f32.gmra.mxu0 %v537
      %v745 = vpop.f32.mrf.mxu0
      %v746 = vadd.f32 0.0, %v745
      %747 = vmatmul.f32.gmra.mxu0 %v540
      %v748 = vpop.f32.mrf.mxu0
      %v749 = vadd.f32 0.0, %v748
      %750 = vmatmul.f32.gmra.mxu0 %v543
      %v751 = vpop.f32.mrf.mxu0
      %v752 = vadd.f32 0.0, %v751
      %753 = vmatmul.f32.gmra.mxu0 %v546
      %v754 = vpop.f32.mrf.mxu0
      %v755 = vadd.f32 0.0, %v754
      %756 = vmatmul.f32.gmra.mxu0 %v549
      %v757 = vpop.f32.mrf.mxu0
      %v758 = vadd.f32 0.0, %v757
      %759 = vmatmul.f32.gmra.mxu0 %v552
      %v760 = vpop.f32.mrf.mxu0
      %v761 = vadd.f32 0.0, %v760
      %762 = vmatmul.f32.gmra.mxu0 %v555
      %v763 = vpop.f32.mrf.mxu0
      %v764 = vadd.f32 0.0, %v763
      %765 = vmatmul.f32.gmra.mxu0 %v558
      %v766 = vpop.f32.mrf.mxu0
      %v767 = vadd.f32 0.0, %v766
      %768 = vmatmul.f32.gmra.mxu0 %v561
      %v769 = vpop.f32.mrf.mxu0
      %v770 = vadd.f32 0.0, %v769
      %771 = vmatmul.f32.gmra.mxu0 %v564
      %v772 = vpop.f32.mrf.mxu0
      %v773 = vadd.f32 0.0, %v772
      %774 = vmatmul.f32.gmra.mxu0 %v567
      %v775 = vpop.f32.mrf.mxu0
      %v776 = vadd.f32 0.0, %v775
      %777 = vdwg.mxu0
      %v778 = vadd.f32 %v246, %v587
      %v779 = vadd.f32 %v247, %v590
      %v780 = vadd.f32 %v248, %v593
      %v781 = vadd.f32 %v249, %v596
      %v782 = vadd.f32 %v250, %v599
      %v783 = vadd.f32 %v251, %v602
      %v784 = vadd.f32 %v252, %v605
      %v785 = vadd.f32 %v253, %v608
      %v786 = vadd.f32 %v254, %v611
      %v787 = vadd.f32 %v255, %v614
      %v788 = vadd.f32 %v256, %v617
      %v789 = vadd.f32 %v257, %v620
      %v790 = vadd.f32 %v258, %v623
      %v791 = vadd.f32 %v259, %v626
      %v792 = vadd.f32 %v260, %v629
      %v793 = vadd.f32 %v261, %v632
      %v794 = vadd.f32 %v262, %v635
      %v795 = vadd.f32 %v263, %v638
      %v796 = vadd.f32 %v264, %v641
      %v797 = vadd.f32 %v265, %v644
      %v798 = vadd.f32 %v266, %v647
      %v799 = vadd.f32 %v267, %v650
      %v800 = vadd.f32 %v268, %v653
      %v801 = vadd.f32 %v269, %v656
      %v802 = vadd.f32 %v270, %v659
      %v803 = vadd.f32 %v271, %v662
      %v804 = vadd.f32 %v272, %v665
      %v805 = vadd.f32 %v273, %v668
      %v806 = vadd.f32 %v274, %v671
      %v807 = vadd.f32 %v275, %v674
      %v808 = vadd.f32 %v276, %v677
      %v809 = vadd.f32 %v277, %v680
      %v810 = vadd.f32 %v278, %v683
      %v811 = vadd.f32 %v279, %v686
      %v812 = vadd.f32 %v280, %v689
      %v813 = vadd.f32 %v281, %v692
      %v814 = vadd.f32 %v282, %v695
      %v815 = vadd.f32 %v283, %v698
      %v816 = vadd.f32 %v284, %v701
      %v817 = vadd.f32 %v285, %v704
      %v818 = vadd.f32 %v286, %v707
      %v819 = vadd.f32 %v287, %v710
      %v820 = vadd.f32 %v288, %v713
      %v821 = vadd.f32 %v289, %v716
      %v822 = vadd.f32 %v290, %v719
      %v823 = vadd.f32 %v291, %v722
      %v824 = vadd.f32 %v292, %v725
      %v825 = vadd.f32 %v293, %v728
      %v826 = vadd.f32 %v294, %v731
      %v827 = vadd.f32 %v295, %v734
      %v828 = vadd.f32 %v296, %v737
      %v829 = vadd.f32 %v297, %v740
      %v830 = vadd.f32 %v298, %v743
      %v831 = vadd.f32 %v299, %v746
      %v832 = vadd.f32 %v300, %v749
      %v833 = vadd.f32 %v301, %v752
      %v834 = vadd.f32 %v302, %v755
      %v835 = vadd.f32 %v303, %v758
      %v836 = vadd.f32 %v304, %v761
      %v837 = vadd.f32 %v305, %v764
      %v838 = vadd.f32 %v306, %v767
      %v839 = vadd.f32 %v307, %v770
      %v840 = vadd.f32 %v308, %v773
      %v841 = vadd.f32 %v309, %v776
      %vm842 = vcmask 523264
      %843 = vst.msk [vmem:[%s244] sm:$0xff] %vm842, %v778
      %844 = vst.msk [vmem:[%s244 + $0x8] sm:$0xff] %vm842, %v779
      %845 = vst.msk [vmem:[%s244 + $0x10] sm:$0xff] %vm842, %v780
      %846 = vst.msk [vmem:[%s244 + $0x18] sm:$0xff] %vm842, %v781
      %847 = vst.msk [vmem:[%s244 + $0x20] sm:$0xff] %vm842, %v782
      %848 = vst.msk [vmem:[%s244 + $0x28] sm:$0xff] %vm842, %v783
      %849 = vst.msk [vmem:[%s244 + $0x30] sm:$0xff] %vm842, %v784
      %850 = vst.msk [vmem:[%s244 + $0x38] sm:$0xff] %vm842, %v785
      %851 = vst.msk [vmem:[%s244 + $0x40] sm:$0xff] %vm842, %v786
      %852 = vst.msk [vmem:[%s244 + $0x48] sm:$0xff] %vm842, %v787
      %853 = vst.msk [vmem:[%s244 + $0x50] sm:$0xff] %vm842, %v788
      %854 = vst.msk [vmem:[%s244 + $0x58] sm:$0xff] %vm842, %v789
      %855 = vst.msk [vmem:[%s244 + $0x60] sm:$0xff] %vm842, %v790
      %856 = vst.msk [vmem:[%s244 + $0x68] sm:$0xff] %vm842, %v791
      %857 = vst.msk [vmem:[%s244 + $0x70] sm:$0xff] %vm842, %v792
      %858 = vst.msk [vmem:[%s244 + $0x78] sm:$0xff] %vm842, %v793
      %859 = vst.msk [vmem:[%s244 + $0x80] sm:$0xff] %vm842, %v794
      %860 = vst.msk [vmem:[%s244 + $0x88] sm:$0xff] %vm842, %v795
      %861 = vst.msk [vmem:[%s244 + $0x90] sm:$0xff] %vm842, %v796
      %862 = vst.msk [vmem:[%s244 + $0x98] sm:$0xff] %vm842, %v797
      %863 = vst.msk [vmem:[%s244 + $0xa0] sm:$0xff] %vm842, %v798
      %864 = vst.msk [vmem:[%s244 + $0xa8] sm:$0xff] %vm842, %v799
      %865 = vst.msk [vmem:[%s244 + $0xb0] sm:$0xff] %vm842, %v800
      %866 = vst.msk [vmem:[%s244 + $0xb8] sm:$0xff] %vm842, %v801
      %867 = vst.msk [vmem:[%s244 + $0xc0] sm:$0xff] %vm842, %v802
      %868 = vst.msk [vmem:[%s244 + $0xc8] sm:$0xff] %vm842, %v803
      %869 = vst.msk [vmem:[%s244 + $0xd0] sm:$0xff] %vm842, %v804
      %870 = vst.msk [vmem:[%s244 + $0xd8] sm:$0xff] %vm842, %v805
      %871 = vst.msk [vmem:[%s244 + $0xe0] sm:$0xff] %vm842, %v806
      %872 = vst.msk [vmem:[%s244 + $0xe8] sm:$0xff] %vm842, %v807
      %873 = vst.msk [vmem:[%s244 + $0xf0] sm:$0xff] %vm842, %v808
      %874 = vst.msk [vmem:[%s244 + $0xf8] sm:$0xff] %vm842, %v809
      %875 = vst.msk [vmem:[%s244 + $0x100] sm:$0xff] %vm842, %v810
      %876 = vst.msk [vmem:[%s244 + $0x108] sm:$0xff] %vm842, %v811
      %877 = vst.msk [vmem:[%s244 + $0x110] sm:$0xff] %vm842, %v812
      %878 = vst.msk [vmem:[%s244 + $0x118] sm:$0xff] %vm842, %v813
      %879 = vst.msk [vmem:[%s244 + $0x120] sm:$0xff] %vm842, %v814
      %880 = vst.msk [vmem:[%s244 + $0x128] sm:$0xff] %vm842, %v815
      %881 = vst.msk [vmem:[%s244 + $0x130] sm:$0xff] %vm842, %v816
      %882 = vst.msk [vmem:[%s244 + $0x138] sm:$0xff] %vm842, %v817
      %883 = vst.msk [vmem:[%s244 + $0x140] sm:$0xff] %vm842, %v818
      %884 = vst.msk [vmem:[%s244 + $0x148] sm:$0xff] %vm842, %v819
      %885 = vst.msk [vmem:[%s244 + $0x150] sm:$0xff] %vm842, %v820
      %886 = vst.msk [vmem:[%s244 + $0x158] sm:$0xff] %vm842, %v821
      %887 = vst.msk [vmem:[%s244 + $0x160] sm:$0xff] %vm842, %v822
      %888 = vst.msk [vmem:[%s244 + $0x168] sm:$0xff] %vm842, %v823
      %889 = vst.msk [vmem:[%s244 + $0x170] sm:$0xff] %vm842, %v824
      %890 = vst.msk [vmem:[%s244 + $0x178] sm:$0xff] %vm842, %v825
      %891 = vst.msk [vmem:[%s244 + $0x180] sm:$0xff] %vm842, %v826
      %892 = vst.msk [vmem:[%s244 + $0x188] sm:$0xff] %vm842, %v827
      %893 = vst.msk [vmem:[%s244 + $0x190] sm:$0xff] %vm842, %v828
      %894 = vst.msk [vmem:[%s244 + $0x198] sm:$0xff] %vm842, %v829
      %895 = vst.msk [vmem:[%s244 + $0x1a0] sm:$0xff] %vm842, %v830
      %896 = vst.msk [vmem:[%s244 + $0x1a8] sm:$0xff] %vm842, %v831
      %897 = vst.msk [vmem:[%s244 + $0x1b0] sm:$0xff] %vm842, %v832
      %898 = vst.msk [vmem:[%s244 + $0x1b8] sm:$0xff] %vm842, %v833
      %899 = vst.msk [vmem:[%s244 + $0x1c0] sm:$0xff] %vm842, %v834
      %900 = vst.msk [vmem:[%s244 + $0x1c8] sm:$0xff] %vm842, %v835
      %901 = vst.msk [vmem:[%s244 + $0x1d0] sm:$0xff] %vm842, %v836
      %902 = vst.msk [vmem:[%s244 + $0x1d8] sm:$0xff] %vm842, %v837
      %903 = vst.msk [vmem:[%s244 + $0x1e0] sm:$0xff] %vm842, %v838
      %904 = vst.msk [vmem:[%s244 + $0x1e8] sm:$0xff] %vm842, %v839
      %905 = vst.msk [vmem:[%s244 + $0x1f0] sm:$0xff] %vm842, %v840
      %906 = vst.msk [vmem:[%s244 + $0x1f8] sm:$0xff] %vm842, %v841
      %s907 = smul.u32 64, %s19
      %p908 = scmp.lt.s32.totalorder %s18, 1
      %s909 = scalar_select %p908, %s18, 1
      %p910 = scmp.lt.s32.totalorder %s907, 63
      %s911 = scalar_select %p910, %s907, 63
      %s912 = smul.addr %s909, 64
      %s913 = sadd.s32 %s911, %s912
      %s914 = smul.addr %s913, 8
      %s915 = scalar_lea.vmem %s3, %s914
      // Predicated region
      $region33: #{frru_forward.7} parent=31 // pred_check
        %p916 = pneg %p123
      $region34: #{frru_forward.7} parent=31 // pred_check_branch
        %918 = sbr.rel (%p916) target = $region36
      $region35: #{frru_forward.7} parent=31 // pred_region
        %s919 = smul.u32 64, %s19
      $region36: #{frru_forward.7} parent=31 // pred_fallthru
        _
    $region32: #{frru_forward.7} parent=5 // pred_fallthru
      _
    %p920 = scmp.le.s32.totalorder 2, %s9
    // Predicated region
    $region37: #{frru_forward.7} parent=5 // pred_check
      %p921 = pneg %p920
    $region38: #{frru_forward.7} parent=5 // pred_check_branch
      %923 = sbr.rel (%p921) target = $region40
    $region39: #{frru_forward.7} parent=5 // pred_region
      %s924 = ssub.s32 %s9, 2
      // Predicated region
      $region41: #{frru_forward.7} parent=39 // pred_check
        %p925 = pneg %p129
      $region42: #{frru_forward.7} parent=39 // pred_check_branch
        %927 = sbr.rel (%p925) target = $region44
      $region43: #{frru_forward.7} parent=39 // pred_region
        %s928 = smul.u32 64, %s21
        %p929 = scmp.lt.s32.totalorder %s20, 1
        %s930 = scalar_select %p929, %s20, 1
        %p931 = scmp.lt.s32.totalorder %s928, 63
        %s932 = scalar_select %p931, %s928, 63
        %s933 = smul.addr %s930, 64
        %s934 = sadd.s32 %s932, %s933
        %s935 = smul.addr %s934, 8
        %s936 = scalar_lea.vmem %s3, %s935
      $region44: #{frru_forward.7} parent=39 // pred_fallthru
        _
    $region40: #{frru_forward.7} parent=5 // pred_fallthru
      _
  $region6: #{frru_forward.7} parent=0 // loop_footer
    %s13 = sadd.s32 1, %s9
  $region7: #{frru_forward.7} parent=0 // loop_footer_branch
    %8 = sbr.rel target = $region3
  $region8: #{frru_forward.7} parent=0 // loop_exit
    _

</llo_original>
